<compile_context>
chip_gen: v5e
topology: v5e:2x2
jax: 0.10.0
libtpu: 0.0.40
codegen_flags: <defaults>
</compile_context>

<pallas_src>
import functools

import jax
import jax.numpy as jnp
from jax import lax
from jax.experimental import pallas as pl
from jax.experimental.pallas import tpu as pltpu


# ----------------------------- static geometry ------------------------------
H_IN = W_IN = 32            # input spatial size (CIFAR-like)
C_IN = 3
K1 = 3                      # conv1 kernel
C1 = 32                     # conv1 out channels
H1 = H_IN - K1 + 1          # 30 = conv1 output size
P1 = H1 // 2                # 15 = pool1 output size (floor mode)
K2 = 5                      # conv2 kernel
C2 = 64                     # conv2 out channels
H2 = P1 - K2 + 1            # 11 = conv2 output size
P2 = H2 // 2                # 5  = pool2 output size (floor mode)
HID = 32                    # linear1 width

KCOL1 = K1 * K1 * C_IN      # 27  raw conv1 im2col K
KC = 32                     # conv1 im2col K padded to 32 (zero rows/cols)
PR = 16                     # padded pool1 row stride (15 -> 16)
S1 = PR * PR                # 256 pool1 rows / sample (stride-16 layout)
PH = 4                      # 2x2 pooling phases
W2K = K2 * C1               # 160 conv2 matmul K (dj-im2col of pool1)
WROWS = 2 * P2 * PR         # 160 conv2 "wide" rows / sample (r<10, c<16)
CAT_ROWS = WROWS + (K2 - 1) * PR   # 224 rows of the dj-im2col buffer
WIDE2_PAD = 24              # >= PR+1 shifted-read overhang, multiple of 8
WIDE2_ROWS = WROWS + WIDE2_PAD     # 184


# ------------------------------- fused kernel -------------------------------
def _make_net_kernel(b_tile):
    """Build the kernel body for a fixed batch tile."""

    def kernel(xcol_ref, w1_ref, b1_ref, w2_ref, b2_ref,
               wl1_ref, bl1_ref, wl2_ref, bl2_ref, sel_ref,
               o_ref, pool1_ref, cat_ref, wide2_ref, pooled_ref):
        # wide2 pad rows feed the shifted pool2 reads of the last output row:
        # they must be finite (they hit the selection matmul with weight 0).
        wide2_ref[pl.ds(WROWS, WIDE2_PAD), :] = jnp.zeros((WIDE2_PAD, C2),
                                                          jnp.float32)

        w1 = w1_ref[...]                                        # (32,32) bf16
        b1 = b1_ref[...]                                        # (1,32)  f32
        sel = sel_ref[...]                                      # (1,160) f32
        # hoisted bias broadcast (broadcast_in_dim is not CSE'd inside loops)
        b2b = jnp.broadcast_to(b2_ref[...], (WROWS, C2))        # (160,64) f32

        def sample_body(t, carry):
            base_x = pl.multiple_of(t * (PH * S1), S1)

            # ---- conv1 (3x3, 3->32) + MaxPool2d(2,2), fused -----------------
            # xcol rows per sample are (phase, pr, pc) in a stride-16 layout,
            # so the running max over the 4 phase slabs IS the 2x2/2 max pool
            # and the matmul output lands directly in pool1's layout.
            v = jnp.dot(xcol_ref[pl.ds(base_x, S1), :], w1,
                        preferred_element_type=jnp.float32)
            for ph in range(1, PH):
                st = pl.multiple_of(base_x + ph * S1, S1)
                v = jnp.maximum(
                    v, jnp.dot(xcol_ref[pl.ds(st, S1), :], w1,
                               preferred_element_type=jnp.float32))
            # bias commutes with max; pad rows (pr==15 or pc==15) only ever
            # feed conv2 columns that pool2 never reads.
            pool1_ref[...] = (v + b1).astype(jnp.bfloat16)       # (256,32) bf16

            # ---- dj-im2col of pool1: cat[q, dj*32+c] = pool1[q+dj, c] -------
            # K becomes 5*32 = 160, so conv2 needs only 5 matmuls per sample.
            for dj in range(K2):
                cat_ref[pl.ds(0, CAT_ROWS), pl.ds(dj * C1, C1)] = \
                    pool1_ref[pl.ds(dj, CAT_ROWS), :]

            # ---- conv2 (5x5, 32->64): 5 shifted K=160 matmuls ---------------
            acc = b2b
            for di in range(K2):
                acc = acc + jnp.dot(cat_ref[pl.ds(di * PR, WROWS), :],
                                    w2_ref[pl.ds(di * W2K, W2K), :],
                                    preferred_element_type=jnp.float32)
            wide2_ref[pl.ds(0, WROWS), :] = acc                  # (160,64) f32

            # ---- MaxPool2d(2,2) + AdaptiveAvgPool2d(1,1), vectorized --------
            # wide row q = r*16 + c; the 2x2 partners are q, q+1, q+16, q+17.
            # One max-tree over 4 whole slabs, then a single selection matmul
            # (1/25 at q = 32r+2c) performs "pick the 25 pooled pixels + mean".
            a01 = wide2_ref[pl.ds(1, WROWS), :]
            a10 = wide2_ref[pl.ds(PR, WROWS), :]
            a11 = wide2_ref[pl.ds(PR + 1, WROWS), :]
            m = jnp.maximum(jnp.maximum(acc, a01), jnp.maximum(a10, a11))
            pooled_ref[pl.ds(t, 1), :] = jnp.dot(
                sel, m, preferred_element_type=jnp.float32)      # (1,64)
            return carry

        lax.fori_loop(0, b_tile, sample_body, 0)

        # TODO(synk): Dropout2d(p=0.1) is the identity in eval/inference mode;
        # training-mode channel dropout (+ 1/(1-p) scaling) is not implemented.

        # ---- head: linear1 + relu + linear2 + sigmoid -----------------------
        pooled = pooled_ref[pl.ds(0, b_tile), :]                 # (B_TILE,64)
        h = jnp.dot(pooled, wl1_ref[...],
                    preferred_element_type=jnp.float32) + bl1_ref[...]
        h = jnp.maximum(h, 0.0)
        # A·Bᵀ form puts the batch on the LANE axis -> lane-dense output row.
        z = lax.dot_general(wl2_ref[...], h, (((1,), (1,)), ((), ())),
                            preferred_element_type=jnp.float32) + bl2_ref[...]
        o_ref[...] = 1.0 / (1.0 + jnp.exp(-z))                   # (1,B_TILE)

    return kernel


# ------------------------------- full forward -------------------------------
def net_forward(params, x_nchw, *, b_tile=8):
    """Inference forward pass of Net for NCHW float input."""
    x = jnp.transpose(x_nchw, (0, 2, 3, 1)).astype(jnp.float32)   # NCHW->NHWC
    B, H, W, C = x.shape
    assert (H, W, C) == (H_IN, W_IN, C_IN)
    nb = -(-B // b_tile)
    b_pad = nb * b_tile
    if b_pad != B:
        x = jnp.pad(x, ((0, b_pad - B), (0, 0), (0, 0), (0, 0)))

    # conv1 im2col, K padded 27->32, pool-phase-major, stride-16 row layout:
    #   row (within a sample) = ph*256 + pr*16 + pc ,  ph = dr*2 + dc
    patches = jnp.concatenate(
        [x[:, i:i + H1, j:j + H1, :] for i in range(K1) for j in range(K1)],
        axis=-1)                                                  # (Bp,30,30,27)
    patches = jnp.pad(patches, ((0, 0), (0, 0), (0, 0), (0, KC - KCOL1)))
    xcol = patches.reshape(b_pad, P1, 2, P1, 2, KC)
    xcol = xcol.transpose(0, 2, 4, 1, 3, 5)                       # (Bp,dr,dc,pr,pc,K)
    xcol = jnp.pad(xcol, ((0, 0), (0, 0), (0, 0), (0, 1), (0, 1), (0, 0)))
    xcol = xcol.reshape(nb, b_tile * PH * S1, KC).astype(jnp.bfloat16)

    # weights in matmul form; bf16 for MXU conv operands, f32 biases / head
    w1 = jnp.transpose(params["w_conv1"], (2, 3, 1, 0)).reshape(KCOL1, C1)
    w1 = jnp.pad(w1, ((0, KC - KCOL1), (0, 0))).astype(jnp.bfloat16)   # (32,32)
    b1 = params["b_conv1"].reshape(1, C1).astype(jnp.float32)
    w2 = jnp.transpose(params["w_conv2"], (2, 3, 1, 0)).reshape(
        K2 * K2 * C1, C2).astype(jnp.bfloat16)                    # row = di*160+dj*32+cin
    b2 = params["b_conv2"].reshape(1, C2).astype(jnp.float32)
    wl1 = params["w_lin1"].T.astype(jnp.float32)                  # (64,32)
    bl1 = params["b_lin1"].reshape(1, HID).astype(jnp.float32)
    wl2 = params["w_lin2"].astype(jnp.float32)                    # (1,32)
    bl2 = params["b_lin2"].reshape(1, 1).astype(jnp.float32)

    # selection/averaging row for maxpool2+adaptive-avg (1/25 at q = 32r + 2c)
    sel_idx = jnp.array([2 * PR * r + 2 * c for r in range(P2) for c in range(P2)],
                        dtype=jnp.int32)
    sel = jnp.zeros((1, WROWS), jnp.float32).at[0, sel_idx].set(1.0 / (P2 * P2))

    # VMEM budget computed from the actual (lane-padded) footprint, not a
    # blanket number: xcol block double-buffered, plus weights and scratch.
    xcol_block_vmem = b_tile * PH * S1 * 128 * 2
    weights_vmem = (KC * 128 + K2 * K2 * C1 * 128) * 2 + (1 << 16)
    scratch_vmem = (S1 * 128 * 2 + CAT_ROWS * 256 * 2
                    + WIDE2_ROWS * 128 * 4 + max(b_tile, 8) * 128 * 4)
    vmem_need = 2 * (xcol_block_vmem + weights_vmem) + scratch_vmem
    vmem_limit = int(min(2 * vmem_need + (8 << 20), 100 << 20))

    out = pl.pallas_call(
        _make_net_kernel(b_tile),
        out_shape=jax.ShapeDtypeStruct((nb, 1, b_tile), jnp.float32),
        grid_spec=pltpu.PrefetchScalarGridSpec(
            num_scalar_prefetch=0,
            grid=(nb,),
            in_specs=[
                pl.BlockSpec((None, b_tile * PH * S1, KC), lambda g: (g, 0, 0)),
                pl.BlockSpec((KC, C1), lambda g: (0, 0)),
                pl.BlockSpec((1, C1), lambda g: (0, 0)),
                pl.BlockSpec((K2 * K2 * C1, C2), lambda g: (0, 0)),
                pl.BlockSpec((1, C2), lambda g: (0, 0)),
                pl.BlockSpec((C2, HID), lambda g: (0, 0)),
                pl.BlockSpec((1, HID), lambda g: (0, 0)),
                pl.BlockSpec((1, HID), lambda g: (0, 0)),
                pl.BlockSpec((1, 1), lambda g: (0, 0)),
                pl.BlockSpec((1, WROWS), lambda g: (0, 0)),
            ],
            out_specs=pl.BlockSpec((None, 1, b_tile), lambda g: (g, 0, 0)),
            scratch_shapes=[
                pltpu.VMEM((S1, C1), jnp.bfloat16),          # pool1 slab (256,32)
                pltpu.VMEM((CAT_ROWS, W2K), jnp.bfloat16),   # dj-im2col (224,160)
                pltpu.VMEM((WIDE2_ROWS, C2), jnp.float32),   # conv2 wide (184,64)
                pltpu.VMEM((max(b_tile, 8), C2), jnp.float32),  # pooled features
            ],
        ),
        compiler_params=pltpu.CompilerParams(
            dimension_semantics=("parallel",),               # v7x: 2 TCs split blocks
            vmem_limit_bytes=vmem_limit,
        ),
    )(xcol, w1, b1, w2, b2, wl1, bl1, wl2, bl2, sel)
    return out.reshape(b_pad, 1)[:B]


# --------------------------- pure-JAX reference ------------------------------
def net_reference(params, x_nchw):
    x = x_nchw.astype(jnp.float32)
    dn = ("NCHW", "OIHW", "NCHW")
    y = lax.conv_general_dilated(x, params["w_conv1"], (1, 1), "VALID",
                                 dimension_numbers=dn)
    y = y + params["b_conv1"][None, :, None, None]
    y = lax.reduce_window(y, -jnp.inf, lax.max, (1, 1, 2, 2), (1, 1, 2, 2), "VALID")
    y = lax.conv_general_dilated(y, params["w_conv2"], (1, 1), "VALID",
                                 dimension_numbers=dn)
    y = y + params["b_conv2"][None, :, None, None]
    y = lax.reduce_window(y, -jnp.inf, lax.max, (1, 1, 2, 2), (1, 1, 2, 2), "VALID")
    # Dropout2d(p=0.1) is the identity in eval mode.
    y = jnp.mean(y, axis=(2, 3))                                  # adaptive avg + flatten
    y = y @ params["w_lin1"].T + params["b_lin1"]
    y = jnp.maximum(y, 0.0)
    y = y @ params["w_lin2"].T + params["b_lin2"]
    return jax.nn.sigmoid(y)


# ------------------------------- params / main ------------------------------
def init_params(key):
    ks = jax.random.split(key, 8)

    def u(k, shape, fan_in):
        bound = 1.0 / float(fan_in) ** 0.5   # PyTorch default init range
        return jax.random.uniform(k, shape, jnp.float32, -bound, bound)

    return {
        "w_conv1": u(ks[0], (32, 3, 3, 3), 3 * 3 * 3),
        "b_conv1": u(ks[1], (32,), 3 * 3 * 3),
        "w_conv2": u(ks[2], (64, 32, 5, 5), 32 * 5 * 5),
        "b_conv2": u(ks[3], (64,), 32 * 5 * 5),
        "w_lin1":  u(ks[4], (32, 64), 64),
        "b_lin1":  u(ks[5], (32,), 64),
        "w_lin2":  u(ks[6], (1, 32), 32),
        "b_lin2":  u(ks[7], (1,), 32),
    }


if __name__ == "__main__":
    root = jax.random.PRNGKey(0)
    k_params, k_x = jax.random.split(root)
    params = init_params(k_params)
    x = jax.random.normal(k_x, (16, 3, 32, 32), jnp.float32)   # NCHW, like PyTorch

    fwd = jax.jit(functools.partial(net_forward, b_tile=8))    # grid = (2,)
    y = jax.block_until_ready(fwd(params, x))
    y_ref = jax.block_until_ready(jax.jit(net_reference)(params, x))

    assert y.shape == (16, 1) and y.dtype == jnp.float32
    assert bool(jnp.all(jnp.isfinite(y)))
    assert bool(jnp.all((y >= 0.0) & (y <= 1.0)))
    max_err = float(jnp.max(jnp.abs(y - y_ref)))
    assert max_err < 3e-2, f"kernel/reference mismatch: max_err={max_err}"
    print("KERNEL_OK")
</pallas_src>

<mosaic_0001>
module attributes {stable_mosaic.version = 11 : i64} {
  func.func @kernel(%arg0: i32, %arg1: memref<1x8192x32xbf16, #tpu.memory_space<vmem>>, %arg2: memref<32x32xbf16, #tpu.memory_space<vmem>>, %arg3: memref<1x32xf32, #tpu.memory_space<vmem>>, %arg4: memref<800x64xbf16, #tpu.memory_space<vmem>>, %arg5: memref<1x64xf32, #tpu.memory_space<vmem>>, %arg6: memref<64x32xf32, #tpu.memory_space<vmem>>, %arg7: memref<1x32xf32, #tpu.memory_space<vmem>>, %arg8: memref<1x32xf32, #tpu.memory_space<vmem>>, %arg9: memref<1x1xf32, #tpu.memory_space<vmem>>, %arg10: memref<1x160xf32, #tpu.memory_space<vmem>>, %arg11: memref<1x1x8xf32, #tpu.memory_space<vmem>>, %arg12: memref<256x32xbf16, #tpu.memory_space<vmem>>, %arg13: memref<224x160xbf16, #tpu.memory_space<vmem>>, %arg14: memref<184x64xf32, #tpu.memory_space<vmem>>, %arg15: memref<8x64xf32, #tpu.memory_space<vmem>>) attributes {dimension_semantics = [#tpu.dimension_semantics<parallel>], iteration_bounds = array<i64: 2>, scalar_prefetch = 0 : i64, scratch_operands = 4 : i64, tpu.core_type = #tpu.core_type<tc>, window_params = [{transform_indices = @transform_0, window_bounds = array<i64: 1, 8192, 32>}, {pipeline_mode = #tpu.pipeline_mode<synchronous>, transform_indices = @transform_1, window_bounds = array<i64: 32, 32>}, {pipeline_mode = #tpu.pipeline_mode<synchronous>, transform_indices = @transform_2, window_bounds = array<i64: 1, 32>}, {pipeline_mode = #tpu.pipeline_mode<synchronous>, transform_indices = @transform_3, window_bounds = array<i64: 800, 64>}, {pipeline_mode = #tpu.pipeline_mode<synchronous>, transform_indices = @transform_4, window_bounds = array<i64: 1, 64>}, {pipeline_mode = #tpu.pipeline_mode<synchronous>, transform_indices = @transform_5, window_bounds = array<i64: 64, 32>}, {pipeline_mode = #tpu.pipeline_mode<synchronous>, transform_indices = @transform_6, window_bounds = array<i64: 1, 32>}, {pipeline_mode = #tpu.pipeline_mode<synchronous>, transform_indices = @transform_7, window_bounds = array<i64: 1, 32>}, {pipeline_mode = #tpu.pipeline_mode<synchronous>, transform_indices = @transform_8, window_bounds = array<i64: 1, 1>}, {pipeline_mode = #tpu.pipeline_mode<synchronous>, transform_indices = @transform_9, window_bounds = array<i64: 1, 160>}, {transform_indices = @transform_10, window_bounds = array<i64: 1, 1, 8>}]} {
    %cst = arith.constant 0.000000e+00 : f32
    %0 = vector.broadcast %cst : f32 to vector<24x64xf32>
    %c160 = arith.constant 160 : index
    %c0 = arith.constant 0 : index
    %1 = vector.load %arg14[%c160, %c0] : memref<184x64xf32, #tpu.memory_space<vmem>>, vector<24x64xf32>
    tpu.vector_store %arg14[%c160, %c0], %0 {strides = array<i32>} : memref<184x64xf32, #tpu.memory_space<vmem>>, vector<24x64xf32>,
    %c0_0 = arith.constant 0 : index
    %c0_1 = arith.constant 0 : index
    %2 = vector.load %arg2[%c0_0, %c0_1] : memref<32x32xbf16, #tpu.memory_space<vmem>>, vector<32x32xbf16>
    %c0_2 = arith.constant 0 : index
    %c0_3 = arith.constant 0 : index
    %3 = vector.load %arg3[%c0_2, %c0_3] : memref<1x32xf32, #tpu.memory_space<vmem>>, vector<1x32xf32>
    %c0_4 = arith.constant 0 : index
    %c0_5 = arith.constant 0 : index
    %4 = vector.load %arg10[%c0_4, %c0_5] : memref<1x160xf32, #tpu.memory_space<vmem>>, vector<1x160xf32>
    %c0_6 = arith.constant 0 : index
    %c0_7 = arith.constant 0 : index
    %5 = vector.load %arg5[%c0_6, %c0_7] : memref<1x64xf32, #tpu.memory_space<vmem>>, vector<1x64xf32>
    %6 = vector.shape_cast %5 : vector<1x64xf32> to vector<1x64xf32>
    %7 = vector.broadcast %6 : vector<1x64xf32> to vector<160x64xf32>
    %c0_i32 = arith.constant 0 : i32
    %c8_i32 = arith.constant 8 : i32
    %8 = arith.addi %c0_i32, %c8_i32 : i32
    %c1_i32 = arith.constant 1 : i32
    scf.for %arg16 = %c0_i32 to %8 step %c1_i32  : i32 {
      %c1024_i32 = arith.constant 1024 : i32
      %32 = arith.muli %arg16, %c1024_i32 : i32
      %33 = tpu.assume_multiple %32, 256 : i32
      %c0_28 = arith.constant 0 : index
      %34 = arith.index_cast %33 : i32 to index
      %c0_29 = arith.constant 0 : index
      %35 = vector.load %arg1[%c0_28, %34, %c0_29] : memref<1x8192x32xbf16, #tpu.memory_space<vmem>>, vector<1x256x32xbf16>
      %36 = vector.shape_cast %35 : vector<1x256x32xbf16> to vector<256x32xbf16>
      %cst_30 = arith.constant dense<0.000000e+00> : vector<256x32xf32>
      %37 = tpu.matmul %36, %2, %cst_30 {dimension_numbers = #tpu.dot_dimension_numbers<[1], [0], [0], [1], [0, 0, 1, 1], [], []>} : vector<256x32xbf16>, vector<32x32xbf16>, vector<256x32xf32> -> vector<256x32xf32>
      %c256_i32 = arith.constant 256 : i32
      %38 = arith.addi %33, %c256_i32 : i32
      %39 = tpu.assume_multiple %38, 256 : i32
      %c0_31 = arith.constant 0 : index
      %40 = arith.index_cast %39 : i32 to index
      %c0_32 = arith.constant 0 : index
      %41 = vector.load %arg1[%c0_31, %40, %c0_32] : memref<1x8192x32xbf16, #tpu.memory_space<vmem>>, vector<1x256x32xbf16>
      %42 = vector.shape_cast %41 : vector<1x256x32xbf16> to vector<256x32xbf16>
      %cst_33 = arith.constant dense<0.000000e+00> : vector<256x32xf32>
      %43 = tpu.matmul %42, %2, %cst_33 {dimension_numbers = #tpu.dot_dimension_numbers<[1], [0], [0], [1], [0, 0, 1, 1], [], []>} : vector<256x32xbf16>, vector<32x32xbf16>, vector<256x32xf32> -> vector<256x32xf32>
      %44 = arith.maximumf %37, %43 : vector<256x32xf32>
      %c512_i32 = arith.constant 512 : i32
      %45 = arith.addi %33, %c512_i32 : i32
      %46 = tpu.assume_multiple %45, 256 : i32
      %c0_34 = arith.constant 0 : index
      %47 = arith.index_cast %46 : i32 to index
      %c0_35 = arith.constant 0 : index
      %48 = vector.load %arg1[%c0_34, %47, %c0_35] : memref<1x8192x32xbf16, #tpu.memory_space<vmem>>, vector<1x256x32xbf16>
      %49 = vector.shape_cast %48 : vector<1x256x32xbf16> to vector<256x32xbf16>
      %cst_36 = arith.constant dense<0.000000e+00> : vector<256x32xf32>
      %50 = tpu.matmul %49, %2, %cst_36 {dimension_numbers = #tpu.dot_dimension_numbers<[1], [0], [0], [1], [0, 0, 1, 1], [], []>} : vector<256x32xbf16>, vector<32x32xbf16>, vector<256x32xf32> -> vector<256x32xf32>
      %51 = arith.maximumf %44, %50 : vector<256x32xf32>
      %c768_i32 = arith.constant 768 : i32
      %52 = arith.addi %33, %c768_i32 : i32
      %53 = tpu.assume_multiple %52, 256 : i32
      %c0_37 = arith.constant 0 : index
      %54 = arith.index_cast %53 : i32 to index
      %c0_38 = arith.constant 0 : index
      %55 = vector.load %arg1[%c0_37, %54, %c0_38] : memref<1x8192x32xbf16, #tpu.memory_space<vmem>>, vector<1x256x32xbf16>
      %56 = vector.shape_cast %55 : vector<1x256x32xbf16> to vector<256x32xbf16>
      %cst_39 = arith.constant dense<0.000000e+00> : vector<256x32xf32>
      %57 = tpu.matmul %56, %2, %cst_39 {dimension_numbers = #tpu.dot_dimension_numbers<[1], [0], [0], [1], [0, 0, 1, 1], [], []>} : vector<256x32xbf16>, vector<32x32xbf16>, vector<256x32xf32> -> vector<256x32xf32>
      %58 = arith.maximumf %51, %57 : vector<256x32xf32>
      %59 = vector.broadcast %3 : vector<1x32xf32> to vector<256x32xf32>
      %60 = arith.addf %58, %59 : vector<256x32xf32>
      %61 = arith.truncf %60 : vector<256x32xf32> to vector<256x32xbf16>
      %c0_40 = arith.constant 0 : index
      %c0_41 = arith.constant 0 : index
      %62 = vector.load %arg12[%c0_40, %c0_41] : memref<256x32xbf16, #tpu.memory_space<vmem>>, vector<256x32xbf16>
      tpu.vector_store %arg12[%c0_40, %c0_41], %61 {strides = array<i32>} : memref<256x32xbf16, #tpu.memory_space<vmem>>, vector<256x32xbf16>,
      %c0_42 = arith.constant 0 : index
      %c0_43 = arith.constant 0 : index
      %63 = vector.load %arg12[%c0_42, %c0_43] : memref<256x32xbf16, #tpu.memory_space<vmem>>, vector<224x32xbf16>
      %c0_44 = arith.constant 0 : index
      %c0_45 = arith.constant 0 : index
      %64 = vector.load %arg13[%c0_44, %c0_45] : memref<224x160xbf16, #tpu.memory_space<vmem>>, vector<224x32xbf16>
      tpu.vector_store %arg13[%c0_44, %c0_45], %63 {strides = array<i32>} : memref<224x160xbf16, #tpu.memory_space<vmem>>, vector<224x32xbf16>,
      %c1 = arith.constant 1 : index
      %c0_46 = arith.constant 0 : index
      %65 = vector.load %arg12[%c1, %c0_46] : memref<256x32xbf16, #tpu.memory_space<vmem>>, vector<224x32xbf16>
      %c0_47 = arith.constant 0 : index
      %c32 = arith.constant 32 : index
      %66 = vector.load %arg13[%c0_47, %c32] : memref<224x160xbf16, #tpu.memory_space<vmem>>, vector<224x32xbf16>
      tpu.vector_store %arg13[%c0_47, %c32], %65 {strides = array<i32>} : memref<224x160xbf16, #tpu.memory_space<vmem>>, vector<224x32xbf16>,
      %c2 = arith.constant 2 : index
      %c0_48 = arith.constant 0 : index
      %67 = vector.load %arg12[%c2, %c0_48] : memref<256x32xbf16, #tpu.memory_space<vmem>>, vector<224x32xbf16>
      %c0_49 = arith.constant 0 : index
      %c64 = arith.constant 64 : index
      %68 = vector.load %arg13[%c0_49, %c64] : memref<224x160xbf16, #tpu.memory_space<vmem>>, vector<224x32xbf16>
      tpu.vector_store %arg13[%c0_49, %c64], %67 {strides = array<i32>} : memref<224x160xbf16, #tpu.memory_space<vmem>>, vector<224x32xbf16>,
      %c3 = arith.constant 3 : index
      %c0_50 = arith.constant 0 : index
      %69 = vector.load %arg12[%c3, %c0_50] : memref<256x32xbf16, #tpu.memory_space<vmem>>, vector<224x32xbf16>
      %c0_51 = arith.constant 0 : index
      %c96 = arith.constant 96 : index
      %70 = vector.load %arg13[%c0_51, %c96] : memref<224x160xbf16, #tpu.memory_space<vmem>>, vector<224x32xbf16>
      tpu.vector_store %arg13[%c0_51, %c96], %69 {strides = array<i32>} : memref<224x160xbf16, #tpu.memory_space<vmem>>, vector<224x32xbf16>,
      %c4 = arith.constant 4 : index
      %c0_52 = arith.constant 0 : index
      %71 = vector.load %arg12[%c4, %c0_52] : memref<256x32xbf16, #tpu.memory_space<vmem>>, vector<224x32xbf16>
      %c0_53 = arith.constant 0 : index
      %c128 = arith.constant 128 : index
      %72 = vector.load %arg13[%c0_53, %c128] : memref<224x160xbf16, #tpu.memory_space<vmem>>, vector<224x32xbf16>
      tpu.vector_store %arg13[%c0_53, %c128], %71 {strides = array<i32>} : memref<224x160xbf16, #tpu.memory_space<vmem>>, vector<224x32xbf16>,
      %c0_54 = arith.constant 0 : index
      %c0_55 = arith.constant 0 : index
      %73 = vector.load %arg13[%c0_54, %c0_55] : memref<224x160xbf16, #tpu.memory_space<vmem>>, vector<160x160xbf16>
      %c0_56 = arith.constant 0 : index
      %c0_57 = arith.constant 0 : index
      %74 = vector.load %arg4[%c0_56, %c0_57] : memref<800x64xbf16, #tpu.memory_space<vmem>>, vector<160x64xbf16>
      %cst_58 = arith.constant dense<0.000000e+00> : vector<160x64xf32>
      %75 = tpu.matmul %73, %74, %cst_58 {dimension_numbers = #tpu.dot_dimension_numbers<[1], [0], [0], [1], [0, 0, 1, 1], [], []>} : vector<160x160xbf16>, vector<160x64xbf16>, vector<160x64xf32> -> vector<160x64xf32>
      %76 = arith.addf %7, %75 : vector<160x64xf32>
      %c16 = arith.constant 16 : index
      %c0_59 = arith.constant 0 : index
      %77 = vector.load %arg13[%c16, %c0_59] : memref<224x160xbf16, #tpu.memory_space<vmem>>, vector<160x160xbf16>
      %c160_60 = arith.constant 160 : index
      %c0_61 = arith.constant 0 : index
      %78 = vector.load %arg4[%c160_60, %c0_61] : memref<800x64xbf16, #tpu.memory_space<vmem>>, vector<160x64xbf16>
      %cst_62 = arith.constant dense<0.000000e+00> : vector<160x64xf32>
      %79 = tpu.matmul %77, %78, %cst_62 {dimension_numbers = #tpu.dot_dimension_numbers<[1], [0], [0], [1], [0, 0, 1, 1], [], []>} : vector<160x160xbf16>, vector<160x64xbf16>, vector<160x64xf32> -> vector<160x64xf32>
      %80 = arith.addf %76, %79 : vector<160x64xf32>
      %c32_63 = arith.constant 32 : index
      %c0_64 = arith.constant 0 : index
      %81 = vector.load %arg13[%c32_63, %c0_64] : memref<224x160xbf16, #tpu.memory_space<vmem>>, vector<160x160xbf16>
      %c320 = arith.constant 320 : index
      %c0_65 = arith.constant 0 : index
      %82 = vector.load %arg4[%c320, %c0_65] : memref<800x64xbf16, #tpu.memory_space<vmem>>, vector<160x64xbf16>
      %cst_66 = arith.constant dense<0.000000e+00> : vector<160x64xf32>
      %83 = tpu.matmul %81, %82, %cst_66 {dimension_numbers = #tpu.dot_dimension_numbers<[1], [0], [0], [1], [0, 0, 1, 1], [], []>} : vector<160x160xbf16>, vector<160x64xbf16>, vector<160x64xf32> -> vector<160x64xf32>
      %84 = arith.addf %80, %83 : vector<160x64xf32>
      %c48 = arith.constant 48 : index
      %c0_67 = arith.constant 0 : index
      %85 = vector.load %arg13[%c48, %c0_67] : memref<224x160xbf16, #tpu.memory_space<vmem>>, vector<160x160xbf16>
      %c480 = arith.constant 480 : index
      %c0_68 = arith.constant 0 : index
      %86 = vector.load %arg4[%c480, %c0_68] : memref<800x64xbf16, #tpu.memory_space<vmem>>, vector<160x64xbf16>
      %cst_69 = arith.constant dense<0.000000e+00> : vector<160x64xf32>
      %87 = tpu.matmul %85, %86, %cst_69 {dimension_numbers = #tpu.dot_dimension_numbers<[1], [0], [0], [1], [0, 0, 1, 1], [], []>} : vector<160x160xbf16>, vector<160x64xbf16>, vector<160x64xf32> -> vector<160x64xf32>
      %88 = arith.addf %84, %87 : vector<160x64xf32>
      %c64_70 = arith.constant 64 : index
      %c0_71 = arith.constant 0 : index
      %89 = vector.load %arg13[%c64_70, %c0_71] : memref<224x160xbf16, #tpu.memory_space<vmem>>, vector<160x160xbf16>
      %c640 = arith.constant 640 : index
      %c0_72 = arith.constant 0 : index
      %90 = vector.load %arg4[%c640, %c0_72] : memref<800x64xbf16, #tpu.memory_space<vmem>>, vector<160x64xbf16>
      %cst_73 = arith.constant dense<0.000000e+00> : vector<160x64xf32>
      %91 = tpu.matmul %89, %90, %cst_73 {dimension_numbers = #tpu.dot_dimension_numbers<[1], [0], [0], [1], [0, 0, 1, 1], [], []>} : vector<160x160xbf16>, vector<160x64xbf16>, vector<160x64xf32> -> vector<160x64xf32>
      %92 = arith.addf %88, %91 : vector<160x64xf32>
      %c0_74 = arith.constant 0 : index
      %c0_75 = arith.constant 0 : index
      %93 = vector.load %arg14[%c0_74, %c0_75] : memref<184x64xf32, #tpu.memory_space<vmem>>, vector<160x64xf32>
      tpu.vector_store %arg14[%c0_74, %c0_75], %92 {strides = array<i32>} : memref<184x64xf32, #tpu.memory_space<vmem>>, vector<160x64xf32>,
      %c1_76 = arith.constant 1 : index
      %c0_77 = arith.constant 0 : index
      %94 = vector.load %arg14[%c1_76, %c0_77] : memref<184x64xf32, #tpu.memory_space<vmem>>, vector<160x64xf32>
      %c16_78 = arith.constant 16 : index
      %c0_79 = arith.constant 0 : index
      %95 = vector.load %arg14[%c16_78, %c0_79] : memref<184x64xf32, #tpu.memory_space<vmem>>, vector<160x64xf32>
      %c17 = arith.constant 17 : index
      %c0_80 = arith.constant 0 : index
      %96 = vector.load %arg14[%c17, %c0_80] : memref<184x64xf32, #tpu.memory_space<vmem>>, vector<160x64xf32>
      %97 = arith.maximumf %92, %94 : vector<160x64xf32>
      %98 = arith.maximumf %95, %96 : vector<160x64xf32>
      %99 = arith.maximumf %97, %98 : vector<160x64xf32>
      %cst_81 = arith.constant dense<0.000000e+00> : vector<1x64xf32>
      %100 = tpu.matmul %4, %99, %cst_81 {dimension_numbers = #tpu.dot_dimension_numbers<[1], [0], [0], [1], [0, 0, 1, 1], [], []>} : vector<1x160xf32>, vector<160x64xf32>, vector<1x64xf32> -> vector<1x64xf32>
      %101 = arith.index_cast %arg16 : i32 to index
      %c0_82 = arith.constant 0 : index
      %102 = vector.load %arg15[%101, %c0_82] : memref<8x64xf32, #tpu.memory_space<vmem>>, vector<1x64xf32>
      tpu.vector_store %arg15[%101, %c0_82], %100 {strides = array<i32>} : memref<8x64xf32, #tpu.memory_space<vmem>>, vector<1x64xf32>,
    }
    %c8_i32_8 = arith.constant 8 : i32
    %c0_9 = arith.constant 0 : index
    %c0_10 = arith.constant 0 : index
    %9 = vector.load %arg15[%c0_9, %c0_10] : memref<8x64xf32, #tpu.memory_space<vmem>>, vector<8x64xf32>
    %c0_11 = arith.constant 0 : index
    %c0_12 = arith.constant 0 : index
    %10 = vector.load %arg6[%c0_11, %c0_12] : memref<64x32xf32, #tpu.memory_space<vmem>>, vector<64x32xf32>
    %cst_13 = arith.constant dense<0.000000e+00> : vector<8x32xf32>
    %11 = tpu.matmul %9, %10, %cst_13 {dimension_numbers = #tpu.dot_dimension_numbers<[1], [0], [0], [1], [0, 0, 1, 1], [], []>} : vector<8x64xf32>, vector<64x32xf32>, vector<8x32xf32> -> vector<8x32xf32>
    %c0_14 = arith.constant 0 : index
    %c0_15 = arith.constant 0 : index
    %12 = vector.load %arg7[%c0_14, %c0_15] : memref<1x32xf32, #tpu.memory_space<vmem>>, vector<1x32xf32>
    %13 = vector.broadcast %12 : vector<1x32xf32> to vector<8x32xf32>
    %14 = arith.addf %11, %13 : vector<8x32xf32>
    %cst_16 = arith.constant 0.000000e+00 : f32
    %15 = vector.broadcast %cst_16 : f32 to vector<8x32xf32>
    %16 = arith.maximumf %14, %15 : vector<8x32xf32>
    %c0_17 = arith.constant 0 : index
    %c0_18 = arith.constant 0 : index
    %17 = vector.load %arg8[%c0_17, %c0_18] : memref<1x32xf32, #tpu.memory_space<vmem>>, vector<1x32xf32>
    %cst_19 = arith.constant dense<0.000000e+00> : vector<1x8xf32>
    %18 = tpu.matmul %17, %16, %cst_19 {dimension_numbers = #tpu.dot_dimension_numbers<[1], [1], [0], [0], [0, 0, 1, 0], [], []>} : vector<1x32xf32>, vector<8x32xf32>, vector<1x8xf32> -> vector<1x8xf32>
    %c0_20 = arith.constant 0 : index
    %c0_21 = arith.constant 0 : index
    %19 = vector.load %arg9[%c0_20, %c0_21] : memref<1x1xf32, #tpu.memory_space<vmem>>, vector<1x1xf32>
    %20 = vector.broadcast %19 : vector<1x1xf32> to vector<1x8xf32>
    %21 = arith.addf %18, %20 : vector<1x8xf32>
    %cst_22 = arith.constant 0.000000e+00 : f32
    %22 = vector.broadcast %cst_22 : f32 to vector<1x8xf32>
    %23 = arith.subf %22, %21 : vector<1x8xf32>
    %24 = math.exp %23 : vector<1x8xf32>
    %cst_23 = arith.constant 1.000000e+00 : f32
    %25 = vector.broadcast %cst_23 : f32 to vector<1x8xf32>
    %26 = arith.addf %25, %24 : vector<1x8xf32>
    %cst_24 = arith.constant 1.000000e+00 : f32
    %27 = vector.broadcast %cst_24 : f32 to vector<1x8xf32>
    %28 = arith.divf %27, %26 : vector<1x8xf32>
    %c0_25 = arith.constant 0 : index
    %c0_26 = arith.constant 0 : index
    %c0_27 = arith.constant 0 : index
    %29 = vector.load %arg11[%c0_25, %c0_26, %c0_27] : memref<1x1x8xf32, #tpu.memory_space<vmem>>, vector<1x1x8xf32>
    %30 = vector.shape_cast %29 : vector<1x1x8xf32> to vector<1x8xf32>
    %31 = vector.shape_cast %28 : vector<1x8xf32> to vector<1x1x8xf32>
    tpu.vector_store %arg11[%c0_25, %c0_26, %c0_27], %31 {strides = array<i32>} : memref<1x1x8xf32, #tpu.memory_space<vmem>>, vector<1x1x8xf32>,
    return
  }
  func.func @transform_0(%arg0: i32) -> (i32, i32, i32) {
    %c0_i32 = arith.constant 0 : i32
    %c0_i32_0 = arith.constant 0 : i32
    %c0_i32_1 = arith.constant 0 : i32
    return %arg0, %c0_i32, %c0_i32_0 : i32, i32, i32
  }
  func.func @transform_1(%arg0: i32) -> (i32, i32) {
    %c0_i32 = arith.constant 0 : i32
    %c0_i32_0 = arith.constant 0 : i32
    %c0_i32_1 = arith.constant 0 : i32
    return %c0_i32, %c0_i32_0 : i32, i32
  }
  func.func @transform_2(%arg0: i32) -> (i32, i32) {
    %c0_i32 = arith.constant 0 : i32
    %c0_i32_0 = arith.constant 0 : i32
    %c0_i32_1 = arith.constant 0 : i32
    return %c0_i32, %c0_i32_0 : i32, i32
  }
  func.func @transform_3(%arg0: i32) -> (i32, i32) {
    %c0_i32 = arith.constant 0 : i32
    %c0_i32_0 = arith.constant 0 : i32
    %c0_i32_1 = arith.constant 0 : i32
    return %c0_i32, %c0_i32_0 : i32, i32
  }
  func.func @transform_4(%arg0: i32) -> (i32, i32) {
    %c0_i32 = arith.constant 0 : i32
    %c0_i32_0 = arith.constant 0 : i32
    %c0_i32_1 = arith.constant 0 : i32
    return %c0_i32, %c0_i32_0 : i32, i32
  }
  func.func @transform_5(%arg0: i32) -> (i32, i32) {
    %c0_i32 = arith.constant 0 : i32
    %c0_i32_0 = arith.constant 0 : i32
    %c0_i32_1 = arith.constant 0 : i32
    return %c0_i32, %c0_i32_0 : i32, i32
  }
  func.func @transform_6(%arg0: i32) -> (i32, i32) {
    %c0_i32 = arith.constant 0 : i32
    %c0_i32_0 = arith.constant 0 : i32
    %c0_i32_1 = arith.constant 0 : i32
    return %c0_i32, %c0_i32_0 : i32, i32
  }
  func.func @transform_7(%arg0: i32) -> (i32, i32) {
    %c0_i32 = arith.constant 0 : i32
    %c0_i32_0 = arith.constant 0 : i32
    %c0_i32_1 = arith.constant 0 : i32
    return %c0_i32, %c0_i32_0 : i32, i32
  }
  func.func @transform_8(%arg0: i32) -> (i32, i32) {
    %c0_i32 = arith.constant 0 : i32
    %c0_i32_0 = arith.constant 0 : i32
    %c0_i32_1 = arith.constant 0 : i32
    return %c0_i32, %c0_i32_0 : i32, i32
  }
  func.func @transform_9(%arg0: i32) -> (i32, i32) {
    %c0_i32 = arith.constant 0 : i32
    %c0_i32_0 = arith.constant 0 : i32
    %c0_i32_1 = arith.constant 0 : i32
    return %c0_i32, %c0_i32_0 : i32, i32
  }
  func.func @transform_10(%arg0: i32) -> (i32, i32, i32) {
    %c0_i32 = arith.constant 0 : i32
    %c0_i32_0 = arith.constant 0 : i32
    %c0_i32_1 = arith.constant 0 : i32
    return %arg0, %c0_i32, %c0_i32_0 : i32, i32, i32
  }
}

</mosaic_0001>

<llo_original>
// kernel: net_forward.1
$region0: #{net_forward.1}
  #allocation0 [shape = 'u32[]', space=smem, size = 0x4, offset = 0x4, fixed_abs, tag = 'smem constant byte address 0x4 - core index']
  #allocation1 [shape = 'u32[72,128]{1,0:T(1,128)}', space=vmem, size = 0x9000, scoped, tag = 'internal scratch']
  #allocation2 [shape = 'bf16[256,32]{1,0:T(8,128)(2,1)}', space=vmem, size = 0x10000, scoped, tag = 'scratch operand']
  #allocation3 [shape = 'bf16[224,160]{1,0:T(8,128)(2,1)}', space=vmem, size = 0x1c000, scoped, tag = 'scratch operand']
  #allocation4 [shape = 'f32[184,64]{1,0:T(8,128)}', space=vmem, size = 0x17000, scoped, tag = 'scratch operand']
  #allocation5 [shape = 'f32[8,64]{1,0:T(8,128)}', space=vmem, size = 0x1000, scoped, tag = 'scratch operand']
  #allocation6 [shape = 'f32[1,1]{1,0:T(1,128)S(1)}', space=vmem, size = 0x200, scoped, tag = 'scoped memory for net_forward.1']
  %s0 = inlined_call_operand.vmem [shape: bf16[2,8192,32], index: 0, kind: input, shape index: {}]
  %s1 = inlined_call_operand.vmem [shape: bf16[32,32], index: 1, kind: input, shape index: {}]
  %s2 = inlined_call_operand.vmem [shape: f32[1,32], index: 2, kind: input, shape index: {}]
  %s3 = inlined_call_operand.vmem [shape: bf16[800,64], index: 3, kind: input, shape index: {}]
  %s4 = inlined_call_operand.vmem [shape: f32[1,64], index: 4, kind: input, shape index: {}]
  %s5 = inlined_call_operand.vmem [shape: f32[64,32], index: 5, kind: input, shape index: {}]
  %s6 = inlined_call_operand.vmem [shape: f32[1,32], index: 6, kind: input, shape index: {}]
  %s7 = inlined_call_operand.vmem [shape: f32[1,32], index: 7, kind: input, shape index: {}]
  %s8 = inlined_call_operand.<no memory space> [shape: f32[1,1], index: 8, kind: input, shape index: {}]
  %s9 = inlined_call_operand.vmem [shape: f32[1,160], index: 9, kind: input, shape index: {}]
  %s10 = inlined_call_operand.vmem [shape: f32[2,1,8], index: 10, kind: output, shape index: {}]
  %s11 = sld [smem:[#allocation0]]
  $region80: #{net_forward.1} parent=0
    _
  %s13 = ssub.s32 1, %s11
  %s14 = scalar_select 0, %s13, %s11
  %v15 = vstv %s8
  %16 = vst [vmem:[#allocation6] sm:$0x1] %v15
  loop: start=0, step=1, limit=4
  $region2: #{net_forward.1} parent=0 // loop_pre_header
    _
  $region3: #{net_forward.1} parent=0 // loop_header
    %s18 = sphi 0, %s22
    %p19 = scmp.ge.s32.totalorder %s18, 4
    %s28 = sphi 0, %s30
    %s31 = sphi 0, %s28
    %s32 = sphi 0, %s31
    %s48 = sphi 0, %s32
    %s52 = sphi 0, %s52
    %s54 = sphi 0, %s52
    %s55 = sphi 0, %s54
    %s69 = sphi 0, %s55
    %s73 = sphi 0, %s73
    %s75 = sphi 0, %s73
    %s76 = sphi 0, %s75
    %s90 = sphi 0, %s76
    %s94 = sphi 0, %s94
    %s96 = sphi 0, %s94
    %s97 = sphi 0, %s96
    %s111 = sphi 0, %s97
    %s115 = sphi 0, %s115
    %s117 = sphi 0, %s115
    %s118 = sphi 0, %s117
    %s132 = sphi 0, %s118
    %s136 = sphi 0, %s136
    %s138 = sphi 0, %s136
    %s139 = sphi 0, %s138
    %s153 = sphi 0, %s139
    %s157 = sphi 0, %s157
    %s159 = sphi 0, %s157
    %s160 = sphi 0, %s159
    %s174 = sphi 0, %s160
    %s178 = sphi 0, %s178
    %s180 = sphi 0, %s178
    %s181 = sphi 0, %s180
    %s195 = sphi 0, %s181
    %s199 = sphi 0, %s199
    %s201 = sphi 0, %s199
    %s202 = sphi 0, %s201
    %s216 = sphi 0, %s202
    %s220 = sphi 0, %s220
    %s222 = sphi 0, %s220
    %s223 = sphi 0, %s222
    %s237 = sphi 0, %s223
    %s243 = sphi 0, %s245
    %s246 = sphi 0, %s243
    %s247 = sphi 0, %s246
    %s263 = sphi 0, %s247
  $region4: #{net_forward.1} parent=0 // loop_header_branch
    %21 = sbr.rel (%p19) target = $region8
  $region5: #{net_forward.1} parent=0 // loop_body
    %s23 = ssub.s32 %s18, 1
    %s24 = ssub.s32 %s18, 2
    %s25 = sadd.s32 %s18, 1
    %s26 = ssub.s32 %s18, %s25
    %p27 = scmp.eq.s32.totalorder %s26, 0
    %s29 = sadd.s32 %s28, 1
    %s30 = scalar_select %p27, %s28, %s29
    %p33 = pneg %p27
    %p34 = scmp.eq.s32.totalorder %s18, 1
    %p35 = por %p33, %p34
    %p36 = scmp.ne.s32.totalorder %s28, %s31
    %p37 = scmp.eq.s32.totalorder %s18, 0
    %p38 = por %p36, %p37
    %p39 = scmp.ne.s32.totalorder %s28, %s31
    %p40 = scmp.eq.s32.totalorder %s23, 1
    %p41 = por %p39, %p40
    %p42 = scmp.ne.s32.totalorder %s31, %s32
    %p43 = scmp.eq.s32.totalorder %s23, 0
    %p44 = por %p42, %p43
    %p45 = scmp.ne.s32.totalorder %s31, %s32
    %p46 = scmp.eq.s32.totalorder %s24, 1
    %p47 = por %p45, %p46
    %p49 = scmp.ne.s32.totalorder %s32, %s48
    %p50 = scmp.eq.s32.totalorder %s24, 0
    %p51 = por %p49, %p50
    %s53 = sadd.s32 %s52, 1
    %p56 = scmp.eq.s32.totalorder %s18, 1
    %p57 = scmp.ne.s32.totalorder %s52, %s54
    %p58 = scmp.eq.s32.totalorder %s18, 0
    %p59 = por %p57, %p58
    %p60 = scmp.ne.s32.totalorder %s52, %s54
    %p61 = scmp.eq.s32.totalorder %s23, 1
    %p62 = por %p60, %p61
    %p63 = scmp.ne.s32.totalorder %s54, %s55
    %p64 = scmp.eq.s32.totalorder %s23, 0
    %p65 = por %p63, %p64
    %p66 = scmp.ne.s32.totalorder %s54, %s55
    %p67 = scmp.eq.s32.totalorder %s24, 1
    %p68 = por %p66, %p67
    %p70 = scmp.ne.s32.totalorder %s55, %s69
    %p71 = scmp.eq.s32.totalorder %s24, 0
    %p72 = por %p70, %p71
    %s74 = sadd.s32 %s73, 1
    %p77 = scmp.eq.s32.totalorder %s18, 1
    %p78 = scmp.ne.s32.totalorder %s73, %s75
    %p79 = scmp.eq.s32.totalorder %s18, 0
    %p80 = por %p78, %p79
    %p81 = scmp.ne.s32.totalorder %s73, %s75
    %p82 = scmp.eq.s32.totalorder %s23, 1
    %p83 = por %p81, %p82
    %p84 = scmp.ne.s32.totalorder %s75, %s76
    %p85 = scmp.eq.s32.totalorder %s23, 0
    %p86 = por %p84, %p85
    %p87 = scmp.ne.s32.totalorder %s75, %s76
    %p88 = scmp.eq.s32.totalorder %s24, 1
    %p89 = por %p87, %p88
    %p91 = scmp.ne.s32.totalorder %s76, %s90
    %p92 = scmp.eq.s32.totalorder %s24, 0
    %p93 = por %p91, %p92
    %s95 = sadd.s32 %s94, 1
    %p98 = scmp.eq.s32.totalorder %s18, 1
    %p99 = scmp.ne.s32.totalorder %s94, %s96
    %p100 = scmp.eq.s32.totalorder %s18, 0
    %p101 = por %p99, %p100
    %p102 = scmp.ne.s32.totalorder %s94, %s96
    %p103 = scmp.eq.s32.totalorder %s23, 1
    %p104 = por %p102, %p103
    %p105 = scmp.ne.s32.totalorder %s96, %s97
    %p106 = scmp.eq.s32.totalorder %s23, 0
    %p107 = por %p105, %p106
    %p108 = scmp.ne.s32.totalorder %s96, %s97
    %p109 = scmp.eq.s32.totalorder %s24, 1
    %p110 = por %p108, %p109
    %p112 = scmp.ne.s32.totalorder %s97, %s111
    %p113 = scmp.eq.s32.totalorder %s24, 0
    %p114 = por %p112, %p113
    %s116 = sadd.s32 %s115, 1
    %p119 = scmp.eq.s32.totalorder %s18, 1
    %p120 = scmp.ne.s32.totalorder %s115, %s117
    %p121 = scmp.eq.s32.totalorder %s18, 0
    %p122 = por %p120, %p121
    %p123 = scmp.ne.s32.totalorder %s115, %s117
    %p124 = scmp.eq.s32.totalorder %s23, 1
    %p125 = por %p123, %p124
    %p126 = scmp.ne.s32.totalorder %s117, %s118
    %p127 = scmp.eq.s32.totalorder %s23, 0
    %p128 = por %p126, %p127
    %p129 = scmp.ne.s32.totalorder %s117, %s118
    %p130 = scmp.eq.s32.totalorder %s24, 1
    %p131 = por %p129, %p130
    %p133 = scmp.ne.s32.totalorder %s118, %s132
    %p134 = scmp.eq.s32.totalorder %s24, 0
    %p135 = por %p133, %p134
    %s137 = sadd.s32 %s136, 1
    %p140 = scmp.eq.s32.totalorder %s18, 1
    %p141 = scmp.ne.s32.totalorder %s136, %s138
    %p142 = scmp.eq.s32.totalorder %s18, 0
    %p143 = por %p141, %p142
    %p144 = scmp.ne.s32.totalorder %s136, %s138
    %p145 = scmp.eq.s32.totalorder %s23, 1
    %p146 = por %p144, %p145
    %p147 = scmp.ne.s32.totalorder %s138, %s139
    %p148 = scmp.eq.s32.totalorder %s23, 0
    %p149 = por %p147, %p148
    %p150 = scmp.ne.s32.totalorder %s138, %s139
    %p151 = scmp.eq.s32.totalorder %s24, 1
    %p152 = por %p150, %p151
    %p154 = scmp.ne.s32.totalorder %s139, %s153
    %p155 = scmp.eq.s32.totalorder %s24, 0
    %p156 = por %p154, %p155
    %s158 = sadd.s32 %s157, 1
    %p161 = scmp.eq.s32.totalorder %s18, 1
    %p162 = scmp.ne.s32.totalorder %s157, %s159
    %p163 = scmp.eq.s32.totalorder %s18, 0
    %p164 = por %p162, %p163
    %p165 = scmp.ne.s32.totalorder %s157, %s159
    %p166 = scmp.eq.s32.totalorder %s23, 1
    %p167 = por %p165, %p166
    %p168 = scmp.ne.s32.totalorder %s159, %s160
    %p169 = scmp.eq.s32.totalorder %s23, 0
    %p170 = por %p168, %p169
    %p171 = scmp.ne.s32.totalorder %s159, %s160
    %p172 = scmp.eq.s32.totalorder %s24, 1
    %p173 = por %p171, %p172
    %p175 = scmp.ne.s32.totalorder %s160, %s174
    %p176 = scmp.eq.s32.totalorder %s24, 0
    %p177 = por %p175, %p176
    %s179 = sadd.s32 %s178, 1
    %p182 = scmp.eq.s32.totalorder %s18, 1
    %p183 = scmp.ne.s32.totalorder %s178, %s180
    %p184 = scmp.eq.s32.totalorder %s18, 0
    %p185 = por %p183, %p184
    %p186 = scmp.ne.s32.totalorder %s178, %s180
    %p187 = scmp.eq.s32.totalorder %s23, 1
    %p188 = por %p186, %p187
    %p189 = scmp.ne.s32.totalorder %s180, %s181
    %p190 = scmp.eq.s32.totalorder %s23, 0
    %p191 = por %p189, %p190
    %p192 = scmp.ne.s32.totalorder %s180, %s181
    %p193 = scmp.eq.s32.totalorder %s24, 1
    %p194 = por %p192, %p193
    %p196 = scmp.ne.s32.totalorder %s181, %s195
    %p197 = scmp.eq.s32.totalorder %s24, 0
    %p198 = por %p196, %p197
    %s200 = sadd.s32 %s199, 1
    %p203 = scmp.eq.s32.totalorder %s18, 1
    %p204 = scmp.ne.s32.totalorder %s199, %s201
    %p205 = scmp.eq.s32.totalorder %s18, 0
    %p206 = por %p204, %p205
    %p207 = scmp.ne.s32.totalorder %s199, %s201
    %p208 = scmp.eq.s32.totalorder %s23, 1
    %p209 = por %p207, %p208
    %p210 = scmp.ne.s32.totalorder %s201, %s202
    %p211 = scmp.eq.s32.totalorder %s23, 0
    %p212 = por %p210, %p211
    %p213 = scmp.ne.s32.totalorder %s201, %s202
    %p214 = scmp.eq.s32.totalorder %s24, 1
    %p215 = por %p213, %p214
    %p217 = scmp.ne.s32.totalorder %s202, %s216
    %p218 = scmp.eq.s32.totalorder %s24, 0
    %p219 = por %p217, %p218
    %s221 = sadd.s32 %s220, 1
    %p224 = scmp.eq.s32.totalorder %s18, 1
    %p225 = scmp.ne.s32.totalorder %s220, %s222
    %p226 = scmp.eq.s32.totalorder %s18, 0
    %p227 = por %p225, %p226
    %p228 = scmp.ne.s32.totalorder %s220, %s222
    %p229 = scmp.eq.s32.totalorder %s23, 1
    %p230 = por %p228, %p229
    %p231 = scmp.ne.s32.totalorder %s222, %s223
    %p232 = scmp.eq.s32.totalorder %s23, 0
    %p233 = por %p231, %p232
    %p234 = scmp.ne.s32.totalorder %s222, %s223
    %p235 = scmp.eq.s32.totalorder %s24, 1
    %p236 = por %p234, %p235
    %p238 = scmp.ne.s32.totalorder %s223, %s237
    %p239 = scmp.eq.s32.totalorder %s24, 0
    %p240 = por %p238, %p239
    %s241 = ssub.s32 %s18, %s25
    %p242 = scmp.eq.s32.totalorder %s241, 0
    %s244 = sadd.s32 %s243, 1
    %s245 = scalar_select %p242, %s243, %s244
    %p248 = pneg %p242
    %p249 = scmp.eq.s32.totalorder %s18, 1
    %p250 = por %p248, %p249
    %p251 = scmp.ne.s32.totalorder %s243, %s246
    %p252 = scmp.eq.s32.totalorder %s18, 0
    %p253 = por %p251, %p252
    %p254 = scmp.ne.s32.totalorder %s243, %s246
    %p255 = scmp.eq.s32.totalorder %s23, 1
    %p256 = por %p254, %p255
    %p257 = scmp.ne.s32.totalorder %s246, %s247
    %p258 = scmp.eq.s32.totalorder %s23, 0
    %p259 = por %p257, %p258
    %p260 = scmp.ne.s32.totalorder %s246, %s247
    %p261 = scmp.eq.s32.totalorder %s24, 1
    %p262 = por %p260, %p261
    %p264 = scmp.ne.s32.totalorder %s247, %s263
    %p265 = scmp.eq.s32.totalorder %s24, 0
    %p266 = por %p264, %p265
    %p267 = scmp.le.s32.totalorder 1, %s18
    %p268 = scmp.lt.s32.totalorder %s18, 3
    %p269 = pnand %p267, %p268
    %p270 = pneg %p269
    // Predicated region
    $region9: #{net_forward.1} parent=5 // pred_check
      _
    $region10: #{net_forward.1} parent=5 // pred_check_branch
      %272 = sbr.rel (%p269) target = $region12
    $region11: #{net_forward.1} parent=5 // pred_region
      %s273 = ssub.s32 %s18, 1
      // Predicated region
      $region13: #{net_forward.1} parent=11 // pred_check
        %p274 = pneg %p65
      $region14: #{net_forward.1} parent=11 // pred_check_branch
        %276 = sbr.rel (%p274) target = $region16
      $region15: #{net_forward.1} parent=11 // pred_region
        _
      $region16: #{net_forward.1} parent=11 // pred_fallthru
        _
      // Predicated region
      $region17: #{net_forward.1} parent=11 // pred_check
        %p277 = pneg %p86
      $region18: #{net_forward.1} parent=11 // pred_check_branch
        %279 = sbr.rel (%p277) target = $region20
      $region19: #{net_forward.1} parent=11 // pred_region
        _
      $region20: #{net_forward.1} parent=11 // pred_fallthru
        _
      // Predicated region
      $region21: #{net_forward.1} parent=11 // pred_check
        %p280 = pneg %p107
      $region22: #{net_forward.1} parent=11 // pred_check_branch
        %282 = sbr.rel (%p280) target = $region24
      $region23: #{net_forward.1} parent=11 // pred_region
        _
      $region24: #{net_forward.1} parent=11 // pred_fallthru
        _
      // Predicated region
      $region25: #{net_forward.1} parent=11 // pred_check
        %p283 = pneg %p128
      $region26: #{net_forward.1} parent=11 // pred_check_branch
        %285 = sbr.rel (%p283) target = $region28
      $region27: #{net_forward.1} parent=11 // pred_region
        _
      $region28: #{net_forward.1} parent=11 // pred_fallthru
        _
      // Predicated region
      $region29: #{net_forward.1} parent=11 // pred_check
        %p286 = pneg %p149
      $region30: #{net_forward.1} parent=11 // pred_check_branch
        %288 = sbr.rel (%p286) target = $region32
      $region31: #{net_forward.1} parent=11 // pred_region
        _
      $region32: #{net_forward.1} parent=11 // pred_fallthru
        _
      // Predicated region
      $region33: #{net_forward.1} parent=11 // pred_check
        %p289 = pneg %p170
      $region34: #{net_forward.1} parent=11 // pred_check_branch
        %291 = sbr.rel (%p289) target = $region36
      $region35: #{net_forward.1} parent=11 // pred_region
        _
      $region36: #{net_forward.1} parent=11 // pred_fallthru
        _
      // Predicated region
      $region37: #{net_forward.1} parent=11 // pred_check
        %p292 = pneg %p191
      $region38: #{net_forward.1} parent=11 // pred_check_branch
        %294 = sbr.rel (%p292) target = $region40
      $region39: #{net_forward.1} parent=11 // pred_region
        _
      $region40: #{net_forward.1} parent=11 // pred_fallthru
        _
      // Predicated region
      $region41: #{net_forward.1} parent=11 // pred_check
        %p295 = pneg %p212
      $region42: #{net_forward.1} parent=11 // pred_check_branch
        %297 = sbr.rel (%p295) target = $region44
      $region43: #{net_forward.1} parent=11 // pred_region
        _
      $region44: #{net_forward.1} parent=11 // pred_fallthru
        _
      // Predicated region
      $region45: #{net_forward.1} parent=11 // pred_check
        %p298 = pneg %p233
      $region46: #{net_forward.1} parent=11 // pred_check_branch
        %300 = sbr.rel (%p298) target = $region48
      $region47: #{net_forward.1} parent=11 // pred_region
        _
      $region48: #{net_forward.1} parent=11 // pred_fallthru
        _
    $region12: #{net_forward.1} parent=5 // pred_fallthru
      _
    %p301 = scmp.lt.s32.totalorder %s18, 2
    // Predicated region
    $region49: #{net_forward.1} parent=5 // pred_check
      %p302 = pneg %p301
    $region50: #{net_forward.1} parent=5 // pred_check_branch
      %304 = sbr.rel (%p302) target = $region52
    $region51: #{net_forward.1} parent=5 // pred_region
      // Predicated region
      $region53: #{net_forward.1} parent=51 // pred_check
        %p305 = pneg %p38
      $region54: #{net_forward.1} parent=51 // pred_check_branch
        %307 = sbr.rel (%p305) target = $region56
      $region55: #{net_forward.1} parent=51 // pred_region
        %p308 = scmp.lt.s32.totalorder %s18, 1
        %s309 = scalar_select %p308, %s18, 1
        %s310 = smul.addr %s309, 1024
        %s311 = smul.addr %s310, 4
        %s312 = scalar_lea.vmem %s0, %s311
      $region56: #{net_forward.1} parent=51 // pred_fallthru
        _
    $region52: #{net_forward.1} parent=5 // pred_fallthru
      _
    %p313 = scmp.le.s32.totalorder 1, %s18
    %p314 = scmp.lt.s32.totalorder %s18, 3
    %p315 = pnand %p313, %p314
    %p316 = pneg %p315
    // Predicated region
    $region57: #{net_forward.1} parent=5 // pred_check
      _
    $region58: #{net_forward.1} parent=5 // pred_check_branch
      %318 = sbr.rel (%p315) target = $region60
    $region59: #{net_forward.1} parent=5 // pred_region
      %s319 = ssub.s32 %s18, 1
      %p320 = scmp.lt.s32.totalorder %s23, 1
      %s321 = scalar_select %p320, %s23, 1
      %s322 = smul.addr %s321, 1024
      %s323 = smul.addr %s322, 4
      %s324 = scalar_lea.vmem %s0, %s323
      %p325 = pneg %p44
      %p326 = pneg %p41
      %p327 = pneg %p65
      %p328 = pneg %p62
      %p329 = pneg %p86
      %p330 = pneg %p83
      %p331 = pneg %p107
      %p332 = pneg %p104
      %p333 = pneg %p128
      %p334 = pneg %p125
      %p335 = pneg %p149
      %p336 = pneg %p146
      %p337 = pneg %p170
      %p338 = pneg %p167
      %p339 = pneg %p191
      %p340 = pneg %p188
      %p341 = pneg %p212
      %p342 = pneg %p209
      %p343 = pneg %p233
      %p344 = pneg %p230
      %p345 = pneg %p259
      %p346 = pneg %p256
      %p347 = scmp.lt.s32.totalorder %s23, 1
      %s348 = scalar_select %p347, %s23, 1
      %s349 = scalar_lea.vmem %s10, %s348
      %p350 = scmp.lt.s32.totalorder %s23, 1
      %s351 = scalar_select %p350, %s23, 1
      %s352 = smul.addr %s351, 1024
      %s353 = smul.addr %s352, 4
      %s354 = scalar_lea.vmem %s0, %s353
      %p355 = scmp.lt.s32.totalorder %s23, 1
      %s356 = scalar_select %p355, %s23, 1
      %s357 = scalar_lea.vmem %s10, %s356
      %vm359 = vcmask 523264
      %360 = vst.msk [vmem:[#allocation4 + $0xa0] sm:$0xff] %vm359, 0.0
      %361 = vst.msk [vmem:[#allocation4 + $0xa8] sm:$0xff] %vm359, 0.0
      %362 = vst.msk [vmem:[#allocation4 + $0xb0] sm:$0xff] %vm359, 0.0
      %v363 = vld [vmem:[%s1] sm:$0xf]
      %v364 = vld [vmem:[%s1 + $0x4] sm:$0xf]
      %v365 = vld [vmem:[%s1 + $0x8] sm:$0xf]
      %v366 = vld [vmem:[%s1 + $0xc] sm:$0xf]
      %v367 = vld [vmem:[%s2] sm:$0x1]
      %v368 = vld [vmem:[%s9] sm:$0x3]
      %v369 = vld [vmem:[%s4] sm:$0x1]
      %v371 = vperm.slane %v369, 0
      loop: start=0, step=1, limit=8
      $region61: #{net_forward.1} parent=59 // loop_pre_header
        _
      $region62: #{net_forward.1} parent=59 // loop_header
        %s374 = sphi 0, %s378
        %p375 = scmp.ge.s32.totalorder %s374, 8
      $region63: #{net_forward.1} parent=59 // loop_header_branch
        %377 = sbr.rel (%p375) target = $region67
      $region64: #{net_forward.1} parent=59 // loop_body
        %s379 = smul.u32 %s374, 1024
        %s380 = sshra.s32 %s379, 3
        %s381 = sand.u32 %s379, 7
        %s382 = smul.addr %s380, 4
        %s383 = scalar_lea.vmem %s354, %s382
        %v384 = vld [vmem:[%s383] sm:$0xf]
        %v385 = vld [vmem:[%s383 + $0x4] sm:$0xf]
        %v386 = vld [vmem:[%s383 + $0x8] sm:$0xf]
        %v387 = vld [vmem:[%s383 + $0xc] sm:$0xf]
        %v388 = vld [vmem:[%s383 + $0x10] sm:$0xf]
        %v389 = vld [vmem:[%s383 + $0x14] sm:$0xf]
        %v390 = vld [vmem:[%s383 + $0x18] sm:$0xf]
        %v391 = vld [vmem:[%s383 + $0x1c] sm:$0xf]
        %v392 = vld [vmem:[%s383 + $0x20] sm:$0xf]
        %v393 = vld [vmem:[%s383 + $0x24] sm:$0xf]
        %v394 = vld [vmem:[%s383 + $0x28] sm:$0xf]
        %v395 = vld [vmem:[%s383 + $0x2c] sm:$0xf]
        %v396 = vld [vmem:[%s383 + $0x30] sm:$0xf]
        %v397 = vld [vmem:[%s383 + $0x34] sm:$0xf]
        %v398 = vld [vmem:[%s383 + $0x38] sm:$0xf]
        %v399 = vld [vmem:[%s383 + $0x3c] sm:$0xf]
        %v400 = vld [vmem:[%s383 + $0x40] sm:$0xf]
        %v401 = vld [vmem:[%s383 + $0x44] sm:$0xf]
        %v402 = vld [vmem:[%s383 + $0x48] sm:$0xf]
        %v403 = vld [vmem:[%s383 + $0x4c] sm:$0xf]
        %v404 = vld [vmem:[%s383 + $0x50] sm:$0xf]
        %v405 = vld [vmem:[%s383 + $0x54] sm:$0xf]
        %v406 = vld [vmem:[%s383 + $0x58] sm:$0xf]
        %v407 = vld [vmem:[%s383 + $0x5c] sm:$0xf]
        %v408 = vld [vmem:[%s383 + $0x60] sm:$0xf]
        %v409 = vld [vmem:[%s383 + $0x64] sm:$0xf]
        %v410 = vld [vmem:[%s383 + $0x68] sm:$0xf]
        %v411 = vld [vmem:[%s383 + $0x6c] sm:$0xf]
        %v412 = vld [vmem:[%s383 + $0x70] sm:$0xf]
        %v413 = vld [vmem:[%s383 + $0x74] sm:$0xf]
        %v414 = vld [vmem:[%s383 + $0x78] sm:$0xf]
        %v415 = vld [vmem:[%s383 + $0x7c] sm:$0xf]
        %v448 = vunpack.c.l.b16 %v384
        %v449 = vunpack.c.l.b16 %v385
        %v450 = vunpack.c.l.b16 %v386
        %v451 = vunpack.c.l.b16 %v387
        %v452 = vunpack.c.l.b16 %v388
        %v453 = vunpack.c.l.b16 %v389
        %v454 = vunpack.c.l.b16 %v390
        %v455 = vunpack.c.l.b16 %v391
        %v456 = vunpack.c.l.b16 %v392
        %v457 = vunpack.c.l.b16 %v393
        %v458 = vunpack.c.l.b16 %v394
        %v459 = vunpack.c.l.b16 %v395
        %v460 = vunpack.c.l.b16 %v396
        %v461 = vunpack.c.l.b16 %v397
        %v462 = vunpack.c.l.b16 %v398
        %v463 = vunpack.c.l.b16 %v399
        %v464 = vunpack.c.l.b16 %v400
        %v465 = vunpack.c.l.b16 %v401
        %v466 = vunpack.c.l.b16 %v402
        %v467 = vunpack.c.l.b16 %v403
        %v468 = vunpack.c.l.b16 %v404
        %v469 = vunpack.c.l.b16 %v405
        %v470 = vunpack.c.l.b16 %v406
        %v471 = vunpack.c.l.b16 %v407
        %v472 = vunpack.c.l.b16 %v408
        %v473 = vunpack.c.l.b16 %v409
        %v474 = vunpack.c.l.b16 %v410
        %v475 = vunpack.c.l.b16 %v411
        %v476 = vunpack.c.l.b16 %v412
        %v477 = vunpack.c.l.b16 %v413
        %v478 = vunpack.c.l.b16 %v414
        %v479 = vunpack.c.l.b16 %v415
        %v480 = vpack.c.b16 %v449, %v448
        %v481 = vpack.c.b16 %v451, %v450
        %v482 = vpack.c.b16 %v453, %v452
        %v483 = vpack.c.b16 %v455, %v454
        %v484 = vpack.c.b16 %v457, %v456
        %v485 = vpack.c.b16 %v459, %v458
        %v486 = vpack.c.b16 %v461, %v460
        %v487 = vpack.c.b16 %v463, %v462
        %v488 = vpack.c.b16 %v465, %v464
        %v489 = vpack.c.b16 %v467, %v466
        %v490 = vpack.c.b16 %v469, %v468
        %v491 = vpack.c.b16 %v471, %v470
        %v492 = vpack.c.b16 %v473, %v472
        %v493 = vpack.c.b16 %v475, %v474
        %v494 = vpack.c.b16 %v477, %v476
        %v495 = vpack.c.b16 %v479, %v478
        %v500 = vunpack.c.l.b16 %v363
        %v501 = vunpack.c.l.b16 %v364
        %v502 = vunpack.c.l.b16 %v365
        %v503 = vunpack.c.l.b16 %v366
        %v504 = vpack.c.b16 %v501, %v500
        %v505 = vpack.c.b16 %v503, %v502
        %vm508 = vcmask 261120
        %v510 = vsel %vm508, %v480, 0
        %v513 = vsel %vm508, %v481, 0
        %v516 = vsel %vm508, %v482, 0
        %v519 = vsel %vm508, %v483, 0
        %v522 = vsel %vm508, %v484, 0
        %v525 = vsel %vm508, %v485, 0
        %v528 = vsel %vm508, %v486, 0
        %v531 = vsel %vm508, %v487, 0
        %v534 = vsel %vm508, %v488, 0
        %v537 = vsel %vm508, %v489, 0
        %v540 = vsel %vm508, %v490, 0
        %v543 = vsel %vm508, %v491, 0
        %v546 = vsel %vm508, %v492, 0
        %v549 = vsel %vm508, %v493, 0
        %v552 = vsel %vm508, %v494, 0
        %v555 = vsel %vm508, %v495, 0
        %557 = vmatpush.bf16.msra.mxu0 0
        %558 = vmatpush.bf16.msra.mxu0 0
        %559 = vmatpush.bf16.msra.mxu0 0
        %560 = vmatpush.bf16.msra.mxu0 0
        %561 = vmatpush.bf16.msra.mxu0 0
        %562 = vmatpush.bf16.msra.mxu0 0
        %563 = vmatpush.bf16.msra.mxu0 %v505
        %564 = vmatpush.bf16.msra.mxu0 %v504
        %565 = vmatmul.bf16.gmra.mxu0 %v510
        %v566 = vpop.f32.mrf.mxu0
        %v567 = vadd.f32 0.0, %v566
        %v568 = vpop.f32.mrf.mxu0
        %v569 = vadd.f32 0.0, %v568
        %570 = vmatmul.bf16.gmra.mxu0 %v513
        %v571 = vpop.f32.mrf.mxu0
        %v572 = vadd.f32 0.0, %v571
        %v573 = vpop.f32.mrf.mxu0
        %v574 = vadd.f32 0.0, %v573
        %575 = vmatmul.bf16.gmra.mxu0 %v516
        %v576 = vpop.f32.mrf.mxu0
        %v577 = vadd.f32 0.0, %v576
        %v578 = vpop.f32.mrf.mxu0
        %v579 = vadd.f32 0.0, %v578
        %580 = vmatmul.bf16.gmra.mxu0 %v519
        %v581 = vpop.f32.mrf.mxu0
        %v582 = vadd.f32 0.0, %v581
        %v583 = vpop.f32.mrf.mxu0
        %v584 = vadd.f32 0.0, %v583
        %585 = vmatmul.bf16.gmra.mxu0 %v522
        %v586 = vpop.f32.mrf.mxu0
        %v587 = vadd.f32 0.0, %v586
        %v588 = vpop.f32.mrf.mxu0
        %v589 = vadd.f32 0.0, %v588
        %590 = vmatmul.bf16.gmra.mxu0 %v525
        %v591 = vpop.f32.mrf.mxu0
        %v592 = vadd.f32 0.0, %v591
        %v593 = vpop.f32.mrf.mxu0
        %v594 = vadd.f32 0.0, %v593
        %595 = vmatmul.bf16.gmra.mxu0 %v528
        %v596 = vpop.f32.mrf.mxu0
        %v597 = vadd.f32 0.0, %v596
        %v598 = vpop.f32.mrf.mxu0
        %v599 = vadd.f32 0.0, %v598
        %600 = vmatmul.bf16.gmra.mxu0 %v531
        %v601 = vpop.f32.mrf.mxu0
        %v602 = vadd.f32 0.0, %v601
        %v603 = vpop.f32.mrf.mxu0
        %v604 = vadd.f32 0.0, %v603
        %605 = vmatmul.bf16.gmra.mxu0 %v534
        %v606 = vpop.f32.mrf.mxu0
        %v607 = vadd.f32 0.0, %v606
        %v608 = vpop.f32.mrf.mxu0
        %v609 = vadd.f32 0.0, %v608
        %610 = vmatmul.bf16.gmra.mxu0 %v537
        %v611 = vpop.f32.mrf.mxu0
        %v612 = vadd.f32 0.0, %v611
        %v613 = vpop.f32.mrf.mxu0
        %v614 = vadd.f32 0.0, %v613
        %615 = vmatmul.bf16.gmra.mxu0 %v540
        %v616 = vpop.f32.mrf.mxu0
        %v617 = vadd.f32 0.0, %v616
        %v618 = vpop.f32.mrf.mxu0
        %v619 = vadd.f32 0.0, %v618
        %620 = vmatmul.bf16.gmra.mxu0 %v543
        %v621 = vpop.f32.mrf.mxu0
        %v622 = vadd.f32 0.0, %v621
        %v623 = vpop.f32.mrf.mxu0
        %v624 = vadd.f32 0.0, %v623
        %625 = vmatmul.bf16.gmra.mxu0 %v546
        %v626 = vpop.f32.mrf.mxu0
        %v627 = vadd.f32 0.0, %v626
        %v628 = vpop.f32.mrf.mxu0
        %v629 = vadd.f32 0.0, %v628
        %630 = vmatmul.bf16.gmra.mxu0 %v549
        %v631 = vpop.f32.mrf.mxu0
        %v632 = vadd.f32 0.0, %v631
        %v633 = vpop.f32.mrf.mxu0
        %v634 = vadd.f32 0.0, %v633
        %635 = vmatmul.bf16.gmra.mxu0 %v552
        %v636 = vpop.f32.mrf.mxu0
        %v637 = vadd.f32 0.0, %v636
        %v638 = vpop.f32.mrf.mxu0
        %v639 = vadd.f32 0.0, %v638
        %640 = vmatmul.bf16.gmra.mxu0 %v555
        %v641 = vpop.f32.mrf.mxu0
        %v642 = vadd.f32 0.0, %v641
        %v643 = vpop.f32.mrf.mxu0
        %v644 = vadd.f32 0.0, %v643
        %645 = vdwg.mxu0
        %s646 = sadd.s32 %s379, 256
        %s647 = sshra.s32 %s646, 3
        %s648 = sand.u32 %s646, 7
        %s649 = smul.addr %s647, 4
        %s650 = scalar_lea.vmem %s354, %s649
        %v651 = vld [vmem:[%s650] sm:$0xf]
        %v652 = vld [vmem:[%s650 + $0x4] sm:$0xf]
        %v653 = vld [vmem:[%s650 + $0x8] sm:$0xf]
        %v654 = vld [vmem:[%s650 + $0xc] sm:$0xf]
        %v655 = vld [vmem:[%s650 + $0x10] sm:$0xf]
        %v656 = vld [vmem:[%s650 + $0x14] sm:$0xf]
        %v657 = vld [vmem:[%s650 + $0x18] sm:$0xf]
        %v658 = vld [vmem:[%s650 + $0x1c] sm:$0xf]
        %v659 = vld [vmem:[%s650 + $0x20] sm:$0xf]
        %v660 = vld [vmem:[%s650 + $0x24] sm:$0xf]
        %v661 = vld [vmem:[%s650 + $0x28] sm:$0xf]
        %v662 = vld [vmem:[%s650 + $0x2c] sm:$0xf]
        %v663 = vld [vmem:[%s650 + $0x30] sm:$0xf]
        %v664 = vld [vmem:[%s650 + $0x34] sm:$0xf]
        %v665 = vld [vmem:[%s650 + $0x38] sm:$0xf]
        %v666 = vld [vmem:[%s650 + $0x3c] sm:$0xf]
        %v667 = vld [vmem:[%s650 + $0x40] sm:$0xf]
        %v668 = vld [vmem:[%s650 + $0x44] sm:$0xf]
        %v669 = vld [vmem:[%s650 + $0x48] sm:$0xf]
        %v670 = vld [vmem:[%s650 + $0x4c] sm:$0xf]
        %v671 = vld [vmem:[%s650 + $0x50] sm:$0xf]
        %v672 = vld [vmem:[%s650 + $0x54] sm:$0xf]
        %v673 = vld [vmem:[%s650 + $0x58] sm:$0xf]
        %v674 = vld [vmem:[%s650 + $0x5c] sm:$0xf]
        %v675 = vld [vmem:[%s650 + $0x60] sm:$0xf]
        %v676 = vld [vmem:[%s650 + $0x64] sm:$0xf]
        %v677 = vld [vmem:[%s650 + $0x68] sm:$0xf]
        %v678 = vld [vmem:[%s650 + $0x6c] sm:$0xf]
        %v679 = vld [vmem:[%s650 + $0x70] sm:$0xf]
        %v680 = vld [vmem:[%s650 + $0x74] sm:$0xf]
        %v681 = vld [vmem:[%s650 + $0x78] sm:$0xf]
        %v682 = vld [vmem:[%s650 + $0x7c] sm:$0xf]
        %v715 = vunpack.c.l.b16 %v651
        %v716 = vunpack.c.l.b16 %v652
        %v717 = vunpack.c.l.b16 %v653
        %v718 = vunpack.c.l.b16 %v654
        %v719 = vunpack.c.l.b16 %v655
        %v720 = vunpack.c.l.b16 %v656
        %v721 = vunpack.c.l.b16 %v657
        %v722 = vunpack.c.l.b16 %v658
        %v723 = vunpack.c.l.b16 %v659
        %v724 = vunpack.c.l.b16 %v660
        %v725 = vunpack.c.l.b16 %v661
        %v726 = vunpack.c.l.b16 %v662
        %v727 = vunpack.c.l.b16 %v663
        %v728 = vunpack.c.l.b16 %v664
        %v729 = vunpack.c.l.b16 %v665
        %v730 = vunpack.c.l.b16 %v666
        %v731 = vunpack.c.l.b16 %v667
        %v732 = vunpack.c.l.b16 %v668
        %v733 = vunpack.c.l.b16 %v669
        %v734 = vunpack.c.l.b16 %v670
        %v735 = vunpack.c.l.b16 %v671
        %v736 = vunpack.c.l.b16 %v672
        %v737 = vunpack.c.l.b16 %v673
        %v738 = vunpack.c.l.b16 %v674
        %v739 = vunpack.c.l.b16 %v675
        %v740 = vunpack.c.l.b16 %v676
        %v741 = vunpack.c.l.b16 %v677
        %v742 = vunpack.c.l.b16 %v678
        %v743 = vunpack.c.l.b16 %v679
        %v744 = vunpack.c.l.b16 %v680
        %v745 = vunpack.c.l.b16 %v681
        %v746 = vunpack.c.l.b16 %v682
        %v747 = vpack.c.b16 %v716, %v715
        %v748 = vpack.c.b16 %v718, %v717
        %v749 = vpack.c.b16 %v720, %v719
        %v750 = vpack.c.b16 %v722, %v721
        %v751 = vpack.c.b16 %v724, %v723
        %v752 = vpack.c.b16 %v726, %v725
        %v753 = vpack.c.b16 %v728, %v727
        %v754 = vpack.c.b16 %v730, %v729
        %v755 = vpack.c.b16 %v732, %v731
        %v756 = vpack.c.b16 %v734, %v733
        %v757 = vpack.c.b16 %v736, %v735
        %v758 = vpack.c.b16 %v738, %v737
        %v759 = vpack.c.b16 %v740, %v739
        %v760 = vpack.c.b16 %v742, %v741
        %v761 = vpack.c.b16 %v744, %v743
        %v762 = vpack.c.b16 %v746, %v745
        %v764 = vsel %vm508, %v747, 0
        %v767 = vsel %vm508, %v748, 0
        %v770 = vsel %vm508, %v749, 0
        %v773 = vsel %vm508, %v750, 0
        %v776 = vsel %vm508, %v751, 0
        %v779 = vsel %vm508, %v752, 0
        %v782 = vsel %vm508, %v753, 0
        %v785 = vsel %vm508, %v754, 0
        %v788 = vsel %vm508, %v755, 0
        %v791 = vsel %vm508, %v756, 0
        %v794 = vsel %vm508, %v757, 0
        %v797 = vsel %vm508, %v758, 0
        %v800 = vsel %vm508, %v759, 0
        %v803 = vsel %vm508, %v760, 0
        %v806 = vsel %vm508, %v761, 0
        %v809 = vsel %vm508, %v762, 0
        %811 = vmatpush.bf16.msra.mxu0 0
        %812 = vmatpush.bf16.msra.mxu0 0
        %813 = vmatpush.bf16.msra.mxu0 0
        %814 = vmatpush.bf16.msra.mxu0 0
        %815 = vmatpush.bf16.msra.mxu0 0
        %816 = vmatpush.bf16.msra.mxu0 0
        %817 = vmatpush.bf16.msra.mxu0 %v505
        %818 = vmatpush.bf16.msra.mxu0 %v504
        %819 = vmatmul.bf16.gmra.mxu0 %v764
        %v820 = vpop.f32.mrf.mxu0
        %v821 = vadd.f32 0.0, %v820
        %v822 = vpop.f32.mrf.mxu0
        %v823 = vadd.f32 0.0, %v822
        %824 = vmatmul.bf16.gmra.mxu0 %v767
        %v825 = vpop.f32.mrf.mxu0
        %v826 = vadd.f32 0.0, %v825
        %v827 = vpop.f32.mrf.mxu0
        %v828 = vadd.f32 0.0, %v827
        %829 = vmatmul.bf16.gmra.mxu0 %v770
        %v830 = vpop.f32.mrf.mxu0
        %v831 = vadd.f32 0.0, %v830
        %v832 = vpop.f32.mrf.mxu0
        %v833 = vadd.f32 0.0, %v832
        %834 = vmatmul.bf16.gmra.mxu0 %v773
        %v835 = vpop.f32.mrf.mxu0
        %v836 = vadd.f32 0.0, %v835
        %v837 = vpop.f32.mrf.mxu0
        %v838 = vadd.f32 0.0, %v837
        %839 = vmatmul.bf16.gmra.mxu0 %v776
        %v840 = vpop.f32.mrf.mxu0
        %v841 = vadd.f32 0.0, %v840
        %v842 = vpop.f32.mrf.mxu0
        %v843 = vadd.f32 0.0, %v842
        %844 = vmatmul.bf16.gmra.mxu0 %v779
        %v845 = vpop.f32.mrf.mxu0
        %v846 = vadd.f32 0.0, %v845
        %v847 = vpop.f32.mrf.mxu0
        %v848 = vadd.f32 0.0, %v847
        %849 = vmatmul.bf16.gmra.mxu0 %v782
        %v850 = vpop.f32.mrf.mxu0
        %v851 = vadd.f32 0.0, %v850
        %v852 = vpop.f32.mrf.mxu0
        %v853 = vadd.f32 0.0, %v852
        %854 = vmatmul.bf16.gmra.mxu0 %v785
        %v855 = vpop.f32.mrf.mxu0
        %v856 = vadd.f32 0.0, %v855
        %v857 = vpop.f32.mrf.mxu0
        %v858 = vadd.f32 0.0, %v857
        %859 = vmatmul.bf16.gmra.mxu0 %v788
        %v860 = vpop.f32.mrf.mxu0
        %v861 = vadd.f32 0.0, %v860
        %v862 = vpop.f32.mrf.mxu0
        %v863 = vadd.f32 0.0, %v862
        %864 = vmatmul.bf16.gmra.mxu0 %v791
        %v865 = vpop.f32.mrf.mxu0
        %v866 = vadd.f32 0.0, %v865
        %v867 = vpop.f32.mrf.mxu0
        %v868 = vadd.f32 0.0, %v867
        %869 = vmatmul.bf16.gmra.mxu0 %v794
        %v870 = vpop.f32.mrf.mxu0
        %v871 = vadd.f32 0.0, %v870
        %v872 = vpop.f32.mrf.mxu0
        %v873 = vadd.f32 0.0, %v872
        %874 = vmatmul.bf16.gmra.mxu0 %v797
        %v875 = vpop.f32.mrf.mxu0
        %v876 = vadd.f32 0.0, %v875
        %v877 = vpop.f32.mrf.mxu0
        %v878 = vadd.f32 0.0, %v877
        %879 = vmatmul.bf16.gmra.mxu0 %v800
        %v880 = vpop.f32.mrf.mxu0
        %v881 = vadd.f32 0.0, %v880
        %v882 = vpop.f32.mrf.mxu0
        %v883 = vadd.f32 0.0, %v882
        %884 = vmatmul.bf16.gmra.mxu0 %v803
        %v885 = vpop.f32.mrf.mxu0
        %v886 = vadd.f32 0.0, %v885
        %v887 = vpop.f32.mrf.mxu0
        %v888 = vadd.f32 0.0, %v887
        %889 = vmatmul.bf16.gmra.mxu0 %v806
        %v890 = vpop.f32.mrf.mxu0
        %v891 = vadd.f32 0.0, %v890
        %v892 = vpop.f32.mrf.mxu0
        %v893 = vadd.f32 0.0, %v892
        %894 = vmatmul.bf16.gmra.mxu0 %v809
        %v895 = vpop.f32.mrf.mxu0
        %v896 = vadd.f32 0.0, %v895
        %v897 = vpop.f32.mrf.mxu0
        %v898 = vadd.f32 0.0, %v897
        %899 = vdwg.mxu0
        %v900 = vmax.f32 %v567, %v821
        %v901 = vmax.f32 %v569, %v823
        %v902 = vmax.f32 %v572, %v826
        %v903 = vmax.f32 %v574, %v828
        %v904 = vmax.f32 %v577, %v831
        %v905 = vmax.f32 %v579, %v833
        %v906 = vmax.f32 %v582, %v836
        %v907 = vmax.f32 %v584, %v838
        %v908 = vmax.f32 %v587, %v841
        %v909 = vmax.f32 %v589, %v843
        %v910 = vmax.f32 %v592, %v846
        %v911 = vmax.f32 %v594, %v848
        %v912 = vmax.f32 %v597, %v851
        %v913 = vmax.f32 %v599, %v853
        %v914 = vmax.f32 %v602, %v856
        %v915 = vmax.f32 %v604, %v858
        %v916 = vmax.f32 %v607, %v861
        %v917 = vmax.f32 %v609, %v863
        %v918 = vmax.f32 %v612, %v866
        %v919 = vmax.f32 %v614, %v868
        %v920 = vmax.f32 %v617, %v871
        %v921 = vmax.f32 %v619, %v873
        %v922 = vmax.f32 %v622, %v876
        %v923 = vmax.f32 %v624, %v878
        %v924 = vmax.f32 %v627, %v881
        %v925 = vmax.f32 %v629, %v883
        %v926 = vmax.f32 %v632, %v886
        %v927 = vmax.f32 %v634, %v888
        %v928 = vmax.f32 %v637, %v891
        %v929 = vmax.f32 %v639, %v893
        %v930 = vmax.f32 %v642, %v896
        %v931 = vmax.f32 %v644, %v898
        %s932 = sadd.s32 %s379, 512
        %s933 = sshra.s32 %s932, 3
        %s934 = sand.u32 %s932, 7
        %s935 = smul.addr %s933, 4
        %s936 = scalar_lea.vmem %s354, %s935
        %v937 = vld [vmem:[%s936] sm:$0xf]
        %v938 = vld [vmem:[%s936 + $0x4] sm:$0xf]
        %v939 = vld [vmem:[%s936 + $0x8] sm:$0xf]
        %v940 = vld [vmem:[%s936 + $0xc] sm:$0xf]
        %v941 = vld [vmem:[%s936 + $0x10] sm:$0xf]
        %v942 = vld [vmem:[%s936 + $0x14] sm:$0xf]
        %v943 = vld [vmem:[%s936 + $0x18] sm:$0xf]
        %v944 = vld [vmem:[%s936 + $0x1c] sm:$0xf]
        %v945 = vld [vmem:[%s936 + $0x20] sm:$0xf]
        %v946 = vld [vmem:[%s936 + $0x24] sm:$0xf]
        %v947 = vld [vmem:[%s936 + $0x28] sm:$0xf]
        %v948 = vld [vmem:[%s936 + $0x2c] sm:$0xf]
        %v949 = vld [vmem:[%s936 + $0x30] sm:$0xf]
        %v950 = vld [vmem:[%s936 + $0x34] sm:$0xf]
        %v951 = vld [vmem:[%s936 + $0x38] sm:$0xf]
        %v952 = vld [vmem:[%s936 + $0x3c] sm:$0xf]
        %v953 = vld [vmem:[%s936 + $0x40] sm:$0xf]
        %v954 = vld [vmem:[%s936 + $0x44] sm:$0xf]
        %v955 = vld [vmem:[%s936 + $0x48] sm:$0xf]
        %v956 = vld [vmem:[%s936 + $0x4c] sm:$0xf]
        %v957 = vld [vmem:[%s936 + $0x50] sm:$0xf]
        %v958 = vld [vmem:[%s936 + $0x54] sm:$0xf]
        %v959 = vld [vmem:[%s936 + $0x58] sm:$0xf]
        %v960 = vld [vmem:[%s936 + $0x5c] sm:$0xf]
        %v961 = vld [vmem:[%s936 + $0x60] sm:$0xf]
        %v962 = vld [vmem:[%s936 + $0x64] sm:$0xf]
        %v963 = vld [vmem:[%s936 + $0x68] sm:$0xf]
        %v964 = vld [vmem:[%s936 + $0x6c] sm:$0xf]
        %v965 = vld [vmem:[%s936 + $0x70] sm:$0xf]
        %v966 = vld [vmem:[%s936 + $0x74] sm:$0xf]
        %v967 = vld [vmem:[%s936 + $0x78] sm:$0xf]
        %v968 = vld [vmem:[%s936 + $0x7c] sm:$0xf]
        %v1001 = vunpack.c.l.b16 %v937
        %v1002 = vunpack.c.l.b16 %v938
        %v1003 = vunpack.c.l.b16 %v939
        %v1004 = vunpack.c.l.b16 %v940
        %v1005 = vunpack.c.l.b16 %v941
        %v1006 = vunpack.c.l.b16 %v942
        %v1007 = vunpack.c.l.b16 %v943
        %v1008 = vunpack.c.l.b16 %v944
        %v1009 = vunpack.c.l.b16 %v945
        %v1010 = vunpack.c.l.b16 %v946
        %v1011 = vunpack.c.l.b16 %v947
        %v1012 = vunpack.c.l.b16 %v948
        %v1013 = vunpack.c.l.b16 %v949
        %v1014 = vunpack.c.l.b16 %v950
        %v1015 = vunpack.c.l.b16 %v951
        %v1016 = vunpack.c.l.b16 %v952
        %v1017 = vunpack.c.l.b16 %v953
        %v1018 = vunpack.c.l.b16 %v954
        %v1019 = vunpack.c.l.b16 %v955
        %v1020 = vunpack.c.l.b16 %v956
        %v1021 = vunpack.c.l.b16 %v957
        %v1022 = vunpack.c.l.b16 %v958
        %v1023 = vunpack.c.l.b16 %v959
        %v1024 = vunpack.c.l.b16 %v960
        %v1025 = vunpack.c.l.b16 %v961
        %v1026 = vunpack.c.l.b16 %v962
        %v1027 = vunpack.c.l.b16 %v963
        %v1028 = vunpack.c.l.b16 %v964
        %v1029 = vunpack.c.l.b16 %v965
        %v1030 = vunpack.c.l.b16 %v966
        %v1031 = vunpack.c.l.b16 %v967
        %v1032 = vunpack.c.l.b16 %v968
        %v1033 = vpack.c.b16 %v1002, %v1001
        %v1034 = vpack.c.b16 %v1004, %v1003
        %v1035 = vpack.c.b16 %v1006, %v1005
        %v1036 = vpack.c.b16 %v1008, %v1007
        %v1037 = vpack.c.b16 %v1010, %v1009
        %v1038 = vpack.c.b16 %v1012, %v1011
        %v1039 = vpack.c.b16 %v1014, %v1013
        %v1040 = vpack.c.b16 %v1016, %v1015
        %v1041 = vpack.c.b16 %v1018, %v1017
        %v1042 = vpack.c.b16 %v1020, %v1019
        %v1043 = vpack.c.b16 %v1022, %v1021
        %v1044 = vpack.c.b16 %v1024, %v1023
        %v1045 = vpack.c.b16 %v1026, %v1025
        %v1046 = vpack.c.b16 %v1028, %v1027
        %v1047 = vpack.c.b16 %v1030, %v1029
        %v1048 = vpack.c.b16 %v1032, %v1031
        %v1050 = vsel %vm508, %v1033, 0
        %v1053 = vsel %vm508, %v1034, 0
        %v1056 = vsel %vm508, %v1035, 0
        %v1059 = vsel %vm508, %v1036, 0
        %v1062 = vsel %vm508, %v1037, 0
        %v1065 = vsel %vm508, %v1038, 0
        %v1068 = vsel %vm508, %v1039, 0
        %v1071 = vsel %vm508, %v1040, 0
        %v1074 = vsel %vm508, %v1041, 0
        %v1077 = vsel %vm508, %v1042, 0
        %v1080 = vsel %vm508, %v1043, 0
        %v1083 = vsel %vm508, %v1044, 0
        %v1086 = vsel %vm508, %v1045, 0
        %v1089 = vsel %vm508, %v1046, 0
        %v1092 = vsel %vm508, %v1047, 0
        %v1095 = vsel %vm508, %v1048, 0
        %1097 = vmatpush.bf16.msra.mxu0 0
        %1098 = vmatpush.bf16.msra.mxu0 0
        %1099 = vmatpush.bf16.msra.mxu0 0
        %1100 = vmatpush.bf16.msra.mxu0 0
        %1101 = vmatpush.bf16.msra.mxu0 0
        %1102 = vmatpush.bf16.msra.mxu0 0
        %1103 = vmatpush.bf16.msra.mxu0 %v505
        %1104 = vmatpush.bf16.msra.mxu0 %v504
        %1105 = vmatmul.bf16.gmra.mxu0 %v1050
        %v1106 = vpop.f32.mrf.mxu0
        %v1107 = vadd.f32 0.0, %v1106
        %v1108 = vpop.f32.mrf.mxu0
        %v1109 = vadd.f32 0.0, %v1108
        %1110 = vmatmul.bf16.gmra.mxu0 %v1053
        %v1111 = vpop.f32.mrf.mxu0
        %v1112 = vadd.f32 0.0, %v1111
        %v1113 = vpop.f32.mrf.mxu0
        %v1114 = vadd.f32 0.0, %v1113
        %1115 = vmatmul.bf16.gmra.mxu0 %v1056
        %v1116 = vpop.f32.mrf.mxu0
        %v1117 = vadd.f32 0.0, %v1116
        %v1118 = vpop.f32.mrf.mxu0
        %v1119 = vadd.f32 0.0, %v1118
        %1120 = vmatmul.bf16.gmra.mxu0 %v1059
        %v1121 = vpop.f32.mrf.mxu0
        %v1122 = vadd.f32 0.0, %v1121
        %v1123 = vpop.f32.mrf.mxu0
        %v1124 = vadd.f32 0.0, %v1123
        %1125 = vmatmul.bf16.gmra.mxu0 %v1062
        %v1126 = vpop.f32.mrf.mxu0
        %v1127 = vadd.f32 0.0, %v1126
        %v1128 = vpop.f32.mrf.mxu0
        %v1129 = vadd.f32 0.0, %v1128
        %1130 = vmatmul.bf16.gmra.mxu0 %v1065
        %v1131 = vpop.f32.mrf.mxu0
        %v1132 = vadd.f32 0.0, %v1131
        %v1133 = vpop.f32.mrf.mxu0
        %v1134 = vadd.f32 0.0, %v1133
        %1135 = vmatmul.bf16.gmra.mxu0 %v1068
        %v1136 = vpop.f32.mrf.mxu0
        %v1137 = vadd.f32 0.0, %v1136
        %v1138 = vpop.f32.mrf.mxu0
        %v1139 = vadd.f32 0.0, %v1138
        %1140 = vmatmul.bf16.gmra.mxu0 %v1071
        %v1141 = vpop.f32.mrf.mxu0
        %v1142 = vadd.f32 0.0, %v1141
        %v1143 = vpop.f32.mrf.mxu0
        %v1144 = vadd.f32 0.0, %v1143
        %1145 = vmatmul.bf16.gmra.mxu0 %v1074
        %v1146 = vpop.f32.mrf.mxu0
        %v1147 = vadd.f32 0.0, %v1146
        %v1148 = vpop.f32.mrf.mxu0
        %v1149 = vadd.f32 0.0, %v1148
        %1150 = vmatmul.bf16.gmra.mxu0 %v1077
        %v1151 = vpop.f32.mrf.mxu0
        %v1152 = vadd.f32 0.0, %v1151
        %v1153 = vpop.f32.mrf.mxu0
        %v1154 = vadd.f32 0.0, %v1153
        %1155 = vmatmul.bf16.gmra.mxu0 %v1080
        %v1156 = vpop.f32.mrf.mxu0
        %v1157 = vadd.f32 0.0, %v1156
        %v1158 = vpop.f32.mrf.mxu0
        %v1159 = vadd.f32 0.0, %v1158
        %1160 = vmatmul.bf16.gmra.mxu0 %v1083
        %v1161 = vpop.f32.mrf.mxu0
        %v1162 = vadd.f32 0.0, %v1161
        %v1163 = vpop.f32.mrf.mxu0
        %v1164 = vadd.f32 0.0, %v1163
        %1165 = vmatmul.bf16.gmra.mxu0 %v1086
        %v1166 = vpop.f32.mrf.mxu0
        %v1167 = vadd.f32 0.0, %v1166
        %v1168 = vpop.f32.mrf.mxu0
        %v1169 = vadd.f32 0.0, %v1168
        %1170 = vmatmul.bf16.gmra.mxu0 %v1089
        %v1171 = vpop.f32.mrf.mxu0
        %v1172 = vadd.f32 0.0, %v1171
        %v1173 = vpop.f32.mrf.mxu0
        %v1174 = vadd.f32 0.0, %v1173
        %1175 = vmatmul.bf16.gmra.mxu0 %v1092
        %v1176 = vpop.f32.mrf.mxu0
        %v1177 = vadd.f32 0.0, %v1176
        %v1178 = vpop.f32.mrf.mxu0
        %v1179 = vadd.f32 0.0, %v1178
        %1180 = vmatmul.bf16.gmra.mxu0 %v1095
        %v1181 = vpop.f32.mrf.mxu0
        %v1182 = vadd.f32 0.0, %v1181
        %v1183 = vpop.f32.mrf.mxu0
        %v1184 = vadd.f32 0.0, %v1183
        %1185 = vdwg.mxu0
        %v1186 = vmax.f32 %v900, %v1107
        %v1187 = vmax.f32 %v901, %v1109
        %v1188 = vmax.f32 %v902, %v1112
        %v1189 = vmax.f32 %v903, %v1114
        %v1190 = vmax.f32 %v904, %v1117
        %v1191 = vmax.f32 %v905, %v1119
        %v1192 = vmax.f32 %v906, %v1122
        %v1193 = vmax.f32 %v907, %v1124
        %v1194 = vmax.f32 %v908, %v1127
        %v1195 = vmax.f32 %v909, %v1129
        %v1196 = vmax.f32 %v910, %v1132
        %v1197 = vmax.f32 %v911, %v1134
        %v1198 = vmax.f32 %v912, %v1137
        %v1199 = vmax.f32 %v913, %v1139
        %v1200 = vmax.f32 %v914, %v1142
        %v1201 = vmax.f32 %v915, %v1144
        %v1202 = vmax.f32 %v916, %v1147
        %v1203 = vmax.f32 %v917, %v1149
        %v1204 = vmax.f32 %v918, %v1152
        %v1205 = vmax.f32 %v919, %v1154
        %v1206 = vmax.f32 %v920, %v1157
        %v1207 = vmax.f32 %v921, %v1159
        %v1208 = vmax.f32 %v922, %v1162
        %v1209 = vmax.f32 %v923, %v1164
        %v1210 = vmax.f32 %v924, %v1167
        %v1211 = vmax.f32 %v925, %v1169
        %v1212 = vmax.f32 %v926, %v1172
        %v1213 = vmax.f32 %v927, %v1174
        %v1214 = vmax.f32 %v928, %v1177
        %v1215 = vmax.f32 %v929, %v1179
        %v1216 = vmax.f32 %v930, %v1182
        %v1217 = vmax.f32 %v931, %v1184
        %s1218 = sadd.s32 %s379, 768
        %s1219 = sshra.s32 %s1218, 3
        %s1220 = sand.u32 %s1218, 7
        %s1221 = smul.addr %s1219, 4
        %s1222 = scalar_lea.vmem %s354, %s1221
        %v1223 = vld [vmem:[%s1222] sm:$0xf]
        %v1224 = vld [vmem:[%s1222 + $0x4] sm:$0xf]
        %v1225 = vld [vmem:[%s1222 + $0x8] sm:$0xf]
        %v1226 = vld [vmem:[%s1222 + $0xc] sm:$0xf]
        %v1227 = vld [vmem:[%s1222 + $0x10] sm:$0xf]
        %v1228 = vld [vmem:[%s1222 + $0x14] sm:$0xf]
        %v1229 = vld [vmem:[%s1222 + $0x18] sm:$0xf]
        %v1230 = vld [vmem:[%s1222 + $0x1c] sm:$0xf]
        %v1231 = vld [vmem:[%s1222 + $0x20] sm:$0xf]
        %v1232 = vld [vmem:[%s1222 + $0x24] sm:$0xf]
        %v1233 = vld [vmem:[%s1222 + $0x28] sm:$0xf]
        %v1234 = vld [vmem:[%s1222 + $0x2c] sm:$0xf]
        %v1235 = vld [vmem:[%s1222 + $0x30] sm:$0xf]
        %v1236 = vld [vmem:[%s1222 + $0x34] sm:$0xf]
        %v1237 = vld [vmem:[%s1222 + $0x38] sm:$0xf]
        %v1238 = vld [vmem:[%s1222 + $0x3c] sm:$0xf]
        %v1239 = vld [vmem:[%s1222 + $0x40] sm:$0xf]
        %v1240 = vld [vmem:[%s1222 + $0x44] sm:$0xf]
        %v1241 = vld [vmem:[%s1222 + $0x48] sm:$0xf]
        %v1242 = vld [vmem:[%s1222 + $0x4c] sm:$0xf]
        %v1243 = vld [vmem:[%s1222 + $0x50] sm:$0xf]
        %v1244 = vld [vmem:[%s1222 + $0x54] sm:$0xf]
        %v1245 = vld [vmem:[%s1222 + $0x58] sm:$0xf]
        %v1246 = vld [vmem:[%s1222 + $0x5c] sm:$0xf]
        %v1247 = vld [vmem:[%s1222 + $0x60] sm:$0xf]
        %v1248 = vld [vmem:[%s1222 + $0x64] sm:$0xf]
        %v1249 = vld [vmem:[%s1222 + $0x68] sm:$0xf]
        %v1250 = vld [vmem:[%s1222 + $0x6c] sm:$0xf]
        %v1251 = vld [vmem:[%s1222 + $0x70] sm:$0xf]
        %v1252 = vld [vmem:[%s1222 + $0x74] sm:$0xf]
        %v1253 = vld [vmem:[%s1222 + $0x78] sm:$0xf]
        %v1254 = vld [vmem:[%s1222 + $0x7c] sm:$0xf]
        %v1287 = vunpack.c.l.b16 %v1223
        %v1288 = vunpack.c.l.b16 %v1224
        %v1289 = vunpack.c.l.b16 %v1225
        %v1290 = vunpack.c.l.b16 %v1226
        %v1291 = vunpack.c.l.b16 %v1227
        %v1292 = vunpack.c.l.b16 %v1228
        %v1293 = vunpack.c.l.b16 %v1229
        %v1294 = vunpack.c.l.b16 %v1230
        %v1295 = vunpack.c.l.b16 %v1231
        %v1296 = vunpack.c.l.b16 %v1232
        %v1297 = vunpack.c.l.b16 %v1233
        %v1298 = vunpack.c.l.b16 %v1234
        %v1299 = vunpack.c.l.b16 %v1235
        %v1300 = vunpack.c.l.b16 %v1236
        %v1301 = vunpack.c.l.b16 %v1237
        %v1302 = vunpack.c.l.b16 %v1238
        %v1303 = vunpack.c.l.b16 %v1239
        %v1304 = vunpack.c.l.b16 %v1240
        %v1305 = vunpack.c.l.b16 %v1241
        %v1306 = vunpack.c.l.b16 %v1242
        %v1307 = vunpack.c.l.b16 %v1243
        %v1308 = vunpack.c.l.b16 %v1244
        %v1309 = vunpack.c.l.b16 %v1245
        %v1310 = vunpack.c.l.b16 %v1246
        %v1311 = vunpack.c.l.b16 %v1247
        %v1312 = vunpack.c.l.b16 %v1248
        %v1313 = vunpack.c.l.b16 %v1249
        %v1314 = vunpack.c.l.b16 %v1250
        %v1315 = vunpack.c.l.b16 %v1251
        %v1316 = vunpack.c.l.b16 %v1252
        %v1317 = vunpack.c.l.b16 %v1253
        %v1318 = vunpack.c.l.b16 %v1254
        %v1319 = vpack.c.b16 %v1288, %v1287
        %v1320 = vpack.c.b16 %v1290, %v1289
        %v1321 = vpack.c.b16 %v1292, %v1291
        %v1322 = vpack.c.b16 %v1294, %v1293
        %v1323 = vpack.c.b16 %v1296, %v1295
        %v1324 = vpack.c.b16 %v1298, %v1297
        %v1325 = vpack.c.b16 %v1300, %v1299
        %v1326 = vpack.c.b16 %v1302, %v1301
        %v1327 = vpack.c.b16 %v1304, %v1303
        %v1328 = vpack.c.b16 %v1306, %v1305
        %v1329 = vpack.c.b16 %v1308, %v1307
        %v1330 = vpack.c.b16 %v1310, %v1309
        %v1331 = vpack.c.b16 %v1312, %v1311
        %v1332 = vpack.c.b16 %v1314, %v1313
        %v1333 = vpack.c.b16 %v1316, %v1315
        %v1334 = vpack.c.b16 %v1318, %v1317
        %v1336 = vsel %vm508, %v1319, 0
        %v1339 = vsel %vm508, %v1320, 0
        %v1342 = vsel %vm508, %v1321, 0
        %v1345 = vsel %vm508, %v1322, 0
        %v1348 = vsel %vm508, %v1323, 0
        %v1351 = vsel %vm508, %v1324, 0
        %v1354 = vsel %vm508, %v1325, 0
        %v1357 = vsel %vm508, %v1326, 0
        %v1360 = vsel %vm508, %v1327, 0
        %v1363 = vsel %vm508, %v1328, 0
        %v1366 = vsel %vm508, %v1329, 0
        %v1369 = vsel %vm508, %v1330, 0
        %v1372 = vsel %vm508, %v1331, 0
        %v1375 = vsel %vm508, %v1332, 0
        %v1378 = vsel %vm508, %v1333, 0
        %v1381 = vsel %vm508, %v1334, 0
        %1383 = vmatpush.bf16.msra.mxu0 0
        %1384 = vmatpush.bf16.msra.mxu0 0
        %1385 = vmatpush.bf16.msra.mxu0 0
        %1386 = vmatpush.bf16.msra.mxu0 0
        %1387 = vmatpush.bf16.msra.mxu0 0
        %1388 = vmatpush.bf16.msra.mxu0 0
        %1389 = vmatpush.bf16.msra.mxu0 %v505
        %1390 = vmatpush.bf16.msra.mxu0 %v504
        %1391 = vmatmul.bf16.gmra.mxu0 %v1336
        %v1392 = vpop.f32.mrf.mxu0
        %v1393 = vadd.f32 0.0, %v1392
        %v1394 = vpop.f32.mrf.mxu0
        %v1395 = vadd.f32 0.0, %v1394
        %1396 = vmatmul.bf16.gmra.mxu0 %v1339
        %v1397 = vpop.f32.mrf.mxu0
        %v1398 = vadd.f32 0.0, %v1397
        %v1399 = vpop.f32.mrf.mxu0
        %v1400 = vadd.f32 0.0, %v1399
        %1401 = vmatmul.bf16.gmra.mxu0 %v1342
        %v1402 = vpop.f32.mrf.mxu0
        %v1403 = vadd.f32 0.0, %v1402
        %v1404 = vpop.f32.mrf.mxu0
        %v1405 = vadd.f32 0.0, %v1404
        %1406 = vmatmul.bf16.gmra.mxu0 %v1345
        %v1407 = vpop.f32.mrf.mxu0
        %v1408 = vadd.f32 0.0, %v1407
        %v1409 = vpop.f32.mrf.mxu0
        %v1410 = vadd.f32 0.0, %v1409
        %1411 = vmatmul.bf16.gmra.mxu0 %v1348
        %v1412 = vpop.f32.mrf.mxu0
        %v1413 = vadd.f32 0.0, %v1412
        %v1414 = vpop.f32.mrf.mxu0
        %v1415 = vadd.f32 0.0, %v1414
        %1416 = vmatmul.bf16.gmra.mxu0 %v1351
        %v1417 = vpop.f32.mrf.mxu0
        %v1418 = vadd.f32 0.0, %v1417
        %v1419 = vpop.f32.mrf.mxu0
        %v1420 = vadd.f32 0.0, %v1419
        %1421 = vmatmul.bf16.gmra.mxu0 %v1354
        %v1422 = vpop.f32.mrf.mxu0
        %v1423 = vadd.f32 0.0, %v1422
        %v1424 = vpop.f32.mrf.mxu0
        %v1425 = vadd.f32 0.0, %v1424
        %1426 = vmatmul.bf16.gmra.mxu0 %v1357
        %v1427 = vpop.f32.mrf.mxu0
        %v1428 = vadd.f32 0.0, %v1427
        %v1429 = vpop.f32.mrf.mxu0
        %v1430 = vadd.f32 0.0, %v1429
        %1431 = vmatmul.bf16.gmra.mxu0 %v1360
        %v1432 = vpop.f32.mrf.mxu0
        %v1433 = vadd.f32 0.0, %v1432
        %v1434 = vpop.f32.mrf.mxu0
        %v1435 = vadd.f32 0.0, %v1434
        %1436 = vmatmul.bf16.gmra.mxu0 %v1363
        %v1437 = vpop.f32.mrf.mxu0
        %v1438 = vadd.f32 0.0, %v1437
        %v1439 = vpop.f32.mrf.mxu0
        %v1440 = vadd.f32 0.0, %v1439
        %1441 = vmatmul.bf16.gmra.mxu0 %v1366
        %v1442 = vpop.f32.mrf.mxu0
        %v1443 = vadd.f32 0.0, %v1442
        %v1444 = vpop.f32.mrf.mxu0
        %v1445 = vadd.f32 0.0, %v1444
        %1446 = vmatmul.bf16.gmra.mxu0 %v1369
        %v1447 = vpop.f32.mrf.mxu0
        %v1448 = vadd.f32 0.0, %v1447
        %v1449 = vpop.f32.mrf.mxu0
        %v1450 = vadd.f32 0.0, %v1449
        %1451 = vmatmul.bf16.gmra.mxu0 %v1372
        %v1452 = vpop.f32.mrf.mxu0
        %v1453 = vadd.f32 0.0, %v1452
        %v1454 = vpop.f32.mrf.mxu0
        %v1455 = vadd.f32 0.0, %v1454
        %1456 = vmatmul.bf16.gmra.mxu0 %v1375
        %v1457 = vpop.f32.mrf.mxu0
        %v1458 = vadd.f32 0.0, %v1457
        %v1459 = vpop.f32.mrf.mxu0
        %v1460 = vadd.f32 0.0, %v1459
        %1461 = vmatmul.bf16.gmra.mxu0 %v1378
        %v1462 = vpop.f32.mrf.mxu0
        %v1463 = vadd.f32 0.0, %v1462
        %v1464 = vpop.f32.mrf.mxu0
        %v1465 = vadd.f32 0.0, %v1464
        %1466 = vmatmul.bf16.gmra.mxu0 %v1381
        %v1467 = vpop.f32.mrf.mxu0
        %v1468 = vadd.f32 0.0, %v1467
        %v1469 = vpop.f32.mrf.mxu0
        %v1470 = vadd.f32 0.0, %v1469
        %1471 = vdwg.mxu0
        %v1472 = vmax.f32 %v1186, %v1393
        %v1473 = vmax.f32 %v1187, %v1395
        %v1474 = vmax.f32 %v1188, %v1398
        %v1475 = vmax.f32 %v1189, %v1400
        %v1476 = vmax.f32 %v1190, %v1403
        %v1477 = vmax.f32 %v1191, %v1405
        %v1478 = vmax.f32 %v1192, %v1408
        %v1479 = vmax.f32 %v1193, %v1410
        %v1480 = vmax.f32 %v1194, %v1413
        %v1481 = vmax.f32 %v1195, %v1415
        %v1482 = vmax.f32 %v1196, %v1418
        %v1483 = vmax.f32 %v1197, %v1420
        %v1484 = vmax.f32 %v1198, %v1423
        %v1485 = vmax.f32 %v1199, %v1425
        %v1486 = vmax.f32 %v1200, %v1428
        %v1487 = vmax.f32 %v1201, %v1430
        %v1488 = vmax.f32 %v1202, %v1433
        %v1489 = vmax.f32 %v1203, %v1435
        %v1490 = vmax.f32 %v1204, %v1438
        %v1491 = vmax.f32 %v1205, %v1440
        %v1492 = vmax.f32 %v1206, %v1443
        %v1493 = vmax.f32 %v1207, %v1445
        %v1494 = vmax.f32 %v1208, %v1448
        %v1495 = vmax.f32 %v1209, %v1450
        %v1496 = vmax.f32 %v1210, %v1453
        %v1497 = vmax.f32 %v1211, %v1455
        %v1498 = vmax.f32 %v1212, %v1458
        %v1499 = vmax.f32 %v1213, %v1460
        %v1500 = vmax.f32 %v1214, %v1463
        %v1501 = vmax.f32 %v1215, %v1465
        %v1502 = vmax.f32 %v1216, %v1468
        %v1503 = vmax.f32 %v1217, %v1470
        %v1505 = vperm.slane %v367, 0
        %v1507 = vadd.f32 %v1472, %v1505
        %v1508 = vadd.f32 %v1473, %v1505
        %v1509 = vadd.f32 %v1474, %v1505
        %v1510 = vadd.f32 %v1475, %v1505
        %v1511 = vadd.f32 %v1476, %v1505
        %v1512 = vadd.f32 %v1477, %v1505
        %v1513 = vadd.f32 %v1478, %v1505
        %v1514 = vadd.f32 %v1479, %v1505
        %v1515 = vadd.f32 %v1480, %v1505
        %v1516 = vadd.f32 %v1481, %v1505
        %v1517 = vadd.f32 %v1482, %v1505
        %v1518 = vadd.f32 %v1483, %v1505
        %v1519 = vadd.f32 %v1484, %v1505
        %v1520 = vadd.f32 %v1485, %v1505
        %v1521 = vadd.f32 %v1486, %v1505
        %v1522 = vadd.f32 %v1487, %v1505
        %v1523 = vadd.f32 %v1488, %v1505
        %v1524 = vadd.f32 %v1489, %v1505
        %v1525 = vadd.f32 %v1490, %v1505
        %v1526 = vadd.f32 %v1491, %v1505
        %v1527 = vadd.f32 %v1492, %v1505
        %v1528 = vadd.f32 %v1493, %v1505
        %v1529 = vadd.f32 %v1494, %v1505
        %v1530 = vadd.f32 %v1495, %v1505
        %v1531 = vadd.f32 %v1496, %v1505
        %v1532 = vadd.f32 %v1497, %v1505
        %v1533 = vadd.f32 %v1498, %v1505
        %v1534 = vadd.f32 %v1499, %v1505
        %v1535 = vadd.f32 %v1500, %v1505
        %v1536 = vadd.f32 %v1501, %v1505
        %v1537 = vadd.f32 %v1502, %v1505
        %v1538 = vadd.f32 %v1503, %v1505
        %v1539 = vpack.c.bf16 %v1507, %v1507
        %v1540 = vpack.c.bf16 %v1508, %v1508
        %v1541 = vpack.c.bf16 %v1509, %v1509
        %v1542 = vpack.c.bf16 %v1510, %v1510
        %v1543 = vpack.c.bf16 %v1511, %v1511
        %v1544 = vpack.c.bf16 %v1512, %v1512
        %v1545 = vpack.c.bf16 %v1513, %v1513
        %v1546 = vpack.c.bf16 %v1514, %v1514
        %v1547 = vpack.c.bf16 %v1515, %v1515
        %v1548 = vpack.c.bf16 %v1516, %v1516
        %v1549 = vpack.c.bf16 %v1517, %v1517
        %v1550 = vpack.c.bf16 %v1518, %v1518
        %v1551 = vpack.c.bf16 %v1519, %v1519
        %v1552 = vpack.c.bf16 %v1520, %v1520
        %v1553 = vpack.c.bf16 %v1521, %v1521
        %v1554 = vpack.c.bf16 %v1522, %v1522
        %v1555 = vpack.c.bf16 %v1523, %v1523
        %v1556 = vpack.c.bf16 %v1524, %v1524
        %v1557 = vpack.c.bf16 %v1525, %v1525
        %v1558 = vpack.c.bf16 %v1526, %v1526
        %v1559 = vpack.c.bf16 %v1527, %v1527
        %v1560 = vpack.c.bf16 %v1528, %v1528
        %v1561 = vpack.c.bf16 %v1529, %v1529
        %v1562 = vpack.c.bf16 %v1530, %v1530
        %v1563 = vpack.c.bf16 %v1531, %v1531
        %v1564 = vpack.c.bf16 %v1532, %v1532
        %v1565 = vpack.c.bf16 %v1533, %v1533
        %v1566 = vpack.c.bf16 %v1534, %v1534
        %v1567 = vpack.c.bf16 %v1535, %v1535
        %v1568 = vpack.c.bf16 %v1536, %v1536
        %v1569 = vpack.c.bf16 %v1537, %v1537
        %v1570 = vpack.c.bf16 %v1538, %v1538
        %vm1571 = vcmask 257024
        %1572 = vst.msk [vmem:[#allocation2] sm:$0xf] %vm1571, %v1539
        %1573 = vst.msk [vmem:[#allocation2 + $0x4] sm:$0xf] %vm1571, %v1540
        %1574 = vst.msk [vmem:[#allocation2 + $0x8] sm:$0xf] %vm1571, %v1541
        %1575 = vst.msk [vmem:[#allocation2 + $0xc] sm:$0xf] %vm1571, %v1542
        %1576 = vst.msk [vmem:[#allocation2 + $0x10] sm:$0xf] %vm1571, %v1543
        %1577 = vst.msk [vmem:[#allocation2 + $0x14] sm:$0xf] %vm1571, %v1544
        %1578 = vst.msk [vmem:[#allocation2 + $0x18] sm:$0xf] %vm1571, %v1545
        %1579 = vst.msk [vmem:[#allocation2 + $0x1c] sm:$0xf] %vm1571, %v1546
        %1580 = vst.msk [vmem:[#allocation2 + $0x20] sm:$0xf] %vm1571, %v1547
        %1581 = vst.msk [vmem:[#allocation2 + $0x24] sm:$0xf] %vm1571, %v1548
        %1582 = vst.msk [vmem:[#allocation2 + $0x28] sm:$0xf] %vm1571, %v1549
        %1583 = vst.msk [vmem:[#allocation2 + $0x2c] sm:$0xf] %vm1571, %v1550
        %1584 = vst.msk [vmem:[#allocation2 + $0x30] sm:$0xf] %vm1571, %v1551
        %1585 = vst.msk [vmem:[#allocation2 + $0x34] sm:$0xf] %vm1571, %v1552
        %1586 = vst.msk [vmem:[#allocation2 + $0x38] sm:$0xf] %vm1571, %v1553
        %1587 = vst.msk [vmem:[#allocation2 + $0x3c] sm:$0xf] %vm1571, %v1554
        %1588 = vst.msk [vmem:[#allocation2 + $0x40] sm:$0xf] %vm1571, %v1555
        %1589 = vst.msk [vmem:[#allocation2 + $0x44] sm:$0xf] %vm1571, %v1556
        %1590 = vst.msk [vmem:[#allocation2 + $0x48] sm:$0xf] %vm1571, %v1557
        %1591 = vst.msk [vmem:[#allocation2 + $0x4c] sm:$0xf] %vm1571, %v1558
        %1592 = vst.msk [vmem:[#allocation2 + $0x50] sm:$0xf] %vm1571, %v1559
        %1593 = vst.msk [vmem:[#allocation2 + $0x54] sm:$0xf] %vm1571, %v1560
        %1594 = vst.msk [vmem:[#allocation2 + $0x58] sm:$0xf] %vm1571, %v1561
        %1595 = vst.msk [vmem:[#allocation2 + $0x5c] sm:$0xf] %vm1571, %v1562
        %1596 = vst.msk [vmem:[#allocation2 + $0x60] sm:$0xf] %vm1571, %v1563
        %1597 = vst.msk [vmem:[#allocation2 + $0x64] sm:$0xf] %vm1571, %v1564
        %1598 = vst.msk [vmem:[#allocation2 + $0x68] sm:$0xf] %vm1571, %v1565
        %1599 = vst.msk [vmem:[#allocation2 + $0x6c] sm:$0xf] %vm1571, %v1566
        %1600 = vst.msk [vmem:[#allocation2 + $0x70] sm:$0xf] %vm1571, %v1567
        %1601 = vst.msk [vmem:[#allocation2 + $0x74] sm:$0xf] %vm1571, %v1568
        %1602 = vst.msk [vmem:[#allocation2 + $0x78] sm:$0xf] %vm1571, %v1569
        %1603 = vst.msk [vmem:[#allocation2 + $0x7c] sm:$0xf] %vm1571, %v1570
        %v1604 = vld [vmem:[#allocation2] sm:$0xf]
        %v1605 = vld [vmem:[#allocation2 + $0x4] sm:$0xf]
        %v1606 = vld [vmem:[#allocation2 + $0x8] sm:$0xf]
        %v1607 = vld [vmem:[#allocation2 + $0xc] sm:$0xf]
        %v1608 = vld [vmem:[#allocation2 + $0x10] sm:$0xf]
        %v1609 = vld [vmem:[#allocation2 + $0x14] sm:$0xf]
        %v1610 = vld [vmem:[#allocation2 + $0x18] sm:$0xf]
        %v1611 = vld [vmem:[#allocation2 + $0x1c] sm:$0xf]
        %v1612 = vld [vmem:[#allocation2 + $0x20] sm:$0xf]
        %v1613 = vld [vmem:[#allocation2 + $0x24] sm:$0xf]
        %v1614 = vld [vmem:[#allocation2 + $0x28] sm:$0xf]
        %v1615 = vld [vmem:[#allocation2 + $0x2c] sm:$0xf]
        %v1616 = vld [vmem:[#allocation2 + $0x30] sm:$0xf]
        %v1617 = vld [vmem:[#allocation2 + $0x34] sm:$0xf]
        %v1618 = vld [vmem:[#allocation2 + $0x38] sm:$0xf]
        %v1619 = vld [vmem:[#allocation2 + $0x3c] sm:$0xf]
        %v1620 = vld [vmem:[#allocation2 + $0x40] sm:$0xf]
        %v1621 = vld [vmem:[#allocation2 + $0x44] sm:$0xf]
        %v1622 = vld [vmem:[#allocation2 + $0x48] sm:$0xf]
        %v1623 = vld [vmem:[#allocation2 + $0x4c] sm:$0xf]
        %v1624 = vld [vmem:[#allocation2 + $0x50] sm:$0xf]
        %v1625 = vld [vmem:[#allocation2 + $0x54] sm:$0xf]
        %v1626 = vld [vmem:[#allocation2 + $0x58] sm:$0xf]
        %v1627 = vld [vmem:[#allocation2 + $0x5c] sm:$0xf]
        %v1628 = vld [vmem:[#allocation2 + $0x60] sm:$0xf]
        %v1629 = vld [vmem:[#allocation2 + $0x64] sm:$0xf]
        %v1630 = vld [vmem:[#allocation2 + $0x68] sm:$0xf]
        %v1631 = vld [vmem:[#allocation2 + $0x6c] sm:$0xf]
        %1632 = vst.msk [vmem:[#allocation3] sm:$0xf] %vm1571, %v1604
        %1633 = vst.msk [vmem:[#allocation3 + $0x8] sm:$0xf] %vm1571, %v1605
        %1634 = vst.msk [vmem:[#allocation3 + $0x10] sm:$0xf] %vm1571, %v1606
        %1635 = vst.msk [vmem:[#allocation3 + $0x18] sm:$0xf] %vm1571, %v1607
        %1636 = vst.msk [vmem:[#allocation3 + $0x20] sm:$0xf] %vm1571, %v1608
        %1637 = vst.msk [vmem:[#allocation3 + $0x28] sm:$0xf] %vm1571, %v1609
        %1638 = vst.msk [vmem:[#allocation3 + $0x30] sm:$0xf] %vm1571, %v1610
        %1639 = vst.msk [vmem:[#allocation3 + $0x38] sm:$0xf] %vm1571, %v1611
        %1640 = vst.msk [vmem:[#allocation3 + $0x40] sm:$0xf] %vm1571, %v1612
        %1641 = vst.msk [vmem:[#allocation3 + $0x48] sm:$0xf] %vm1571, %v1613
        %1642 = vst.msk [vmem:[#allocation3 + $0x50] sm:$0xf] %vm1571, %v1614
        %1643 = vst.msk [vmem:[#allocation3 + $0x58] sm:$0xf] %vm1571, %v1615
        %1644 = vst.msk [vmem:[#allocation3 + $0x60] sm:$0xf] %vm1571, %v1616
        %1645 = vst.msk [vmem:[#allocation3 + $0x68] sm:$0xf] %vm1571, %v1617
        %1646 = vst.msk [vmem:[#allocation3 + $0x70] sm:$0xf] %vm1571, %v1618
        %1647 = vst.msk [vmem:[#allocation3 + $0x78] sm:$0xf] %vm1571, %v1619
        %1648 = vst.msk [vmem:[#allocation3 + $0x80] sm:$0xf] %vm1571, %v1620
        %1649 = vst.msk [vmem:[#allocation3 + $0x88] sm:$0xf] %vm1571, %v1621
        %1650 = vst.msk [vmem:[#allocation3 + $0x90] sm:$0xf] %vm1571, %v1622
        %1651 = vst.msk [vmem:[#allocation3 + $0x98] sm:$0xf] %vm1571, %v1623
        %1652 = vst.msk [vmem:[#allocation3 + $0xa0] sm:$0xf] %vm1571, %v1624
        %1653 = vst.msk [vmem:[#allocation3 + $0xa8] sm:$0xf] %vm1571, %v1625
        %1654 = vst.msk [vmem:[#allocation3 + $0xb0] sm:$0xf] %vm1571, %v1626
        %1655 = vst.msk [vmem:[#allocation3 + $0xb8] sm:$0xf] %vm1571, %v1627
        %1656 = vst.msk [vmem:[#allocation3 + $0xc0] sm:$0xf] %vm1571, %v1628
        %1657 = vst.msk [vmem:[#allocation3 + $0xc8] sm:$0xf] %vm1571, %v1629
        %1658 = vst.msk [vmem:[#allocation3 + $0xd0] sm:$0xf] %vm1571, %v1630
        %1659 = vst.msk [vmem:[#allocation3 + $0xd8] sm:$0xf] %vm1571, %v1631
        %v1660 = vld [vmem:[#allocation2] sm:$0xf]
        %v1661 = vld [vmem:[#allocation2 + $0x4] sm:$0xf]
        %v1662 = vld [vmem:[#allocation2 + $0x8] sm:$0xf]
        %v1663 = vld [vmem:[#allocation2 + $0xc] sm:$0xf]
        %v1664 = vld [vmem:[#allocation2 + $0x10] sm:$0xf]
        %v1665 = vld [vmem:[#allocation2 + $0x14] sm:$0xf]
        %v1666 = vld [vmem:[#allocation2 + $0x18] sm:$0xf]
        %v1667 = vld [vmem:[#allocation2 + $0x1c] sm:$0xf]
        %v1668 = vld [vmem:[#allocation2 + $0x20] sm:$0xf]
        %v1669 = vld [vmem:[#allocation2 + $0x24] sm:$0xf]
        %v1670 = vld [vmem:[#allocation2 + $0x28] sm:$0xf]
        %v1671 = vld [vmem:[#allocation2 + $0x2c] sm:$0xf]
        %v1672 = vld [vmem:[#allocation2 + $0x30] sm:$0xf]
        %v1673 = vld [vmem:[#allocation2 + $0x34] sm:$0xf]
        %v1674 = vld [vmem:[#allocation2 + $0x38] sm:$0xf]
        %v1675 = vld [vmem:[#allocation2 + $0x3c] sm:$0xf]
        %v1676 = vld [vmem:[#allocation2 + $0x40] sm:$0xf]
        %v1677 = vld [vmem:[#allocation2 + $0x44] sm:$0xf]
        %v1678 = vld [vmem:[#allocation2 + $0x48] sm:$0xf]
        %v1679 = vld [vmem:[#allocation2 + $0x4c] sm:$0xf]
        %v1680 = vld [vmem:[#allocation2 + $0x50] sm:$0xf]
        %v1681 = vld [vmem:[#allocation2 + $0x54] sm:$0xf]
        %v1682 = vld [vmem:[#allocation2 + $0x58] sm:$0xf]
        %v1683 = vld [vmem:[#allocation2 + $0x5c] sm:$0xf]
        %v1684 = vld [vmem:[#allocation2 + $0x60] sm:$0xf]
        %v1685 = vld [vmem:[#allocation2 + $0x64] sm:$0xf]
        %v1686 = vld [vmem:[#allocation2 + $0x68] sm:$0xf]
        %v1687 = vld [vmem:[#allocation2 + $0x6c] sm:$0xf]
        %v1688 = vld [vmem:[#allocation2 + $0x70] sm:$0x1]
        %vm1689 = vsmask.f32 3328
        %vm1690 = vsmask.f32 7440
        %vm1691 = vmor %vm1689, %vm1690
        %v1693 = vshrl.u32 %v1660, 16
        %v1695 = vrot.slane %v1693, 4
        %v1696 = vshll.u32 %v1660, 16
        %v1698 = vrot.slane %v1696, 5
        %v1699 = vor.u32 %v1695, %v1698
        %v1700 = vrot.slane %v1699, 4
        %v1702 = vshll.u32 %v1661, 16
        %v1704 = vrot.slane %v1702, 5
        %v1705 = vsel %vm1691, %v1700, %v1704
        %v1706 = vshrl.u32 %v1661, 16
        %v1708 = vrot.slane %v1706, 4
        %v1709 = vor.u32 %v1708, %v1704
        %v1710 = vrot.slane %v1709, 4
        %v1712 = vshll.u32 %v1662, 16
        %v1714 = vrot.slane %v1712, 5
        %v1715 = vsel %vm1691, %v1710, %v1714
        %v1716 = vshrl.u32 %v1662, 16
        %v1718 = vrot.slane %v1716, 4
        %v1719 = vor.u32 %v1718, %v1714
        %v1720 = vrot.slane %v1719, 4
        %v1722 = vshll.u32 %v1663, 16
        %v1724 = vrot.slane %v1722, 5
        %v1725 = vsel %vm1691, %v1720, %v1724
        %v1726 = vshrl.u32 %v1663, 16
        %v1728 = vrot.slane %v1726, 4
        %v1729 = vor.u32 %v1728, %v1724
        %v1730 = vrot.slane %v1729, 4
        %v1732 = vshll.u32 %v1664, 16
        %v1734 = vrot.slane %v1732, 5
        %v1735 = vsel %vm1691, %v1730, %v1734
        %v1736 = vshrl.u32 %v1664, 16
        %v1738 = vrot.slane %v1736, 4
        %v1739 = vor.u32 %v1738, %v1734
        %v1740 = vrot.slane %v1739, 4
        %v1742 = vshll.u32 %v1665, 16
        %v1744 = vrot.slane %v1742, 5
        %v1745 = vsel %vm1691, %v1740, %v1744
        %v1746 = vshrl.u32 %v1665, 16
        %v1748 = vrot.slane %v1746, 4
        %v1749 = vor.u32 %v1748, %v1744
        %v1750 = vrot.slane %v1749, 4
        %v1752 = vshll.u32 %v1666, 16
        %v1754 = vrot.slane %v1752, 5
        %v1755 = vsel %vm1691, %v1750, %v1754
        %v1756 = vshrl.u32 %v1666, 16
        %v1758 = vrot.slane %v1756, 4
        %v1759 = vor.u32 %v1758, %v1754
        %v1760 = vrot.slane %v1759, 4
        %v1762 = vshll.u32 %v1667, 16
        %v1764 = vrot.slane %v1762, 5
        %v1765 = vsel %vm1691, %v1760, %v1764
        %v1766 = vshrl.u32 %v1667, 16
        %v1768 = vrot.slane %v1766, 4
        %v1769 = vor.u32 %v1768, %v1764
        %v1770 = vrot.slane %v1769, 4
        %v1772 = vshll.u32 %v1668, 16
        %v1774 = vrot.slane %v1772, 5
        %v1775 = vsel %vm1691, %v1770, %v1774
        %v1776 = vshrl.u32 %v1668, 16
        %v1778 = vrot.slane %v1776, 4
        %v1779 = vor.u32 %v1778, %v1774
        %v1780 = vrot.slane %v1779, 4
        %v1782 = vshll.u32 %v1669, 16
        %v1784 = vrot.slane %v1782, 5
        %v1785 = vsel %vm1691, %v1780, %v1784
        %v1786 = vshrl.u32 %v1669, 16
        %v1788 = vrot.slane %v1786, 4
        %v1789 = vor.u32 %v1788, %v1784
        %v1790 = vrot.slane %v1789, 4
        %v1792 = vshll.u32 %v1670, 16
        %v1794 = vrot.slane %v1792, 5
        %v1795 = vsel %vm1691, %v1790, %v1794
        %v1796 = vshrl.u32 %v1670, 16
        %v1798 = vrot.slane %v1796, 4
        %v1799 = vor.u32 %v1798, %v1794
        %v1800 = vrot.slane %v1799, 4
        %v1802 = vshll.u32 %v1671, 16
        %v1804 = vrot.slane %v1802, 5
        %v1805 = vsel %vm1691, %v1800, %v1804
        %v1806 = vshrl.u32 %v1671, 16
        %v1808 = vrot.slane %v1806, 4
        %v1809 = vor.u32 %v1808, %v1804
        %v1810 = vrot.slane %v1809, 4
        %v1812 = vshll.u32 %v1672, 16
        %v1814 = vrot.slane %v1812, 5
        %v1815 = vsel %vm1691, %v1810, %v1814
        %v1816 = vshrl.u32 %v1672, 16
        %v1818 = vrot.slane %v1816, 4
        %v1819 = vor.u32 %v1818, %v1814
        %v1820 = vrot.slane %v1819, 4
        %v1822 = vshll.u32 %v1673, 16
        %v1824 = vrot.slane %v1822, 5
        %v1825 = vsel %vm1691, %v1820, %v1824
        %v1826 = vshrl.u32 %v1673, 16
        %v1828 = vrot.slane %v1826, 4
        %v1829 = vor.u32 %v1828, %v1824
        %v1830 = vrot.slane %v1829, 4
        %v1832 = vshll.u32 %v1674, 16
        %v1834 = vrot.slane %v1832, 5
        %v1835 = vsel %vm1691, %v1830, %v1834
        %v1836 = vshrl.u32 %v1674, 16
        %v1838 = vrot.slane %v1836, 4
        %v1839 = vor.u32 %v1838, %v1834
        %v1840 = vrot.slane %v1839, 4
        %v1842 = vshll.u32 %v1675, 16
        %v1844 = vrot.slane %v1842, 5
        %v1845 = vsel %vm1691, %v1840, %v1844
        %v1846 = vshrl.u32 %v1675, 16
        %v1848 = vrot.slane %v1846, 4
        %v1849 = vor.u32 %v1848, %v1844
        %v1850 = vrot.slane %v1849, 4
        %v1852 = vshll.u32 %v1676, 16
        %v1854 = vrot.slane %v1852, 5
        %v1855 = vsel %vm1691, %v1850, %v1854
        %v1856 = vshrl.u32 %v1676, 16
        %v1858 = vrot.slane %v1856, 4
        %v1859 = vor.u32 %v1858, %v1854
        %v1860 = vrot.slane %v1859, 4
        %v1862 = vshll.u32 %v1677, 16
        %v1864 = vrot.slane %v1862, 5
        %v1865 = vsel %vm1691, %v1860, %v1864
        %v1866 = vshrl.u32 %v1677, 16
        %v1868 = vrot.slane %v1866, 4
        %v1869 = vor.u32 %v1868, %v1864
        %v1870 = vrot.slane %v1869, 4
        %v1872 = vshll.u32 %v1678, 16
        %v1874 = vrot.slane %v1872, 5
        %v1875 = vsel %vm1691, %v1870, %v1874
        %v1876 = vshrl.u32 %v1678, 16
        %v1878 = vrot.slane %v1876, 4
        %v1879 = vor.u32 %v1878, %v1874
        %v1880 = vrot.slane %v1879, 4
        %v1882 = vshll.u32 %v1679, 16
        %v1884 = vrot.slane %v1882, 5
        %v1885 = vsel %vm1691, %v1880, %v1884
        %v1886 = vshrl.u32 %v1679, 16
        %v1888 = vrot.slane %v1886, 4
        %v1889 = vor.u32 %v1888, %v1884
        %v1890 = vrot.slane %v1889, 4
        %v1892 = vshll.u32 %v1680, 16
        %v1894 = vrot.slane %v1892, 5
        %v1895 = vsel %vm1691, %v1890, %v1894
        %v1896 = vshrl.u32 %v1680, 16
        %v1898 = vrot.slane %v1896, 4
        %v1899 = vor.u32 %v1898, %v1894
        %v1900 = vrot.slane %v1899, 4
        %v1902 = vshll.u32 %v1681, 16
        %v1904 = vrot.slane %v1902, 5
        %v1905 = vsel %vm1691, %v1900, %v1904
        %v1906 = vshrl.u32 %v1681, 16
        %v1908 = vrot.slane %v1906, 4
        %v1909 = vor.u32 %v1908, %v1904
        %v1910 = vrot.slane %v1909, 4
        %v1912 = vshll.u32 %v1682, 16
        %v1914 = vrot.slane %v1912, 5
        %v1915 = vsel %vm1691, %v1910, %v1914
        %v1916 = vshrl.u32 %v1682, 16
        %v1918 = vrot.slane %v1916, 4
        %v1919 = vor.u32 %v1918, %v1914
        %v1920 = vrot.slane %v1919, 4
        %v1922 = vshll.u32 %v1683, 16
        %v1924 = vrot.slane %v1922, 5
        %v1925 = vsel %vm1691, %v1920, %v1924
        %v1926 = vshrl.u32 %v1683, 16
        %v1928 = vrot.slane %v1926, 4
        %v1929 = vor.u32 %v1928, %v1924
        %v1930 = vrot.slane %v1929, 4
        %v1932 = vshll.u32 %v1684, 16
        %v1934 = vrot.slane %v1932, 5
        %v1935 = vsel %vm1691, %v1930, %v1934
        %v1936 = vshrl.u32 %v1684, 16
        %v1938 = vrot.slane %v1936, 4
        %v1939 = vor.u32 %v1938, %v1934
        %v1940 = vrot.slane %v1939, 4
        %v1942 = vshll.u32 %v1685, 16
        %v1944 = vrot.slane %v1942, 5
        %v1945 = vsel %vm1691, %v1940, %v1944
        %v1946 = vshrl.u32 %v1685, 16
        %v1948 = vrot.slane %v1946, 4
        %v1949 = vor.u32 %v1948, %v1944
        %v1950 = vrot.slane %v1949, 4
        %v1952 = vshll.u32 %v1686, 16
        %v1954 = vrot.slane %v1952, 5
        %v1955 = vsel %vm1691, %v1950, %v1954
        %v1956 = vshrl.u32 %v1686, 16
        %v1958 = vrot.slane %v1956, 4
        %v1959 = vor.u32 %v1958, %v1954
        %v1960 = vrot.slane %v1959, 4
        %v1962 = vshll.u32 %v1687, 16
        %v1964 = vrot.slane %v1962, 5
        %v1965 = vsel %vm1691, %v1960, %v1964
        %v1966 = vshrl.u32 %v1687, 16
        %v1968 = vrot.slane %v1966, 4
        %v1969 = vor.u32 %v1968, %v1964
        %v1970 = vrot.slane %v1969, 4
        %v1972 = vshll.u32 %v1688, 16
        %v1974 = vrot.slane %v1972, 5
        %v1975 = vsel %vm1691, %v1970, %v1974
        %1976 = vrot.lane.b32.xlu0 %v1705, 32
        %v1977 = vpop.permute.xlu0 %1976
        %1978 = vrot.lane.b32.xlu0 %v1715, 32
        %v1979 = vpop.permute.xlu0 %1978
        %1980 = vrot.lane.b32.xlu0 %v1725, 32
        %v1981 = vpop.permute.xlu0 %1980
        %1982 = vrot.lane.b32.xlu0 %v1735, 32
        %v1983 = vpop.permute.xlu0 %1982
        %1984 = vrot.lane.b32.xlu0 %v1745, 32
        %v1985 = vpop.permute.xlu0 %1984
        %1986 = vrot.lane.b32.xlu0 %v1755, 32
        %v1987 = vpop.permute.xlu0 %1986
        %1988 = vrot.lane.b32.xlu0 %v1765, 32
        %v1989 = vpop.permute.xlu0 %1988
        %1990 = vrot.lane.b32.xlu0 %v1775, 32
        %v1991 = vpop.permute.xlu0 %1990
        %1992 = vrot.lane.b32.xlu0 %v1785, 32
        %v1993 = vpop.permute.xlu0 %1992
        %1994 = vrot.lane.b32.xlu0 %v1795, 32
        %v1995 = vpop.permute.xlu0 %1994
        %1996 = vrot.lane.b32.xlu0 %v1805, 32
        %v1997 = vpop.permute.xlu0 %1996
        %1998 = vrot.lane.b32.xlu0 %v1815, 32
        %v1999 = vpop.permute.xlu0 %1998
        %2000 = vrot.lane.b32.xlu0 %v1825, 32
        %v2001 = vpop.permute.xlu0 %2000
        %2002 = vrot.lane.b32.xlu0 %v1835, 32
        %v2003 = vpop.permute.xlu0 %2002
        %2004 = vrot.lane.b32.xlu0 %v1845, 32
        %v2005 = vpop.permute.xlu0 %2004
        %2006 = vrot.lane.b32.xlu0 %v1855, 32
        %v2007 = vpop.permute.xlu0 %2006
        %2008 = vrot.lane.b32.xlu0 %v1865, 32
        %v2009 = vpop.permute.xlu0 %2008
        %2010 = vrot.lane.b32.xlu0 %v1875, 32
        %v2011 = vpop.permute.xlu0 %2010
        %2012 = vrot.lane.b32.xlu0 %v1885, 32
        %v2013 = vpop.permute.xlu0 %2012
        %2014 = vrot.lane.b32.xlu0 %v1895, 32
        %v2015 = vpop.permute.xlu0 %2014
        %2016 = vrot.lane.b32.xlu0 %v1905, 32
        %v2017 = vpop.permute.xlu0 %2016
        %2018 = vrot.lane.b32.xlu0 %v1915, 32
        %v2019 = vpop.permute.xlu0 %2018
        %2020 = vrot.lane.b32.xlu0 %v1925, 32
        %v2021 = vpop.permute.xlu0 %2020
        %2022 = vrot.lane.b32.xlu0 %v1935, 32
        %v2023 = vpop.permute.xlu0 %2022
        %2024 = vrot.lane.b32.xlu0 %v1945, 32
        %v2025 = vpop.permute.xlu0 %2024
        %2026 = vrot.lane.b32.xlu0 %v1955, 32
        %v2027 = vpop.permute.xlu0 %2026
        %2028 = vrot.lane.b32.xlu0 %v1965, 32
        %v2029 = vpop.permute.xlu0 %2028
        %2030 = vrot.lane.b32.xlu0 %v1975, 32
        %v2031 = vpop.permute.xlu0 %2030
        %vm2060 = vcmask 519424
        %2061 = vst.msk [vmem:[#allocation3] sm:$0xf] %vm2060, %v1977
        %2062 = vst.msk [vmem:[#allocation3 + $0x8] sm:$0xf] %vm2060, %v1979
        %2063 = vst.msk [vmem:[#allocation3 + $0x10] sm:$0xf] %vm2060, %v1981
        %2064 = vst.msk [vmem:[#allocation3 + $0x18] sm:$0xf] %vm2060, %v1983
        %2065 = vst.msk [vmem:[#allocation3 + $0x20] sm:$0xf] %vm2060, %v1985
        %2066 = vst.msk [vmem:[#allocation3 + $0x28] sm:$0xf] %vm2060, %v1987
        %2067 = vst.msk [vmem:[#allocation3 + $0x30] sm:$0xf] %vm2060, %v1989
        %2068 = vst.msk [vmem:[#allocation3 + $0x38] sm:$0xf] %vm2060, %v1991
        %2069 = vst.msk [vmem:[#allocation3 + $0x40] sm:$0xf] %vm2060, %v1993
        %2070 = vst.msk [vmem:[#allocation3 + $0x48] sm:$0xf] %vm2060, %v1995
        %2071 = vst.msk [vmem:[#allocation3 + $0x50] sm:$0xf] %vm2060, %v1997
        %2072 = vst.msk [vmem:[#allocation3 + $0x58] sm:$0xf] %vm2060, %v1999
        %2073 = vst.msk [vmem:[#allocation3 + $0x60] sm:$0xf] %vm2060, %v2001
        %2074 = vst.msk [vmem:[#allocation3 + $0x68] sm:$0xf] %vm2060, %v2003
        %2075 = vst.msk [vmem:[#allocation3 + $0x70] sm:$0xf] %vm2060, %v2005
        %2076 = vst.msk [vmem:[#allocation3 + $0x78] sm:$0xf] %vm2060, %v2007
        %2077 = vst.msk [vmem:[#allocation3 + $0x80] sm:$0xf] %vm2060, %v2009
        %2078 = vst.msk [vmem:[#allocation3 + $0x88] sm:$0xf] %vm2060, %v2011
        %2079 = vst.msk [vmem:[#allocation3 + $0x90] sm:$0xf] %vm2060, %v2013
        %2080 = vst.msk [vmem:[#allocation3 + $0x98] sm:$0xf] %vm2060, %v2015
        %2081 = vst.msk [vmem:[#allocation3 + $0xa0] sm:$0xf] %vm2060, %v2017
        %2082 = vst.msk [vmem:[#allocation3 + $0xa8] sm:$0xf] %vm2060, %v2019
        %2083 = vst.msk [vmem:[#allocation3 + $0xb0] sm:$0xf] %vm2060, %v2021
        %2084 = vst.msk [vmem:[#allocation3 + $0xb8] sm:$0xf] %vm2060, %v2023
        %2085 = vst.msk [vmem:[#allocation3 + $0xc0] sm:$0xf] %vm2060, %v2025
        %2086 = vst.msk [vmem:[#allocation3 + $0xc8] sm:$0xf] %vm2060, %v2027
        %2087 = vst.msk [vmem:[#allocation3 + $0xd0] sm:$0xf] %vm2060, %v2029
        %2088 = vst.msk [vmem:[#allocation3 + $0xd8] sm:$0xf] %vm2060, %v2031
        %v2089 = vld [vmem:[#allocation2] sm:$0xe]
        %v2090 = vld [vmem:[#allocation2 + $0x4] sm:$0xf]
        %v2091 = vld [vmem:[#allocation2 + $0x8] sm:$0xf]
        %v2092 = vld [vmem:[#allocation2 + $0xc] sm:$0xf]
        %v2093 = vld [vmem:[#allocation2 + $0x10] sm:$0xf]
        %v2094 = vld [vmem:[#allocation2 + $0x14] sm:$0xf]
        %v2095 = vld [vmem:[#allocation2 + $0x18] sm:$0xf]
        %v2096 = vld [vmem:[#allocation2 + $0x1c] sm:$0xf]
        %v2097 = vld [vmem:[#allocation2 + $0x20] sm:$0xf]
        %v2098 = vld [vmem:[#allocation2 + $0x24] sm:$0xf]
        %v2099 = vld [vmem:[#allocation2 + $0x28] sm:$0xf]
        %v2100 = vld [vmem:[#allocation2 + $0x2c] sm:$0xf]
        %v2101 = vld [vmem:[#allocation2 + $0x30] sm:$0xf]
        %v2102 = vld [vmem:[#allocation2 + $0x34] sm:$0xf]
        %v2103 = vld [vmem:[#allocation2 + $0x38] sm:$0xf]
        %v2104 = vld [vmem:[#allocation2 + $0x3c] sm:$0xf]
        %v2105 = vld [vmem:[#allocation2 + $0x40] sm:$0xf]
        %v2106 = vld [vmem:[#allocation2 + $0x44] sm:$0xf]
        %v2107 = vld [vmem:[#allocation2 + $0x48] sm:$0xf]
        %v2108 = vld [vmem:[#allocation2 + $0x4c] sm:$0xf]
        %v2109 = vld [vmem:[#allocation2 + $0x50] sm:$0xf]
        %v2110 = vld [vmem:[#allocation2 + $0x54] sm:$0xf]
        %v2111 = vld [vmem:[#allocation2 + $0x58] sm:$0xf]
        %v2112 = vld [vmem:[#allocation2 + $0x5c] sm:$0xf]
        %v2113 = vld [vmem:[#allocation2 + $0x60] sm:$0xf]
        %v2114 = vld [vmem:[#allocation2 + $0x64] sm:$0xf]
        %v2115 = vld [vmem:[#allocation2 + $0x68] sm:$0xf]
        %v2116 = vld [vmem:[#allocation2 + $0x6c] sm:$0xf]
        %v2117 = vld [vmem:[#allocation2 + $0x70] sm:$0x1]
        %vm2147 = vcmask 1042432
        %vm2148 = vcmask 1046532
        %vm2149 = vmor %vm2147, %vm2148
        %v2150 = vrot.slane %v2089, 5
        %v2151 = vrot.slane %v2150, 4
        %v2152 = vrot.slane %v2090, 5
        %v2153 = vsel %vm2149, %v2151, %v2152
        %v2154 = vrot.slane %v2152, 4
        %v2155 = vrot.slane %v2091, 5
        %v2156 = vsel %vm2149, %v2154, %v2155
        %v2157 = vrot.slane %v2155, 4
        %v2158 = vrot.slane %v2092, 5
        %v2159 = vsel %vm2149, %v2157, %v2158
        %v2160 = vrot.slane %v2158, 4
        %v2161 = vrot.slane %v2093, 5
        %v2162 = vsel %vm2149, %v2160, %v2161
        %v2163 = vrot.slane %v2161, 4
        %v2164 = vrot.slane %v2094, 5
        %v2165 = vsel %vm2149, %v2163, %v2164
        %v2166 = vrot.slane %v2164, 4
        %v2167 = vrot.slane %v2095, 5
        %v2168 = vsel %vm2149, %v2166, %v2167
        %v2169 = vrot.slane %v2167, 4
        %v2170 = vrot.slane %v2096, 5
        %v2171 = vsel %vm2149, %v2169, %v2170
        %v2172 = vrot.slane %v2170, 4
        %v2173 = vrot.slane %v2097, 5
        %v2174 = vsel %vm2149, %v2172, %v2173
        %v2175 = vrot.slane %v2173, 4
        %v2176 = vrot.slane %v2098, 5
        %v2177 = vsel %vm2149, %v2175, %v2176
        %v2178 = vrot.slane %v2176, 4
        %v2179 = vrot.slane %v2099, 5
        %v2180 = vsel %vm2149, %v2178, %v2179
        %v2181 = vrot.slane %v2179, 4
        %v2182 = vrot.slane %v2100, 5
        %v2183 = vsel %vm2149, %v2181, %v2182
        %v2184 = vrot.slane %v2182, 4
        %v2185 = vrot.slane %v2101, 5
        %v2186 = vsel %vm2149, %v2184, %v2185
        %v2187 = vrot.slane %v2185, 4
        %v2188 = vrot.slane %v2102, 5
        %v2189 = vsel %vm2149, %v2187, %v2188
        %v2190 = vrot.slane %v2188, 4
        %v2191 = vrot.slane %v2103, 5
        %v2192 = vsel %vm2149, %v2190, %v2191
        %v2193 = vrot.slane %v2191, 4
        %v2194 = vrot.slane %v2104, 5
        %v2195 = vsel %vm2149, %v2193, %v2194
        %v2196 = vrot.slane %v2194, 4
        %v2197 = vrot.slane %v2105, 5
        %v2198 = vsel %vm2149, %v2196, %v2197
        %v2199 = vrot.slane %v2197, 4
        %v2200 = vrot.slane %v2106, 5
        %v2201 = vsel %vm2149, %v2199, %v2200
        %v2202 = vrot.slane %v2200, 4
        %v2203 = vrot.slane %v2107, 5
        %v2204 = vsel %vm2149, %v2202, %v2203
        %v2205 = vrot.slane %v2203, 4
        %v2206 = vrot.slane %v2108, 5
        %v2207 = vsel %vm2149, %v2205, %v2206
        %v2208 = vrot.slane %v2206, 4
        %v2209 = vrot.slane %v2109, 5
        %v2210 = vsel %vm2149, %v2208, %v2209
        %v2211 = vrot.slane %v2209, 4
        %v2212 = vrot.slane %v2110, 5
        %v2213 = vsel %vm2149, %v2211, %v2212
        %v2214 = vrot.slane %v2212, 4
        %v2215 = vrot.slane %v2111, 5
        %v2216 = vsel %vm2149, %v2214, %v2215
        %v2217 = vrot.slane %v2215, 4
        %v2218 = vrot.slane %v2112, 5
        %v2219 = vsel %vm2149, %v2217, %v2218
        %v2220 = vrot.slane %v2218, 4
        %v2221 = vrot.slane %v2113, 5
        %v2222 = vsel %vm2149, %v2220, %v2221
        %v2223 = vrot.slane %v2221, 4
        %v2224 = vrot.slane %v2114, 5
        %v2225 = vsel %vm2149, %v2223, %v2224
        %v2226 = vrot.slane %v2224, 4
        %v2227 = vrot.slane %v2115, 5
        %v2228 = vsel %vm2149, %v2226, %v2227
        %v2229 = vrot.slane %v2227, 4
        %v2230 = vrot.slane %v2116, 5
        %v2231 = vsel %vm2149, %v2229, %v2230
        %v2232 = vrot.slane %v2230, 4
        %v2233 = vrot.slane %v2117, 5
        %v2234 = vsel %vm2149, %v2232, %v2233
        %2235 = vrot.lane.b32.xlu0 %v2153, 64
        %v2236 = vpop.permute.xlu0 %2235
        %2237 = vrot.lane.b32.xlu0 %v2156, 64
        %v2238 = vpop.permute.xlu0 %2237
        %2239 = vrot.lane.b32.xlu0 %v2159, 64
        %v2240 = vpop.permute.xlu0 %2239
        %2241 = vrot.lane.b32.xlu0 %v2162, 64
        %v2242 = vpop.permute.xlu0 %2241
        %2243 = vrot.lane.b32.xlu0 %v2165, 64
        %v2244 = vpop.permute.xlu0 %2243
        %2245 = vrot.lane.b32.xlu0 %v2168, 64
        %v2246 = vpop.permute.xlu0 %2245
        %2247 = vrot.lane.b32.xlu0 %v2171, 64
        %v2248 = vpop.permute.xlu0 %2247
        %2249 = vrot.lane.b32.xlu0 %v2174, 64
        %v2250 = vpop.permute.xlu0 %2249
        %2251 = vrot.lane.b32.xlu0 %v2177, 64
        %v2252 = vpop.permute.xlu0 %2251
        %2253 = vrot.lane.b32.xlu0 %v2180, 64
        %v2254 = vpop.permute.xlu0 %2253
        %2255 = vrot.lane.b32.xlu0 %v2183, 64
        %v2256 = vpop.permute.xlu0 %2255
        %2257 = vrot.lane.b32.xlu0 %v2186, 64
        %v2258 = vpop.permute.xlu0 %2257
        %2259 = vrot.lane.b32.xlu0 %v2189, 64
        %v2260 = vpop.permute.xlu0 %2259
        %2261 = vrot.lane.b32.xlu0 %v2192, 64
        %v2262 = vpop.permute.xlu0 %2261
        %2263 = vrot.lane.b32.xlu0 %v2195, 64
        %v2264 = vpop.permute.xlu0 %2263
        %2265 = vrot.lane.b32.xlu0 %v2198, 64
        %v2266 = vpop.permute.xlu0 %2265
        %2267 = vrot.lane.b32.xlu0 %v2201, 64
        %v2268 = vpop.permute.xlu0 %2267
        %2269 = vrot.lane.b32.xlu0 %v2204, 64
        %v2270 = vpop.permute.xlu0 %2269
        %2271 = vrot.lane.b32.xlu0 %v2207, 64
        %v2272 = vpop.permute.xlu0 %2271
        %2273 = vrot.lane.b32.xlu0 %v2210, 64
        %v2274 = vpop.permute.xlu0 %2273
        %2275 = vrot.lane.b32.xlu0 %v2213, 64
        %v2276 = vpop.permute.xlu0 %2275
        %2277 = vrot.lane.b32.xlu0 %v2216, 64
        %v2278 = vpop.permute.xlu0 %2277
        %2279 = vrot.lane.b32.xlu0 %v2219, 64
        %v2280 = vpop.permute.xlu0 %2279
        %2281 = vrot.lane.b32.xlu0 %v2222, 64
        %v2282 = vpop.permute.xlu0 %2281
        %2283 = vrot.lane.b32.xlu0 %v2225, 64
        %v2284 = vpop.permute.xlu0 %2283
        %2285 = vrot.lane.b32.xlu0 %v2228, 64
        %v2286 = vpop.permute.xlu0 %2285
        %2287 = vrot.lane.b32.xlu0 %v2231, 64
        %v2288 = vpop.permute.xlu0 %2287
        %2289 = vrot.lane.b32.xlu0 %v2234, 64
        %v2290 = vpop.permute.xlu0 %2289
        %vm2319 = vcmask 781824
        %2320 = vst.msk [vmem:[#allocation3] sm:$0xf] %vm2319, %v2236
        %2321 = vst.msk [vmem:[#allocation3 + $0x8] sm:$0xf] %vm2319, %v2238
        %2322 = vst.msk [vmem:[#allocation3 + $0x10] sm:$0xf] %vm2319, %v2240
        %2323 = vst.msk [vmem:[#allocation3 + $0x18] sm:$0xf] %vm2319, %v2242
        %2324 = vst.msk [vmem:[#allocation3 + $0x20] sm:$0xf] %vm2319, %v2244
        %2325 = vst.msk [vmem:[#allocation3 + $0x28] sm:$0xf] %vm2319, %v2246
        %2326 = vst.msk [vmem:[#allocation3 + $0x30] sm:$0xf] %vm2319, %v2248
        %2327 = vst.msk [vmem:[#allocation3 + $0x38] sm:$0xf] %vm2319, %v2250
        %2328 = vst.msk [vmem:[#allocation3 + $0x40] sm:$0xf] %vm2319, %v2252
        %2329 = vst.msk [vmem:[#allocation3 + $0x48] sm:$0xf] %vm2319, %v2254
        %2330 = vst.msk [vmem:[#allocation3 + $0x50] sm:$0xf] %vm2319, %v2256
        %2331 = vst.msk [vmem:[#allocation3 + $0x58] sm:$0xf] %vm2319, %v2258
        %2332 = vst.msk [vmem:[#allocation3 + $0x60] sm:$0xf] %vm2319, %v2260
        %2333 = vst.msk [vmem:[#allocation3 + $0x68] sm:$0xf] %vm2319, %v2262
        %2334 = vst.msk [vmem:[#allocation3 + $0x70] sm:$0xf] %vm2319, %v2264
        %2335 = vst.msk [vmem:[#allocation3 + $0x78] sm:$0xf] %vm2319, %v2266
        %2336 = vst.msk [vmem:[#allocation3 + $0x80] sm:$0xf] %vm2319, %v2268
        %2337 = vst.msk [vmem:[#allocation3 + $0x88] sm:$0xf] %vm2319, %v2270
        %2338 = vst.msk [vmem:[#allocation3 + $0x90] sm:$0xf] %vm2319, %v2272
        %2339 = vst.msk [vmem:[#allocation3 + $0x98] sm:$0xf] %vm2319, %v2274
        %2340 = vst.msk [vmem:[#allocation3 + $0xa0] sm:$0xf] %vm2319, %v2276
        %2341 = vst.msk [vmem:[#allocation3 + $0xa8] sm:$0xf] %vm2319, %v2278
        %2342 = vst.msk [vmem:[#allocation3 + $0xb0] sm:$0xf] %vm2319, %v2280
        %2343 = vst.msk [vmem:[#allocation3 + $0xb8] sm:$0xf] %vm2319, %v2282
        %2344 = vst.msk [vmem:[#allocation3 + $0xc0] sm:$0xf] %vm2319, %v2284
        %2345 = vst.msk [vmem:[#allocation3 + $0xc8] sm:$0xf] %vm2319, %v2286
        %2346 = vst.msk [vmem:[#allocation3 + $0xd0] sm:$0xf] %vm2319, %v2288
        %2347 = vst.msk [vmem:[#allocation3 + $0xd8] sm:$0xf] %vm2319, %v2290
        %v2348 = vld [vmem:[#allocation2] sm:$0xe]
        %v2349 = vld [vmem:[#allocation2 + $0x4] sm:$0xf]
        %v2350 = vld [vmem:[#allocation2 + $0x8] sm:$0xf]
        %v2351 = vld [vmem:[#allocation2 + $0xc] sm:$0xf]
        %v2352 = vld [vmem:[#allocation2 + $0x10] sm:$0xf]
        %v2353 = vld [vmem:[#allocation2 + $0x14] sm:$0xf]
        %v2354 = vld [vmem:[#allocation2 + $0x18] sm:$0xf]
        %v2355 = vld [vmem:[#allocation2 + $0x1c] sm:$0xf]
        %v2356 = vld [vmem:[#allocation2 + $0x20] sm:$0xf]
        %v2357 = vld [vmem:[#allocation2 + $0x24] sm:$0xf]
        %v2358 = vld [vmem:[#allocation2 + $0x28] sm:$0xf]
        %v2359 = vld [vmem:[#allocation2 + $0x2c] sm:$0xf]
        %v2360 = vld [vmem:[#allocation2 + $0x30] sm:$0xf]
        %v2361 = vld [vmem:[#allocation2 + $0x34] sm:$0xf]
        %v2362 = vld [vmem:[#allocation2 + $0x38] sm:$0xf]
        %v2363 = vld [vmem:[#allocation2 + $0x3c] sm:$0xf]
        %v2364 = vld [vmem:[#allocation2 + $0x40] sm:$0xf]
        %v2365 = vld [vmem:[#allocation2 + $0x44] sm:$0xf]
        %v2366 = vld [vmem:[#allocation2 + $0x48] sm:$0xf]
        %v2367 = vld [vmem:[#allocation2 + $0x4c] sm:$0xf]
        %v2368 = vld [vmem:[#allocation2 + $0x50] sm:$0xf]
        %v2369 = vld [vmem:[#allocation2 + $0x54] sm:$0xf]
        %v2370 = vld [vmem:[#allocation2 + $0x58] sm:$0xf]
        %v2371 = vld [vmem:[#allocation2 + $0x5c] sm:$0xf]
        %v2372 = vld [vmem:[#allocation2 + $0x60] sm:$0xf]
        %v2373 = vld [vmem:[#allocation2 + $0x64] sm:$0xf]
        %v2374 = vld [vmem:[#allocation2 + $0x68] sm:$0xf]
        %v2375 = vld [vmem:[#allocation2 + $0x6c] sm:$0xf]
        %v2376 = vld [vmem:[#allocation2 + $0x70] sm:$0x3]
        %vm2377 = vsmask.f32 2304
        %vm2378 = vsmask.f32 6416
        %vm2379 = vmor %vm2377, %vm2378
        %v2381 = vshrl.u32 %v2348, 16
        %v2383 = vrot.slane %v2381, 5
        %v2384 = vshll.u32 %v2348, 16
        %v2386 = vrot.slane %v2384, 6
        %v2387 = vor.u32 %v2383, %v2386
        %v2388 = vrot.slane %v2387, 4
        %v2390 = vshrl.u32 %v2349, 16
        %v2392 = vrot.slane %v2390, 5
        %v2393 = vshll.u32 %v2349, 16
        %v2395 = vrot.slane %v2393, 6
        %v2396 = vor.u32 %v2392, %v2395
        %v2397 = vsel %vm2379, %v2388, %v2396
        %v2398 = vrot.slane %v2396, 4
        %v2400 = vshrl.u32 %v2350, 16
        %v2402 = vrot.slane %v2400, 5
        %v2403 = vshll.u32 %v2350, 16
        %v2405 = vrot.slane %v2403, 6
        %v2406 = vor.u32 %v2402, %v2405
        %v2407 = vsel %vm2379, %v2398, %v2406
        %v2408 = vrot.slane %v2406, 4
        %v2410 = vshrl.u32 %v2351, 16
        %v2412 = vrot.slane %v2410, 5
        %v2413 = vshll.u32 %v2351, 16
        %v2415 = vrot.slane %v2413, 6
        %v2416 = vor.u32 %v2412, %v2415
        %v2417 = vsel %vm2379, %v2408, %v2416
        %v2418 = vrot.slane %v2416, 4
        %v2420 = vshrl.u32 %v2352, 16
        %v2422 = vrot.slane %v2420, 5
        %v2423 = vshll.u32 %v2352, 16
        %v2425 = vrot.slane %v2423, 6
        %v2426 = vor.u32 %v2422, %v2425
        %v2427 = vsel %vm2379, %v2418, %v2426
        %v2428 = vrot.slane %v2426, 4
        %v2430 = vshrl.u32 %v2353, 16
        %v2432 = vrot.slane %v2430, 5
        %v2433 = vshll.u32 %v2353, 16
        %v2435 = vrot.slane %v2433, 6
        %v2436 = vor.u32 %v2432, %v2435
        %v2437 = vsel %vm2379, %v2428, %v2436
        %v2438 = vrot.slane %v2436, 4
        %v2440 = vshrl.u32 %v2354, 16
        %v2442 = vrot.slane %v2440, 5
        %v2443 = vshll.u32 %v2354, 16
        %v2445 = vrot.slane %v2443, 6
        %v2446 = vor.u32 %v2442, %v2445
        %v2447 = vsel %vm2379, %v2438, %v2446
        %v2448 = vrot.slane %v2446, 4
        %v2450 = vshrl.u32 %v2355, 16
        %v2452 = vrot.slane %v2450, 5
        %v2453 = vshll.u32 %v2355, 16
        %v2455 = vrot.slane %v2453, 6
        %v2456 = vor.u32 %v2452, %v2455
        %v2457 = vsel %vm2379, %v2448, %v2456
        %v2458 = vrot.slane %v2456, 4
        %v2460 = vshrl.u32 %v2356, 16
        %v2462 = vrot.slane %v2460, 5
        %v2463 = vshll.u32 %v2356, 16
        %v2465 = vrot.slane %v2463, 6
        %v2466 = vor.u32 %v2462, %v2465
        %v2467 = vsel %vm2379, %v2458, %v2466
        %v2468 = vrot.slane %v2466, 4
        %v2470 = vshrl.u32 %v2357, 16
        %v2472 = vrot.slane %v2470, 5
        %v2473 = vshll.u32 %v2357, 16
        %v2475 = vrot.slane %v2473, 6
        %v2476 = vor.u32 %v2472, %v2475
        %v2477 = vsel %vm2379, %v2468, %v2476
        %v2478 = vrot.slane %v2476, 4
        %v2480 = vshrl.u32 %v2358, 16
        %v2482 = vrot.slane %v2480, 5
        %v2483 = vshll.u32 %v2358, 16
        %v2485 = vrot.slane %v2483, 6
        %v2486 = vor.u32 %v2482, %v2485
        %v2487 = vsel %vm2379, %v2478, %v2486
        %v2488 = vrot.slane %v2486, 4
        %v2490 = vshrl.u32 %v2359, 16
        %v2492 = vrot.slane %v2490, 5
        %v2493 = vshll.u32 %v2359, 16
        %v2495 = vrot.slane %v2493, 6
        %v2496 = vor.u32 %v2492, %v2495
        %v2497 = vsel %vm2379, %v2488, %v2496
        %v2498 = vrot.slane %v2496, 4
        %v2500 = vshrl.u32 %v2360, 16
        %v2502 = vrot.slane %v2500, 5
        %v2503 = vshll.u32 %v2360, 16
        %v2505 = vrot.slane %v2503, 6
        %v2506 = vor.u32 %v2502, %v2505
        %v2507 = vsel %vm2379, %v2498, %v2506
        %v2508 = vrot.slane %v2506, 4
        %v2510 = vshrl.u32 %v2361, 16
        %v2512 = vrot.slane %v2510, 5
        %v2513 = vshll.u32 %v2361, 16
        %v2515 = vrot.slane %v2513, 6
        %v2516 = vor.u32 %v2512, %v2515
        %v2517 = vsel %vm2379, %v2508, %v2516
        %v2518 = vrot.slane %v2516, 4
        %v2520 = vshrl.u32 %v2362, 16
        %v2522 = vrot.slane %v2520, 5
        %v2523 = vshll.u32 %v2362, 16
        %v2525 = vrot.slane %v2523, 6
        %v2526 = vor.u32 %v2522, %v2525
        %v2527 = vsel %vm2379, %v2518, %v2526
        %v2528 = vrot.slane %v2526, 4
        %v2530 = vshrl.u32 %v2363, 16
        %v2532 = vrot.slane %v2530, 5
        %v2533 = vshll.u32 %v2363, 16
        %v2535 = vrot.slane %v2533, 6
        %v2536 = vor.u32 %v2532, %v2535
        %v2537 = vsel %vm2379, %v2528, %v2536
        %v2538 = vrot.slane %v2536, 4
        %v2540 = vshrl.u32 %v2364, 16
        %v2542 = vrot.slane %v2540, 5
        %v2543 = vshll.u32 %v2364, 16
        %v2545 = vrot.slane %v2543, 6
        %v2546 = vor.u32 %v2542, %v2545
        %v2547 = vsel %vm2379, %v2538, %v2546
        %v2548 = vrot.slane %v2546, 4
        %v2550 = vshrl.u32 %v2365, 16
        %v2552 = vrot.slane %v2550, 5
        %v2553 = vshll.u32 %v2365, 16
        %v2555 = vrot.slane %v2553, 6
        %v2556 = vor.u32 %v2552, %v2555
        %v2557 = vsel %vm2379, %v2548, %v2556
        %v2558 = vrot.slane %v2556, 4
        %v2560 = vshrl.u32 %v2366, 16
        %v2562 = vrot.slane %v2560, 5
        %v2563 = vshll.u32 %v2366, 16
        %v2565 = vrot.slane %v2563, 6
        %v2566 = vor.u32 %v2562, %v2565
        %v2567 = vsel %vm2379, %v2558, %v2566
        %v2568 = vrot.slane %v2566, 4
        %v2570 = vshrl.u32 %v2367, 16
        %v2572 = vrot.slane %v2570, 5
        %v2573 = vshll.u32 %v2367, 16
        %v2575 = vrot.slane %v2573, 6
        %v2576 = vor.u32 %v2572, %v2575
        %v2577 = vsel %vm2379, %v2568, %v2576
        %v2578 = vrot.slane %v2576, 4
        %v2580 = vshrl.u32 %v2368, 16
        %v2582 = vrot.slane %v2580, 5
        %v2583 = vshll.u32 %v2368, 16
        %v2585 = vrot.slane %v2583, 6
        %v2586 = vor.u32 %v2582, %v2585
        %v2587 = vsel %vm2379, %v2578, %v2586
        %v2588 = vrot.slane %v2586, 4
        %v2590 = vshrl.u32 %v2369, 16
        %v2592 = vrot.slane %v2590, 5
        %v2593 = vshll.u32 %v2369, 16
        %v2595 = vrot.slane %v2593, 6
        %v2596 = vor.u32 %v2592, %v2595
        %v2597 = vsel %vm2379, %v2588, %v2596
        %v2598 = vrot.slane %v2596, 4
        %v2600 = vshrl.u32 %v2370, 16
        %v2602 = vrot.slane %v2600, 5
        %v2603 = vshll.u32 %v2370, 16
        %v2605 = vrot.slane %v2603, 6
        %v2606 = vor.u32 %v2602, %v2605
        %v2607 = vsel %vm2379, %v2598, %v2606
        %v2608 = vrot.slane %v2606, 4
        %v2610 = vshrl.u32 %v2371, 16
        %v2612 = vrot.slane %v2610, 5
        %v2613 = vshll.u32 %v2371, 16
        %v2615 = vrot.slane %v2613, 6
        %v2616 = vor.u32 %v2612, %v2615
        %v2617 = vsel %vm2379, %v2608, %v2616
        %v2618 = vrot.slane %v2616, 4
        %v2620 = vshrl.u32 %v2372, 16
        %v2622 = vrot.slane %v2620, 5
        %v2623 = vshll.u32 %v2372, 16
        %v2625 = vrot.slane %v2623, 6
        %v2626 = vor.u32 %v2622, %v2625
        %v2627 = vsel %vm2379, %v2618, %v2626
        %v2628 = vrot.slane %v2626, 4
        %v2630 = vshrl.u32 %v2373, 16
        %v2632 = vrot.slane %v2630, 5
        %v2633 = vshll.u32 %v2373, 16
        %v2635 = vrot.slane %v2633, 6
        %v2636 = vor.u32 %v2632, %v2635
        %v2637 = vsel %vm2379, %v2628, %v2636
        %v2638 = vrot.slane %v2636, 4
        %v2640 = vshrl.u32 %v2374, 16
        %v2642 = vrot.slane %v2640, 5
        %v2643 = vshll.u32 %v2374, 16
        %v2645 = vrot.slane %v2643, 6
        %v2646 = vor.u32 %v2642, %v2645
        %v2647 = vsel %vm2379, %v2638, %v2646
        %v2648 = vrot.slane %v2646, 4
        %v2650 = vshrl.u32 %v2375, 16
        %v2652 = vrot.slane %v2650, 5
        %v2653 = vshll.u32 %v2375, 16
        %v2655 = vrot.slane %v2653, 6
        %v2656 = vor.u32 %v2652, %v2655
        %v2657 = vsel %vm2379, %v2648, %v2656
        %v2658 = vrot.slane %v2656, 4
        %v2660 = vshrl.u32 %v2376, 16
        %v2662 = vrot.slane %v2660, 5
        %v2663 = vshll.u32 %v2376, 16
        %v2665 = vrot.slane %v2663, 6
        %v2666 = vor.u32 %v2662, %v2665
        %v2667 = vsel %vm2379, %v2658, %v2666
        %2668 = vrot.lane.b32.xlu0 %v2397, 96
        %v2669 = vpop.permute.xlu0 %2668
        %2670 = vrot.lane.b32.xlu0 %v2407, 96
        %v2671 = vpop.permute.xlu0 %2670
        %2672 = vrot.lane.b32.xlu0 %v2417, 96
        %v2673 = vpop.permute.xlu0 %2672
        %2674 = vrot.lane.b32.xlu0 %v2427, 96
        %v2675 = vpop.permute.xlu0 %2674
        %2676 = vrot.lane.b32.xlu0 %v2437, 96
        %v2677 = vpop.permute.xlu0 %2676
        %2678 = vrot.lane.b32.xlu0 %v2447, 96
        %v2679 = vpop.permute.xlu0 %2678
        %2680 = vrot.lane.b32.xlu0 %v2457, 96
        %v2681 = vpop.permute.xlu0 %2680
        %2682 = vrot.lane.b32.xlu0 %v2467, 96
        %v2683 = vpop.permute.xlu0 %2682
        %2684 = vrot.lane.b32.xlu0 %v2477, 96
        %v2685 = vpop.permute.xlu0 %2684
        %2686 = vrot.lane.b32.xlu0 %v2487, 96
        %v2687 = vpop.permute.xlu0 %2686
        %2688 = vrot.lane.b32.xlu0 %v2497, 96
        %v2689 = vpop.permute.xlu0 %2688
        %2690 = vrot.lane.b32.xlu0 %v2507, 96
        %v2691 = vpop.permute.xlu0 %2690
        %2692 = vrot.lane.b32.xlu0 %v2517, 96
        %v2693 = vpop.permute.xlu0 %2692
        %2694 = vrot.lane.b32.xlu0 %v2527, 96
        %v2695 = vpop.permute.xlu0 %2694
        %2696 = vrot.lane.b32.xlu0 %v2537, 96
        %v2697 = vpop.permute.xlu0 %2696
        %2698 = vrot.lane.b32.xlu0 %v2547, 96
        %v2699 = vpop.permute.xlu0 %2698
        %2700 = vrot.lane.b32.xlu0 %v2557, 96
        %v2701 = vpop.permute.xlu0 %2700
        %2702 = vrot.lane.b32.xlu0 %v2567, 96
        %v2703 = vpop.permute.xlu0 %2702
        %2704 = vrot.lane.b32.xlu0 %v2577, 96
        %v2705 = vpop.permute.xlu0 %2704
        %2706 = vrot.lane.b32.xlu0 %v2587, 96
        %v2707 = vpop.permute.xlu0 %2706
        %2708 = vrot.lane.b32.xlu0 %v2597, 96
        %v2709 = vpop.permute.xlu0 %2708
        %2710 = vrot.lane.b32.xlu0 %v2607, 96
        %v2711 = vpop.permute.xlu0 %2710
        %2712 = vrot.lane.b32.xlu0 %v2617, 96
        %v2713 = vpop.permute.xlu0 %2712
        %2714 = vrot.lane.b32.xlu0 %v2627, 96
        %v2715 = vpop.permute.xlu0 %2714
        %2716 = vrot.lane.b32.xlu0 %v2637, 96
        %v2717 = vpop.permute.xlu0 %2716
        %2718 = vrot.lane.b32.xlu0 %v2647, 96
        %v2719 = vpop.permute.xlu0 %2718
        %2720 = vrot.lane.b32.xlu0 %v2657, 96
        %v2721 = vpop.permute.xlu0 %2720
        %2722 = vrot.lane.b32.xlu0 %v2667, 96
        %v2723 = vpop.permute.xlu0 %2722
        %vm2752 = vcmask 1044224
        %2753 = vst.msk [vmem:[#allocation3] sm:$0xf] %vm2752, %v2669
        %2754 = vst.msk [vmem:[#allocation3 + $0x8] sm:$0xf] %vm2752, %v2671
        %2755 = vst.msk [vmem:[#allocation3 + $0x10] sm:$0xf] %vm2752, %v2673
        %2756 = vst.msk [vmem:[#allocation3 + $0x18] sm:$0xf] %vm2752, %v2675
        %2757 = vst.msk [vmem:[#allocation3 + $0x20] sm:$0xf] %vm2752, %v2677
        %2758 = vst.msk [vmem:[#allocation3 + $0x28] sm:$0xf] %vm2752, %v2679
        %2759 = vst.msk [vmem:[#allocation3 + $0x30] sm:$0xf] %vm2752, %v2681
        %2760 = vst.msk [vmem:[#allocation3 + $0x38] sm:$0xf] %vm2752, %v2683
        %2761 = vst.msk [vmem:[#allocation3 + $0x40] sm:$0xf] %vm2752, %v2685
        %2762 = vst.msk [vmem:[#allocation3 + $0x48] sm:$0xf] %vm2752, %v2687
        %2763 = vst.msk [vmem:[#allocation3 + $0x50] sm:$0xf] %vm2752, %v2689
        %2764 = vst.msk [vmem:[#allocation3 + $0x58] sm:$0xf] %vm2752, %v2691
        %2765 = vst.msk [vmem:[#allocation3 + $0x60] sm:$0xf] %vm2752, %v2693
        %2766 = vst.msk [vmem:[#allocation3 + $0x68] sm:$0xf] %vm2752, %v2695
        %2767 = vst.msk [vmem:[#allocation3 + $0x70] sm:$0xf] %vm2752, %v2697
        %2768 = vst.msk [vmem:[#allocation3 + $0x78] sm:$0xf] %vm2752, %v2699
        %2769 = vst.msk [vmem:[#allocation3 + $0x80] sm:$0xf] %vm2752, %v2701
        %2770 = vst.msk [vmem:[#allocation3 + $0x88] sm:$0xf] %vm2752, %v2703
        %2771 = vst.msk [vmem:[#allocation3 + $0x90] sm:$0xf] %vm2752, %v2705
        %2772 = vst.msk [vmem:[#allocation3 + $0x98] sm:$0xf] %vm2752, %v2707
        %2773 = vst.msk [vmem:[#allocation3 + $0xa0] sm:$0xf] %vm2752, %v2709
        %2774 = vst.msk [vmem:[#allocation3 + $0xa8] sm:$0xf] %vm2752, %v2711
        %2775 = vst.msk [vmem:[#allocation3 + $0xb0] sm:$0xf] %vm2752, %v2713
        %2776 = vst.msk [vmem:[#allocation3 + $0xb8] sm:$0xf] %vm2752, %v2715
        %2777 = vst.msk [vmem:[#allocation3 + $0xc0] sm:$0xf] %vm2752, %v2717
        %2778 = vst.msk [vmem:[#allocation3 + $0xc8] sm:$0xf] %vm2752, %v2719
        %2779 = vst.msk [vmem:[#allocation3 + $0xd0] sm:$0xf] %vm2752, %v2721
        %2780 = vst.msk [vmem:[#allocation3 + $0xd8] sm:$0xf] %vm2752, %v2723
        %v2781 = vld [vmem:[#allocation2] sm:$0xc]
        %v2782 = vld [vmem:[#allocation2 + $0x4] sm:$0xf]
        %v2783 = vld [vmem:[#allocation2 + $0x8] sm:$0xf]
        %v2784 = vld [vmem:[#allocation2 + $0xc] sm:$0xf]
        %v2785 = vld [vmem:[#allocation2 + $0x10] sm:$0xf]
        %v2786 = vld [vmem:[#allocation2 + $0x14] sm:$0xf]
        %v2787 = vld [vmem:[#allocation2 + $0x18] sm:$0xf]
        %v2788 = vld [vmem:[#allocation2 + $0x1c] sm:$0xf]
        %v2789 = vld [vmem:[#allocation2 + $0x20] sm:$0xf]
        %v2790 = vld [vmem:[#allocation2 + $0x24] sm:$0xf]
        %v2791 = vld [vmem:[#allocation2 + $0x28] sm:$0xf]
        %v2792 = vld [vmem:[#allocation2 + $0x2c] sm:$0xf]
        %v2793 = vld [vmem:[#allocation2 + $0x30] sm:$0xf]
        %v2794 = vld [vmem:[#allocation2 + $0x34] sm:$0xf]
        %v2795 = vld [vmem:[#allocation2 + $0x38] sm:$0xf]
        %v2796 = vld [vmem:[#allocation2 + $0x3c] sm:$0xf]
        %v2797 = vld [vmem:[#allocation2 + $0x40] sm:$0xf]
        %v2798 = vld [vmem:[#allocation2 + $0x44] sm:$0xf]
        %v2799 = vld [vmem:[#allocation2 + $0x48] sm:$0xf]
        %v2800 = vld [vmem:[#allocation2 + $0x4c] sm:$0xf]
        %v2801 = vld [vmem:[#allocation2 + $0x50] sm:$0xf]
        %v2802 = vld [vmem:[#allocation2 + $0x54] sm:$0xf]
        %v2803 = vld [vmem:[#allocation2 + $0x58] sm:$0xf]
        %v2804 = vld [vmem:[#allocation2 + $0x5c] sm:$0xf]
        %v2805 = vld [vmem:[#allocation2 + $0x60] sm:$0xf]
        %v2806 = vld [vmem:[#allocation2 + $0x64] sm:$0xf]
        %v2807 = vld [vmem:[#allocation2 + $0x68] sm:$0xf]
        %v2808 = vld [vmem:[#allocation2 + $0x6c] sm:$0xf]
        %v2809 = vld [vmem:[#allocation2 + $0x70] sm:$0x3]
        %vm2839 = vcmask 1041408
        %vm2840 = vcmask 1045508
        %vm2841 = vmor %vm2839, %vm2840
        %v2842 = vrot.slane %v2781, 6
        %v2843 = vrot.slane %v2842, 4
        %v2844 = vrot.slane %v2782, 6
        %v2845 = vsel %vm2841, %v2843, %v2844
        %v2846 = vrot.slane %v2844, 4
        %v2847 = vrot.slane %v2783, 6
        %v2848 = vsel %vm2841, %v2846, %v2847
        %v2849 = vrot.slane %v2847, 4
        %v2850 = vrot.slane %v2784, 6
        %v2851 = vsel %vm2841, %v2849, %v2850
        %v2852 = vrot.slane %v2850, 4
        %v2853 = vrot.slane %v2785, 6
        %v2854 = vsel %vm2841, %v2852, %v2853
        %v2855 = vrot.slane %v2853, 4
        %v2856 = vrot.slane %v2786, 6
        %v2857 = vsel %vm2841, %v2855, %v2856
        %v2858 = vrot.slane %v2856, 4
        %v2859 = vrot.slane %v2787, 6
        %v2860 = vsel %vm2841, %v2858, %v2859
        %v2861 = vrot.slane %v2859, 4
        %v2862 = vrot.slane %v2788, 6
        %v2863 = vsel %vm2841, %v2861, %v2862
        %v2864 = vrot.slane %v2862, 4
        %v2865 = vrot.slane %v2789, 6
        %v2866 = vsel %vm2841, %v2864, %v2865
        %v2867 = vrot.slane %v2865, 4
        %v2868 = vrot.slane %v2790, 6
        %v2869 = vsel %vm2841, %v2867, %v2868
        %v2870 = vrot.slane %v2868, 4
        %v2871 = vrot.slane %v2791, 6
        %v2872 = vsel %vm2841, %v2870, %v2871
        %v2873 = vrot.slane %v2871, 4
        %v2874 = vrot.slane %v2792, 6
        %v2875 = vsel %vm2841, %v2873, %v2874
        %v2876 = vrot.slane %v2874, 4
        %v2877 = vrot.slane %v2793, 6
        %v2878 = vsel %vm2841, %v2876, %v2877
        %v2879 = vrot.slane %v2877, 4
        %v2880 = vrot.slane %v2794, 6
        %v2881 = vsel %vm2841, %v2879, %v2880
        %v2882 = vrot.slane %v2880, 4
        %v2883 = vrot.slane %v2795, 6
        %v2884 = vsel %vm2841, %v2882, %v2883
        %v2885 = vrot.slane %v2883, 4
        %v2886 = vrot.slane %v2796, 6
        %v2887 = vsel %vm2841, %v2885, %v2886
        %v2888 = vrot.slane %v2886, 4
        %v2889 = vrot.slane %v2797, 6
        %v2890 = vsel %vm2841, %v2888, %v2889
        %v2891 = vrot.slane %v2889, 4
        %v2892 = vrot.slane %v2798, 6
        %v2893 = vsel %vm2841, %v2891, %v2892
        %v2894 = vrot.slane %v2892, 4
        %v2895 = vrot.slane %v2799, 6
        %v2896 = vsel %vm2841, %v2894, %v2895
        %v2897 = vrot.slane %v2895, 4
        %v2898 = vrot.slane %v2800, 6
        %v2899 = vsel %vm2841, %v2897, %v2898
        %v2900 = vrot.slane %v2898, 4
        %v2901 = vrot.slane %v2801, 6
        %v2902 = vsel %vm2841, %v2900, %v2901
        %v2903 = vrot.slane %v2901, 4
        %v2904 = vrot.slane %v2802, 6
        %v2905 = vsel %vm2841, %v2903, %v2904
        %v2906 = vrot.slane %v2904, 4
        %v2907 = vrot.slane %v2803, 6
        %v2908 = vsel %vm2841, %v2906, %v2907
        %v2909 = vrot.slane %v2907, 4
        %v2910 = vrot.slane %v2804, 6
        %v2911 = vsel %vm2841, %v2909, %v2910
        %v2912 = vrot.slane %v2910, 4
        %v2913 = vrot.slane %v2805, 6
        %v2914 = vsel %vm2841, %v2912, %v2913
        %v2915 = vrot.slane %v2913, 4
        %v2916 = vrot.slane %v2806, 6
        %v2917 = vsel %vm2841, %v2915, %v2916
        %v2918 = vrot.slane %v2916, 4
        %v2919 = vrot.slane %v2807, 6
        %v2920 = vsel %vm2841, %v2918, %v2919
        %v2921 = vrot.slane %v2919, 4
        %v2922 = vrot.slane %v2808, 6
        %v2923 = vsel %vm2841, %v2921, %v2922
        %v2924 = vrot.slane %v2922, 4
        %v2925 = vrot.slane %v2809, 6
        %v2926 = vsel %vm2841, %v2924, %v2925
        %2955 = vst.msk [vmem:[#allocation3 + $0x4] sm:$0xf] %vm1571, %v2845
        %2956 = vst.msk [vmem:[#allocation3 + $0xc] sm:$0xf] %vm1571, %v2848
        %2957 = vst.msk [vmem:[#allocation3 + $0x14] sm:$0xf] %vm1571, %v2851
        %2958 = vst.msk [vmem:[#allocation3 + $0x1c] sm:$0xf] %vm1571, %v2854
        %2959 = vst.msk [vmem:[#allocation3 + $0x24] sm:$0xf] %vm1571, %v2857
        %2960 = vst.msk [vmem:[#allocation3 + $0x2c] sm:$0xf] %vm1571, %v2860
        %2961 = vst.msk [vmem:[#allocation3 + $0x34] sm:$0xf] %vm1571, %v2863
        %2962 = vst.msk [vmem:[#allocation3 + $0x3c] sm:$0xf] %vm1571, %v2866
        %2963 = vst.msk [vmem:[#allocation3 + $0x44] sm:$0xf] %vm1571, %v2869
        %2964 = vst.msk [vmem:[#allocation3 + $0x4c] sm:$0xf] %vm1571, %v2872
        %2965 = vst.msk [vmem:[#allocation3 + $0x54] sm:$0xf] %vm1571, %v2875
        %2966 = vst.msk [vmem:[#allocation3 + $0x5c] sm:$0xf] %vm1571, %v2878
        %2967 = vst.msk [vmem:[#allocation3 + $0x64] sm:$0xf] %vm1571, %v2881
        %2968 = vst.msk [vmem:[#allocation3 + $0x6c] sm:$0xf] %vm1571, %v2884
        %2969 = vst.msk [vmem:[#allocation3 + $0x74] sm:$0xf] %vm1571, %v2887
        %2970 = vst.msk [vmem:[#allocation3 + $0x7c] sm:$0xf] %vm1571, %v2890
        %2971 = vst.msk [vmem:[#allocation3 + $0x84] sm:$0xf] %vm1571, %v2893
        %2972 = vst.msk [vmem:[#allocation3 + $0x8c] sm:$0xf] %vm1571, %v2896
        %2973 = vst.msk [vmem:[#allocation3 + $0x94] sm:$0xf] %vm1571, %v2899
        %2974 = vst.msk [vmem:[#allocation3 + $0x9c] sm:$0xf] %vm1571, %v2902
        %2975 = vst.msk [vmem:[#allocation3 + $0xa4] sm:$0xf] %vm1571, %v2905
        %2976 = vst.msk [vmem:[#allocation3 + $0xac] sm:$0xf] %vm1571, %v2908
        %2977 = vst.msk [vmem:[#allocation3 + $0xb4] sm:$0xf] %vm1571, %v2911
        %2978 = vst.msk [vmem:[#allocation3 + $0xbc] sm:$0xf] %vm1571, %v2914
        %2979 = vst.msk [vmem:[#allocation3 + $0xc4] sm:$0xf] %vm1571, %v2917
        %2980 = vst.msk [vmem:[#allocation3 + $0xcc] sm:$0xf] %vm1571, %v2920
        %2981 = vst.msk [vmem:[#allocation3 + $0xd4] sm:$0xf] %vm1571, %v2923
        %2982 = vst.msk [vmem:[#allocation3 + $0xdc] sm:$0xf] %vm1571, %v2926
        %v2983 = vld [vmem:[#allocation3] sm:$0xff]
        %v2984 = vld [vmem:[#allocation3 + $0x8] sm:$0xff]
        %v2985 = vld [vmem:[#allocation3 + $0x10] sm:$0xff]
        %v2986 = vld [vmem:[#allocation3 + $0x18] sm:$0xff]
        %v2987 = vld [vmem:[#allocation3 + $0x20] sm:$0xff]
        %v2988 = vld [vmem:[#allocation3 + $0x28] sm:$0xff]
        %v2989 = vld [vmem:[#allocation3 + $0x30] sm:$0xff]
        %v2990 = vld [vmem:[#allocation3 + $0x38] sm:$0xff]
        %v2991 = vld [vmem:[#allocation3 + $0x40] sm:$0xff]
        %v2992 = vld [vmem:[#allocation3 + $0x48] sm:$0xff]
        %v2993 = vld [vmem:[#allocation3 + $0x50] sm:$0xff]
        %v2994 = vld [vmem:[#allocation3 + $0x58] sm:$0xff]
        %v2995 = vld [vmem:[#allocation3 + $0x60] sm:$0xff]
        %v2996 = vld [vmem:[#allocation3 + $0x68] sm:$0xff]
        %v2997 = vld [vmem:[#allocation3 + $0x70] sm:$0xff]
        %v2998 = vld [vmem:[#allocation3 + $0x78] sm:$0xff]
        %v2999 = vld [vmem:[#allocation3 + $0x80] sm:$0xff]
        %v3000 = vld [vmem:[#allocation3 + $0x88] sm:$0xff]
        %v3001 = vld [vmem:[#allocation3 + $0x90] sm:$0xff]
        %v3002 = vld [vmem:[#allocation3 + $0x98] sm:$0xff]
        %v3003 = vld [vmem:[%s3] sm:$0xf]
        %v3004 = vld [vmem:[%s3 + $0x4] sm:$0xf]
        %v3005 = vld [vmem:[%s3 + $0x8] sm:$0xf]
        %v3006 = vld [vmem:[%s3 + $0xc] sm:$0xf]
        %v3007 = vld [vmem:[%s3 + $0x10] sm:$0xf]
        %v3008 = vld [vmem:[%s3 + $0x14] sm:$0xf]
        %v3009 = vld [vmem:[%s3 + $0x18] sm:$0xf]
        %v3010 = vld [vmem:[%s3 + $0x1c] sm:$0xf]
        %v3011 = vld [vmem:[%s3 + $0x20] sm:$0xf]
        %v3012 = vld [vmem:[%s3 + $0x24] sm:$0xf]
        %v3013 = vld [vmem:[%s3 + $0x28] sm:$0xf]
        %v3014 = vld [vmem:[%s3 + $0x2c] sm:$0xf]
        %v3015 = vld [vmem:[%s3 + $0x30] sm:$0xf]
        %v3016 = vld [vmem:[%s3 + $0x34] sm:$0xf]
        %v3017 = vld [vmem:[%s3 + $0x38] sm:$0xf]
        %v3018 = vld [vmem:[%s3 + $0x3c] sm:$0xf]
        %v3019 = vld [vmem:[%s3 + $0x40] sm:$0xf]
        %v3020 = vld [vmem:[%s3 + $0x44] sm:$0xf]
        %v3021 = vld [vmem:[%s3 + $0x48] sm:$0xf]
        %v3022 = vld [vmem:[%s3 + $0x4c] sm:$0xf]
        %v3043 = vunpack.c.l.b16 %v2983
        %v3044 = vunpack.c.h.b16 %v2983
        %v3045 = vunpack.c.l.b16 %v2984
        %v3046 = vunpack.c.h.b16 %v2984
        %v3047 = vunpack.c.l.b16 %v2985
        %v3048 = vunpack.c.h.b16 %v2985
        %v3049 = vunpack.c.l.b16 %v2986
        %v3050 = vunpack.c.h.b16 %v2986
        %v3051 = vunpack.c.l.b16 %v2987
        %v3052 = vunpack.c.h.b16 %v2987
        %v3053 = vunpack.c.l.b16 %v2988
        %v3054 = vunpack.c.h.b16 %v2988
        %v3055 = vunpack.c.l.b16 %v2989
        %v3056 = vunpack.c.h.b16 %v2989
        %v3057 = vunpack.c.l.b16 %v2990
        %v3058 = vunpack.c.h.b16 %v2990
        %v3059 = vunpack.c.l.b16 %v2991
        %v3060 = vunpack.c.h.b16 %v2991
        %v3061 = vunpack.c.l.b16 %v2992
        %v3062 = vunpack.c.h.b16 %v2992
        %v3063 = vunpack.c.l.b16 %v2993
        %v3064 = vunpack.c.h.b16 %v2993
        %v3065 = vunpack.c.l.b16 %v2994
        %v3066 = vunpack.c.h.b16 %v2994
        %v3067 = vunpack.c.l.b16 %v2995
        %v3068 = vunpack.c.h.b16 %v2995
        %v3069 = vunpack.c.l.b16 %v2996
        %v3070 = vunpack.c.h.b16 %v2996
        %v3071 = vunpack.c.l.b16 %v2997
        %v3072 = vunpack.c.h.b16 %v2997
        %v3073 = vunpack.c.l.b16 %v2998
        %v3074 = vunpack.c.h.b16 %v2998
        %v3075 = vunpack.c.l.b16 %v2999
        %v3076 = vunpack.c.h.b16 %v2999
        %v3077 = vunpack.c.l.b16 %v3000
        %v3078 = vunpack.c.h.b16 %v3000
        %v3079 = vunpack.c.l.b16 %v3001
        %v3080 = vunpack.c.h.b16 %v3001
        %v3081 = vunpack.c.l.b16 %v3002
        %v3082 = vunpack.c.h.b16 %v3002
        %v3083 = vpack.c.b16 %v3045, %v3043
        %v3084 = vpack.c.b16 %v3046, %v3044
        %v3085 = vpack.c.b16 %v3049, %v3047
        %v3086 = vpack.c.b16 %v3050, %v3048
        %v3087 = vpack.c.b16 %v3053, %v3051
        %v3088 = vpack.c.b16 %v3054, %v3052
        %v3089 = vpack.c.b16 %v3057, %v3055
        %v3090 = vpack.c.b16 %v3058, %v3056
        %v3091 = vpack.c.b16 %v3061, %v3059
        %v3092 = vpack.c.b16 %v3062, %v3060
        %v3093 = vpack.c.b16 %v3065, %v3063
        %v3094 = vpack.c.b16 %v3066, %v3064
        %v3095 = vpack.c.b16 %v3069, %v3067
        %v3096 = vpack.c.b16 %v3070, %v3068
        %v3097 = vpack.c.b16 %v3073, %v3071
        %v3098 = vpack.c.b16 %v3074, %v3072
        %v3099 = vpack.c.b16 %v3077, %v3075
        %v3100 = vpack.c.b16 %v3078, %v3076
        %v3101 = vpack.c.b16 %v3081, %v3079
        %v3102 = vpack.c.b16 %v3082, %v3080
        %v3133 = vunpack.c.l.b16 %v3003
        %v3134 = vunpack.c.l.b16 %v3004
        %v3135 = vunpack.c.l.b16 %v3005
        %v3136 = vunpack.c.l.b16 %v3006
        %v3137 = vunpack.c.l.b16 %v3007
        %v3138 = vunpack.c.l.b16 %v3008
        %v3139 = vunpack.c.l.b16 %v3009
        %v3140 = vunpack.c.l.b16 %v3010
        %v3141 = vunpack.c.l.b16 %v3011
        %v3142 = vunpack.c.l.b16 %v3012
        %v3143 = vunpack.c.l.b16 %v3013
        %v3144 = vunpack.c.l.b16 %v3014
        %v3145 = vunpack.c.l.b16 %v3015
        %v3146 = vunpack.c.l.b16 %v3016
        %v3147 = vunpack.c.l.b16 %v3017
        %v3148 = vunpack.c.l.b16 %v3018
        %v3149 = vunpack.c.l.b16 %v3019
        %v3150 = vunpack.c.l.b16 %v3020
        %v3151 = vunpack.c.l.b16 %v3021
        %v3152 = vunpack.c.l.b16 %v3022
        %v3153 = vpack.c.b16 %v3134, %v3133
        %v3154 = vpack.c.b16 %v3136, %v3135
        %v3155 = vpack.c.b16 %v3138, %v3137
        %v3156 = vpack.c.b16 %v3140, %v3139
        %v3157 = vpack.c.b16 %v3142, %v3141
        %v3158 = vpack.c.b16 %v3144, %v3143
        %v3159 = vpack.c.b16 %v3146, %v3145
        %v3160 = vpack.c.b16 %v3148, %v3147
        %v3161 = vpack.c.b16 %v3150, %v3149
        %v3162 = vpack.c.b16 %v3152, %v3151
        %v3174 = vsel %vm508, %v3084, 0
        %v3177 = vsel %vm508, %v3086, 0
        %v3180 = vsel %vm508, %v3088, 0
        %v3183 = vsel %vm508, %v3090, 0
        %v3186 = vsel %vm508, %v3092, 0
        %v3189 = vsel %vm508, %v3094, 0
        %v3192 = vsel %vm508, %v3096, 0
        %v3195 = vsel %vm508, %v3098, 0
        %v3198 = vsel %vm508, %v3100, 0
        %v3201 = vsel %vm508, %v3102, 0
        %3203 = vmatpush.bf16.msra.mxu0 %v3160
        %3204 = vmatpush.bf16.msra.mxu0 %v3159
        %3205 = vmatpush.bf16.msra.mxu0 %v3158
        %3206 = vmatpush.bf16.msra.mxu0 %v3157
        %3207 = vmatpush.bf16.msra.mxu0 %v3156
        %3208 = vmatpush.bf16.msra.mxu0 %v3155
        %3209 = vmatpush.bf16.msra.mxu0 %v3154
        %3210 = vmatpush.bf16.msra.mxu0 %v3153
        %3211 = vmatmul.bf16.gmra.mxu0 %v3083
        %v3212 = vpop.f32.mrf.mxu0
        %v3213 = vadd.f32 0.0, %v3212
        %v3214 = vpop.f32.mrf.mxu0
        %v3215 = vadd.f32 0.0, %v3214
        %3216 = vmatmul.bf16.gmra.mxu0 %v3085
        %v3217 = vpop.f32.mrf.mxu0
        %v3218 = vadd.f32 0.0, %v3217
        %v3219 = vpop.f32.mrf.mxu0
        %v3220 = vadd.f32 0.0, %v3219
        %3221 = vmatmul.bf16.gmra.mxu0 %v3087
        %v3222 = vpop.f32.mrf.mxu0
        %v3223 = vadd.f32 0.0, %v3222
        %v3224 = vpop.f32.mrf.mxu0
        %v3225 = vadd.f32 0.0, %v3224
        %3226 = vmatmul.bf16.gmra.mxu0 %v3089
        %v3227 = vpop.f32.mrf.mxu0
        %v3228 = vadd.f32 0.0, %v3227
        %v3229 = vpop.f32.mrf.mxu0
        %v3230 = vadd.f32 0.0, %v3229
        %3231 = vmatmul.bf16.gmra.mxu0 %v3091
        %v3232 = vpop.f32.mrf.mxu0
        %v3233 = vadd.f32 0.0, %v3232
        %v3234 = vpop.f32.mrf.mxu0
        %v3235 = vadd.f32 0.0, %v3234
        %3236 = vmatmul.bf16.gmra.mxu0 %v3093
        %v3237 = vpop.f32.mrf.mxu0
        %v3238 = vadd.f32 0.0, %v3237
        %v3239 = vpop.f32.mrf.mxu0
        %v3240 = vadd.f32 0.0, %v3239
        %3241 = vmatmul.bf16.gmra.mxu0 %v3095
        %v3242 = vpop.f32.mrf.mxu0
        %v3243 = vadd.f32 0.0, %v3242
        %v3244 = vpop.f32.mrf.mxu0
        %v3245 = vadd.f32 0.0, %v3244
        %3246 = vmatmul.bf16.gmra.mxu0 %v3097
        %v3247 = vpop.f32.mrf.mxu0
        %v3248 = vadd.f32 0.0, %v3247
        %v3249 = vpop.f32.mrf.mxu0
        %v3250 = vadd.f32 0.0, %v3249
        %3251 = vmatmul.bf16.gmra.mxu0 %v3099
        %v3252 = vpop.f32.mrf.mxu0
        %v3253 = vadd.f32 0.0, %v3252
        %v3254 = vpop.f32.mrf.mxu0
        %v3255 = vadd.f32 0.0, %v3254
        %3256 = vmatmul.bf16.gmra.mxu0 %v3101
        %v3257 = vpop.f32.mrf.mxu0
        %v3258 = vadd.f32 0.0, %v3257
        %v3259 = vpop.f32.mrf.mxu0
        %v3260 = vadd.f32 0.0, %v3259
        %3261 = vdwg.mxu0
        %3262 = vmatpush.bf16.msra.mxu0 0
        %3263 = vmatpush.bf16.msra.mxu0 0
        %3264 = vmatpush.bf16.msra.mxu0 0
        %3265 = vmatpush.bf16.msra.mxu0 0
        %3266 = vmatpush.bf16.msra.mxu0 0
        %3267 = vmatpush.bf16.msra.mxu0 0
        %3268 = vmatpush.bf16.msra.mxu0 %v3162
        %3269 = vmatpush.bf16.msra.mxu0 %v3161
        %3270 = vmatmul.bf16.gmra.mxu0 %v3174
        %v3271 = vpop.f32.mrf.mxu0
        %v3272 = vadd.f32 %v3213, %v3271
        %v3273 = vpop.f32.mrf.mxu0
        %v3274 = vadd.f32 %v3215, %v3273
        %3275 = vmatmul.bf16.gmra.mxu0 %v3177
        %v3276 = vpop.f32.mrf.mxu0
        %v3277 = vadd.f32 %v3218, %v3276
        %v3278 = vpop.f32.mrf.mxu0
        %v3279 = vadd.f32 %v3220, %v3278
        %3280 = vmatmul.bf16.gmra.mxu0 %v3180
        %v3281 = vpop.f32.mrf.mxu0
        %v3282 = vadd.f32 %v3223, %v3281
        %v3283 = vpop.f32.mrf.mxu0
        %v3284 = vadd.f32 %v3225, %v3283
        %3285 = vmatmul.bf16.gmra.mxu0 %v3183
        %v3286 = vpop.f32.mrf.mxu0
        %v3287 = vadd.f32 %v3228, %v3286
        %v3288 = vpop.f32.mrf.mxu0
        %v3289 = vadd.f32 %v3230, %v3288
        %3290 = vmatmul.bf16.gmra.mxu0 %v3186
        %v3291 = vpop.f32.mrf.mxu0
        %v3292 = vadd.f32 %v3233, %v3291
        %v3293 = vpop.f32.mrf.mxu0
        %v3294 = vadd.f32 %v3235, %v3293
        %3295 = vmatmul.bf16.gmra.mxu0 %v3189
        %v3296 = vpop.f32.mrf.mxu0
        %v3297 = vadd.f32 %v3238, %v3296
        %v3298 = vpop.f32.mrf.mxu0
        %v3299 = vadd.f32 %v3240, %v3298
        %3300 = vmatmul.bf16.gmra.mxu0 %v3192
        %v3301 = vpop.f32.mrf.mxu0
        %v3302 = vadd.f32 %v3243, %v3301
        %v3303 = vpop.f32.mrf.mxu0
        %v3304 = vadd.f32 %v3245, %v3303
        %3305 = vmatmul.bf16.gmra.mxu0 %v3195
        %v3306 = vpop.f32.mrf.mxu0
        %v3307 = vadd.f32 %v3248, %v3306
        %v3308 = vpop.f32.mrf.mxu0
        %v3309 = vadd.f32 %v3250, %v3308
        %3310 = vmatmul.bf16.gmra.mxu0 %v3198
        %v3311 = vpop.f32.mrf.mxu0
        %v3312 = vadd.f32 %v3253, %v3311
        %v3313 = vpop.f32.mrf.mxu0
        %v3314 = vadd.f32 %v3255, %v3313
        %3315 = vmatmul.bf16.gmra.mxu0 %v3201
        %v3316 = vpop.f32.mrf.mxu0
        %v3317 = vadd.f32 %v3258, %v3316
        %v3318 = vpop.f32.mrf.mxu0
        %v3319 = vadd.f32 %v3260, %v3318
        %3320 = vdwg.mxu0
        %v3321 = vadd.f32 %v371, %v3272
        %v3322 = vadd.f32 %v371, %v3274
        %v3323 = vadd.f32 %v371, %v3277
        %v3324 = vadd.f32 %v371, %v3279
        %v3325 = vadd.f32 %v371, %v3282
        %v3326 = vadd.f32 %v371, %v3284
        %v3327 = vadd.f32 %v371, %v3287
        %v3328 = vadd.f32 %v371, %v3289
        %v3329 = vadd.f32 %v371, %v3292
        %v3330 = vadd.f32 %v371, %v3294
        %v3331 = vadd.f32 %v371, %v3297
        %v3332 = vadd.f32 %v371, %v3299
        %v3333 = vadd.f32 %v371, %v3302
        %v3334 = vadd.f32 %v371, %v3304
        %v3335 = vadd.f32 %v371, %v3307
        %v3336 = vadd.f32 %v371, %v3309
        %v3337 = vadd.f32 %v371, %v3312
        %v3338 = vadd.f32 %v371, %v3314
        %v3339 = vadd.f32 %v371, %v3317
        %v3340 = vadd.f32 %v371, %v3319
        %v3341 = vld [vmem:[#allocation3 + $0x10] sm:$0xff]
        %v3342 = vld [vmem:[#allocation3 + $0x18] sm:$0xff]
        %v3343 = vld [vmem:[#allocation3 + $0x20] sm:$0xff]
        %v3344 = vld [vmem:[#allocation3 + $0x28] sm:$0xff]
        %v3345 = vld [vmem:[#allocation3 + $0x30] sm:$0xff]
        %v3346 = vld [vmem:[#allocation3 + $0x38] sm:$0xff]
        %v3347 = vld [vmem:[#allocation3 + $0x40] sm:$0xff]
        %v3348 = vld [vmem:[#allocation3 + $0x48] sm:$0xff]
        %v3349 = vld [vmem:[#allocation3 + $0x50] sm:$0xff]
        %v3350 = vld [vmem:[#allocation3 + $0x58] sm:$0xff]
        %v3351 = vld [vmem:[#allocation3 + $0x60] sm:$0xff]
        %v3352 = vld [vmem:[#allocation3 + $0x68] sm:$0xff]
        %v3353 = vld [vmem:[#allocation3 + $0x70] sm:$0xff]
        %v3354 = vld [vmem:[#allocation3 + $0x78] sm:$0xff]
        %v3355 = vld [vmem:[#allocation3 + $0x80] sm:$0xff]
        %v3356 = vld [vmem:[#allocation3 + $0x88] sm:$0xff]
        %v3357 = vld [vmem:[#allocation3 + $0x90] sm:$0xff]
        %v3358 = vld [vmem:[#allocation3 + $0x98] sm:$0xff]
        %v3359 = vld [vmem:[#allocation3 + $0xa0] sm:$0xff]
        %v3360 = vld [vmem:[#allocation3 + $0xa8] sm:$0xff]
        %v3361 = vld [vmem:[%s3 + $0x50] sm:$0xf]
        %v3362 = vld [vmem:[%s3 + $0x54] sm:$0xf]
        %v3363 = vld [vmem:[%s3 + $0x58] sm:$0xf]
        %v3364 = vld [vmem:[%s3 + $0x5c] sm:$0xf]
        %v3365 = vld [vmem:[%s3 + $0x60] sm:$0xf]
        %v3366 = vld [vmem:[%s3 + $0x64] sm:$0xf]
        %v3367 = vld [vmem:[%s3 + $0x68] sm:$0xf]
        %v3368 = vld [vmem:[%s3 + $0x6c] sm:$0xf]
        %v3369 = vld [vmem:[%s3 + $0x70] sm:$0xf]
        %v3370 = vld [vmem:[%s3 + $0x74] sm:$0xf]
        %v3371 = vld [vmem:[%s3 + $0x78] sm:$0xf]
        %v3372 = vld [vmem:[%s3 + $0x7c] sm:$0xf]
        %v3373 = vld [vmem:[%s3 + $0x80] sm:$0xf]
        %v3374 = vld [vmem:[%s3 + $0x84] sm:$0xf]
        %v3375 = vld [vmem:[%s3 + $0x88] sm:$0xf]
        %v3376 = vld [vmem:[%s3 + $0x8c] sm:$0xf]
        %v3377 = vld [vmem:[%s3 + $0x90] sm:$0xf]
        %v3378 = vld [vmem:[%s3 + $0x94] sm:$0xf]
        %v3379 = vld [vmem:[%s3 + $0x98] sm:$0xf]
        %v3380 = vld [vmem:[%s3 + $0x9c] sm:$0xf]
        %v3401 = vunpack.c.l.b16 %v3341
        %v3402 = vunpack.c.h.b16 %v3341
        %v3403 = vunpack.c.l.b16 %v3342
        %v3404 = vunpack.c.h.b16 %v3342
        %v3405 = vunpack.c.l.b16 %v3343
        %v3406 = vunpack.c.h.b16 %v3343
        %v3407 = vunpack.c.l.b16 %v3344
        %v3408 = vunpack.c.h.b16 %v3344
        %v3409 = vunpack.c.l.b16 %v3345
        %v3410 = vunpack.c.h.b16 %v3345
        %v3411 = vunpack.c.l.b16 %v3346
        %v3412 = vunpack.c.h.b16 %v3346
        %v3413 = vunpack.c.l.b16 %v3347
        %v3414 = vunpack.c.h.b16 %v3347
        %v3415 = vunpack.c.l.b16 %v3348
        %v3416 = vunpack.c.h.b16 %v3348
        %v3417 = vunpack.c.l.b16 %v3349
        %v3418 = vunpack.c.h.b16 %v3349
        %v3419 = vunpack.c.l.b16 %v3350
        %v3420 = vunpack.c.h.b16 %v3350
        %v3421 = vunpack.c.l.b16 %v3351
        %v3422 = vunpack.c.h.b16 %v3351
        %v3423 = vunpack.c.l.b16 %v3352
        %v3424 = vunpack.c.h.b16 %v3352
        %v3425 = vunpack.c.l.b16 %v3353
        %v3426 = vunpack.c.h.b16 %v3353
        %v3427 = vunpack.c.l.b16 %v3354
        %v3428 = vunpack.c.h.b16 %v3354
        %v3429 = vunpack.c.l.b16 %v3355
        %v3430 = vunpack.c.h.b16 %v3355
        %v3431 = vunpack.c.l.b16 %v3356
        %v3432 = vunpack.c.h.b16 %v3356
        %v3433 = vunpack.c.l.b16 %v3357
        %v3434 = vunpack.c.h.b16 %v3357
        %v3435 = vunpack.c.l.b16 %v3358
        %v3436 = vunpack.c.h.b16 %v3358
        %v3437 = vunpack.c.l.b16 %v3359
        %v3438 = vunpack.c.h.b16 %v3359
        %v3439 = vunpack.c.l.b16 %v3360
        %v3440 = vunpack.c.h.b16 %v3360
        %v3441 = vpack.c.b16 %v3403, %v3401
        %v3442 = vpack.c.b16 %v3404, %v3402
        %v3443 = vpack.c.b16 %v3407, %v3405
        %v3444 = vpack.c.b16 %v3408, %v3406
        %v3445 = vpack.c.b16 %v3411, %v3409
        %v3446 = vpack.c.b16 %v3412, %v3410
        %v3447 = vpack.c.b16 %v3415, %v3413
        %v3448 = vpack.c.b16 %v3416, %v3414
        %v3449 = vpack.c.b16 %v3419, %v3417
        %v3450 = vpack.c.b16 %v3420, %v3418
        %v3451 = vpack.c.b16 %v3423, %v3421
        %v3452 = vpack.c.b16 %v3424, %v3422
        %v3453 = vpack.c.b16 %v3427, %v3425
        %v3454 = vpack.c.b16 %v3428, %v3426
        %v3455 = vpack.c.b16 %v3431, %v3429
        %v3456 = vpack.c.b16 %v3432, %v3430
        %v3457 = vpack.c.b16 %v3435, %v3433
        %v3458 = vpack.c.b16 %v3436, %v3434
        %v3459 = vpack.c.b16 %v3439, %v3437
        %v3460 = vpack.c.b16 %v3440, %v3438
        %v3491 = vunpack.c.l.b16 %v3361
        %v3492 = vunpack.c.l.b16 %v3362
        %v3493 = vunpack.c.l.b16 %v3363
        %v3494 = vunpack.c.l.b16 %v3364
        %v3495 = vunpack.c.l.b16 %v3365
        %v3496 = vunpack.c.l.b16 %v3366
        %v3497 = vunpack.c.l.b16 %v3367
        %v3498 = vunpack.c.l.b16 %v3368
        %v3499 = vunpack.c.l.b16 %v3369
        %v3500 = vunpack.c.l.b16 %v3370
        %v3501 = vunpack.c.l.b16 %v3371
        %v3502 = vunpack.c.l.b16 %v3372
        %v3503 = vunpack.c.l.b16 %v3373
        %v3504 = vunpack.c.l.b16 %v3374
        %v3505 = vunpack.c.l.b16 %v3375
        %v3506 = vunpack.c.l.b16 %v3376
        %v3507 = vunpack.c.l.b16 %v3377
        %v3508 = vunpack.c.l.b16 %v3378
        %v3509 = vunpack.c.l.b16 %v3379
        %v3510 = vunpack.c.l.b16 %v3380
        %v3511 = vpack.c.b16 %v3492, %v3491
        %v3512 = vpack.c.b16 %v3494, %v3493
        %v3513 = vpack.c.b16 %v3496, %v3495
        %v3514 = vpack.c.b16 %v3498, %v3497
        %v3515 = vpack.c.b16 %v3500, %v3499
        %v3516 = vpack.c.b16 %v3502, %v3501
        %v3517 = vpack.c.b16 %v3504, %v3503
        %v3518 = vpack.c.b16 %v3506, %v3505
        %v3519 = vpack.c.b16 %v3508, %v3507
        %v3520 = vpack.c.b16 %v3510, %v3509
        %v3532 = vsel %vm508, %v3442, 0
        %v3535 = vsel %vm508, %v3444, 0
        %v3538 = vsel %vm508, %v3446, 0
        %v3541 = vsel %vm508, %v3448, 0
        %v3544 = vsel %vm508, %v3450, 0
        %v3547 = vsel %vm508, %v3452, 0
        %v3550 = vsel %vm508, %v3454, 0
        %v3553 = vsel %vm508, %v3456, 0
        %v3556 = vsel %vm508, %v3458, 0
        %v3559 = vsel %vm508, %v3460, 0
        %3561 = vmatpush.bf16.msra.mxu0 %v3518
        %3562 = vmatpush.bf16.msra.mxu0 %v3517
        %3563 = vmatpush.bf16.msra.mxu0 %v3516
        %3564 = vmatpush.bf16.msra.mxu0 %v3515
        %3565 = vmatpush.bf16.msra.mxu0 %v3514
        %3566 = vmatpush.bf16.msra.mxu0 %v3513
        %3567 = vmatpush.bf16.msra.mxu0 %v3512
        %3568 = vmatpush.bf16.msra.mxu0 %v3511
        %3569 = vmatmul.bf16.gmra.mxu0 %v3441
        %v3570 = vpop.f32.mrf.mxu0
        %v3571 = vadd.f32 0.0, %v3570
        %v3572 = vpop.f32.mrf.mxu0
        %v3573 = vadd.f32 0.0, %v3572
        %3574 = vmatmul.bf16.gmra.mxu0 %v3443
        %v3575 = vpop.f32.mrf.mxu0
        %v3576 = vadd.f32 0.0, %v3575
        %v3577 = vpop.f32.mrf.mxu0
        %v3578 = vadd.f32 0.0, %v3577
        %3579 = vmatmul.bf16.gmra.mxu0 %v3445
        %v3580 = vpop.f32.mrf.mxu0
        %v3581 = vadd.f32 0.0, %v3580
        %v3582 = vpop.f32.mrf.mxu0
        %v3583 = vadd.f32 0.0, %v3582
        %3584 = vmatmul.bf16.gmra.mxu0 %v3447
        %v3585 = vpop.f32.mrf.mxu0
        %v3586 = vadd.f32 0.0, %v3585
        %v3587 = vpop.f32.mrf.mxu0
        %v3588 = vadd.f32 0.0, %v3587
        %3589 = vmatmul.bf16.gmra.mxu0 %v3449
        %v3590 = vpop.f32.mrf.mxu0
        %v3591 = vadd.f32 0.0, %v3590
        %v3592 = vpop.f32.mrf.mxu0
        %v3593 = vadd.f32 0.0, %v3592
        %3594 = vmatmul.bf16.gmra.mxu0 %v3451
        %v3595 = vpop.f32.mrf.mxu0
        %v3596 = vadd.f32 0.0, %v3595
        %v3597 = vpop.f32.mrf.mxu0
        %v3598 = vadd.f32 0.0, %v3597
        %3599 = vmatmul.bf16.gmra.mxu0 %v3453
        %v3600 = vpop.f32.mrf.mxu0
        %v3601 = vadd.f32 0.0, %v3600
        %v3602 = vpop.f32.mrf.mxu0
        %v3603 = vadd.f32 0.0, %v3602
        %3604 = vmatmul.bf16.gmra.mxu0 %v3455
        %v3605 = vpop.f32.mrf.mxu0
        %v3606 = vadd.f32 0.0, %v3605
        %v3607 = vpop.f32.mrf.mxu0
        %v3608 = vadd.f32 0.0, %v3607
        %3609 = vmatmul.bf16.gmra.mxu0 %v3457
        %v3610 = vpop.f32.mrf.mxu0
        %v3611 = vadd.f32 0.0, %v3610
        %v3612 = vpop.f32.mrf.mxu0
        %v3613 = vadd.f32 0.0, %v3612
        %3614 = vmatmul.bf16.gmra.mxu0 %v3459
        %v3615 = vpop.f32.mrf.mxu0
        %v3616 = vadd.f32 0.0, %v3615
        %v3617 = vpop.f32.mrf.mxu0
        %v3618 = vadd.f32 0.0, %v3617
        %3619 = vdwg.mxu0
        %3620 = vmatpush.bf16.msra.mxu0 0
        %3621 = vmatpush.bf16.msra.mxu0 0
        %3622 = vmatpush.bf16.msra.mxu0 0
        %3623 = vmatpush.bf16.msra.mxu0 0
        %3624 = vmatpush.bf16.msra.mxu0 0
        %3625 = vmatpush.bf16.msra.mxu0 0
        %3626 = vmatpush.bf16.msra.mxu0 %v3520
        %3627 = vmatpush.bf16.msra.mxu0 %v3519
        %3628 = vmatmul.bf16.gmra.mxu0 %v3532
        %v3629 = vpop.f32.mrf.mxu0
        %v3630 = vadd.f32 %v3571, %v3629
        %v3631 = vpop.f32.mrf.mxu0
        %v3632 = vadd.f32 %v3573, %v3631
        %3633 = vmatmul.bf16.gmra.mxu0 %v3535
        %v3634 = vpop.f32.mrf.mxu0
        %v3635 = vadd.f32 %v3576, %v3634
        %v3636 = vpop.f32.mrf.mxu0
        %v3637 = vadd.f32 %v3578, %v3636
        %3638 = vmatmul.bf16.gmra.mxu0 %v3538
        %v3639 = vpop.f32.mrf.mxu0
        %v3640 = vadd.f32 %v3581, %v3639
        %v3641 = vpop.f32.mrf.mxu0
        %v3642 = vadd.f32 %v3583, %v3641
        %3643 = vmatmul.bf16.gmra.mxu0 %v3541
        %v3644 = vpop.f32.mrf.mxu0
        %v3645 = vadd.f32 %v3586, %v3644
        %v3646 = vpop.f32.mrf.mxu0
        %v3647 = vadd.f32 %v3588, %v3646
        %3648 = vmatmul.bf16.gmra.mxu0 %v3544
        %v3649 = vpop.f32.mrf.mxu0
        %v3650 = vadd.f32 %v3591, %v3649
        %v3651 = vpop.f32.mrf.mxu0
        %v3652 = vadd.f32 %v3593, %v3651
        %3653 = vmatmul.bf16.gmra.mxu0 %v3547
        %v3654 = vpop.f32.mrf.mxu0
        %v3655 = vadd.f32 %v3596, %v3654
        %v3656 = vpop.f32.mrf.mxu0
        %v3657 = vadd.f32 %v3598, %v3656
        %3658 = vmatmul.bf16.gmra.mxu0 %v3550
        %v3659 = vpop.f32.mrf.mxu0
        %v3660 = vadd.f32 %v3601, %v3659
        %v3661 = vpop.f32.mrf.mxu0
        %v3662 = vadd.f32 %v3603, %v3661
        %3663 = vmatmul.bf16.gmra.mxu0 %v3553
        %v3664 = vpop.f32.mrf.mxu0
        %v3665 = vadd.f32 %v3606, %v3664
        %v3666 = vpop.f32.mrf.mxu0
        %v3667 = vadd.f32 %v3608, %v3666
        %3668 = vmatmul.bf16.gmra.mxu0 %v3556
        %v3669 = vpop.f32.mrf.mxu0
        %v3670 = vadd.f32 %v3611, %v3669
        %v3671 = vpop.f32.mrf.mxu0
        %v3672 = vadd.f32 %v3613, %v3671
        %3673 = vmatmul.bf16.gmra.mxu0 %v3559
        %v3674 = vpop.f32.mrf.mxu0
        %v3675 = vadd.f32 %v3616, %v3674
        %v3676 = vpop.f32.mrf.mxu0
        %v3677 = vadd.f32 %v3618, %v3676
        %3678 = vdwg.mxu0
        %v3679 = vadd.f32 %v3321, %v3630
        %v3680 = vadd.f32 %v3322, %v3632
        %v3681 = vadd.f32 %v3323, %v3635
        %v3682 = vadd.f32 %v3324, %v3637
        %v3683 = vadd.f32 %v3325, %v3640
        %v3684 = vadd.f32 %v3326, %v3642
        %v3685 = vadd.f32 %v3327, %v3645
        %v3686 = vadd.f32 %v3328, %v3647
        %v3687 = vadd.f32 %v3329, %v3650
        %v3688 = vadd.f32 %v3330, %v3652
        %v3689 = vadd.f32 %v3331, %v3655
        %v3690 = vadd.f32 %v3332, %v3657
        %v3691 = vadd.f32 %v3333, %v3660
        %v3692 = vadd.f32 %v3334, %v3662
        %v3693 = vadd.f32 %v3335, %v3665
        %v3694 = vadd.f32 %v3336, %v3667
        %v3695 = vadd.f32 %v3337, %v3670
        %v3696 = vadd.f32 %v3338, %v3672
        %v3697 = vadd.f32 %v3339, %v3675
        %v3698 = vadd.f32 %v3340, %v3677
        %v3699 = vld [vmem:[#allocation3 + $0x20] sm:$0xff]
        %v3700 = vld [vmem:[#allocation3 + $0x28] sm:$0xff]
        %v3701 = vld [vmem:[#allocation3 + $0x30] sm:$0xff]
        %v3702 = vld [vmem:[#allocation3 + $0x38] sm:$0xff]
        %v3703 = vld [vmem:[#allocation3 + $0x40] sm:$0xff]
        %v3704 = vld [vmem:[#allocation3 + $0x48] sm:$0xff]
        %v3705 = vld [vmem:[#allocation3 + $0x50] sm:$0xff]
        %v3706 = vld [vmem:[#allocation3 + $0x58] sm:$0xff]
        %v3707 = vld [vmem:[#allocation3 + $0x60] sm:$0xff]
        %v3708 = vld [vmem:[#allocation3 + $0x68] sm:$0xff]
        %v3709 = vld [vmem:[#allocation3 + $0x70] sm:$0xff]
        %v3710 = vld [vmem:[#allocation3 + $0x78] sm:$0xff]
        %v3711 = vld [vmem:[#allocation3 + $0x80] sm:$0xff]
        %v3712 = vld [vmem:[#allocation3 + $0x88] sm:$0xff]
        %v3713 = vld [vmem:[#allocation3 + $0x90] sm:$0xff]
        %v3714 = vld [vmem:[#allocation3 + $0x98] sm:$0xff]
        %v3715 = vld [vmem:[#allocation3 + $0xa0] sm:$0xff]
        %v3716 = vld [vmem:[#allocation3 + $0xa8] sm:$0xff]
        %v3717 = vld [vmem:[#allocation3 + $0xb0] sm:$0xff]
        %v3718 = vld [vmem:[#allocation3 + $0xb8] sm:$0xff]
        %v3719 = vld [vmem:[%s3 + $0xa0] sm:$0xf]
        %v3720 = vld [vmem:[%s3 + $0xa4] sm:$0xf]
        %v3721 = vld [vmem:[%s3 + $0xa8] sm:$0xf]
        %v3722 = vld [vmem:[%s3 + $0xac] sm:$0xf]
        %v3723 = vld [vmem:[%s3 + $0xb0] sm:$0xf]
        %v3724 = vld [vmem:[%s3 + $0xb4] sm:$0xf]
        %v3725 = vld [vmem:[%s3 + $0xb8] sm:$0xf]
        %v3726 = vld [vmem:[%s3 + $0xbc] sm:$0xf]
        %v3727 = vld [vmem:[%s3 + $0xc0] sm:$0xf]
        %v3728 = vld [vmem:[%s3 + $0xc4] sm:$0xf]
        %v3729 = vld [vmem:[%s3 + $0xc8] sm:$0xf]
        %v3730 = vld [vmem:[%s3 + $0xcc] sm:$0xf]
        %v3731 = vld [vmem:[%s3 + $0xd0] sm:$0xf]
        %v3732 = vld [vmem:[%s3 + $0xd4] sm:$0xf]
        %v3733 = vld [vmem:[%s3 + $0xd8] sm:$0xf]
        %v3734 = vld [vmem:[%s3 + $0xdc] sm:$0xf]
        %v3735 = vld [vmem:[%s3 + $0xe0] sm:$0xf]
        %v3736 = vld [vmem:[%s3 + $0xe4] sm:$0xf]
        %v3737 = vld [vmem:[%s3 + $0xe8] sm:$0xf]
        %v3738 = vld [vmem:[%s3 + $0xec] sm:$0xf]
        %v3759 = vunpack.c.l.b16 %v3699
        %v3760 = vunpack.c.h.b16 %v3699
        %v3761 = vunpack.c.l.b16 %v3700
        %v3762 = vunpack.c.h.b16 %v3700
        %v3763 = vunpack.c.l.b16 %v3701
        %v3764 = vunpack.c.h.b16 %v3701
        %v3765 = vunpack.c.l.b16 %v3702
        %v3766 = vunpack.c.h.b16 %v3702
        %v3767 = vunpack.c.l.b16 %v3703
        %v3768 = vunpack.c.h.b16 %v3703
        %v3769 = vunpack.c.l.b16 %v3704
        %v3770 = vunpack.c.h.b16 %v3704
        %v3771 = vunpack.c.l.b16 %v3705
        %v3772 = vunpack.c.h.b16 %v3705
        %v3773 = vunpack.c.l.b16 %v3706
        %v3774 = vunpack.c.h.b16 %v3706
        %v3775 = vunpack.c.l.b16 %v3707
        %v3776 = vunpack.c.h.b16 %v3707
        %v3777 = vunpack.c.l.b16 %v3708
        %v3778 = vunpack.c.h.b16 %v3708
        %v3779 = vunpack.c.l.b16 %v3709
        %v3780 = vunpack.c.h.b16 %v3709
        %v3781 = vunpack.c.l.b16 %v3710
        %v3782 = vunpack.c.h.b16 %v3710
        %v3783 = vunpack.c.l.b16 %v3711
        %v3784 = vunpack.c.h.b16 %v3711
        %v3785 = vunpack.c.l.b16 %v3712
        %v3786 = vunpack.c.h.b16 %v3712
        %v3787 = vunpack.c.l.b16 %v3713
        %v3788 = vunpack.c.h.b16 %v3713
        %v3789 = vunpack.c.l.b16 %v3714
        %v3790 = vunpack.c.h.b16 %v3714
        %v3791 = vunpack.c.l.b16 %v3715
        %v3792 = vunpack.c.h.b16 %v3715
        %v3793 = vunpack.c.l.b16 %v3716
        %v3794 = vunpack.c.h.b16 %v3716
        %v3795 = vunpack.c.l.b16 %v3717
        %v3796 = vunpack.c.h.b16 %v3717
        %v3797 = vunpack.c.l.b16 %v3718
        %v3798 = vunpack.c.h.b16 %v3718
        %v3799 = vpack.c.b16 %v3761, %v3759
        %v3800 = vpack.c.b16 %v3762, %v3760
        %v3801 = vpack.c.b16 %v3765, %v3763
        %v3802 = vpack.c.b16 %v3766, %v3764
        %v3803 = vpack.c.b16 %v3769, %v3767
        %v3804 = vpack.c.b16 %v3770, %v3768
        %v3805 = vpack.c.b16 %v3773, %v3771
        %v3806 = vpack.c.b16 %v3774, %v3772
        %v3807 = vpack.c.b16 %v3777, %v3775
        %v3808 = vpack.c.b16 %v3778, %v3776
        %v3809 = vpack.c.b16 %v3781, %v3779
        %v3810 = vpack.c.b16 %v3782, %v3780
        %v3811 = vpack.c.b16 %v3785, %v3783
        %v3812 = vpack.c.b16 %v3786, %v3784
        %v3813 = vpack.c.b16 %v3789, %v3787
        %v3814 = vpack.c.b16 %v3790, %v3788
        %v3815 = vpack.c.b16 %v3793, %v3791
        %v3816 = vpack.c.b16 %v3794, %v3792
        %v3817 = vpack.c.b16 %v3797, %v3795
        %v3818 = vpack.c.b16 %v3798, %v3796
        %v3849 = vunpack.c.l.b16 %v3719
        %v3850 = vunpack.c.l.b16 %v3720
        %v3851 = vunpack.c.l.b16 %v3721
        %v3852 = vunpack.c.l.b16 %v3722
        %v3853 = vunpack.c.l.b16 %v3723
        %v3854 = vunpack.c.l.b16 %v3724
        %v3855 = vunpack.c.l.b16 %v3725
        %v3856 = vunpack.c.l.b16 %v3726
        %v3857 = vunpack.c.l.b16 %v3727
        %v3858 = vunpack.c.l.b16 %v3728
        %v3859 = vunpack.c.l.b16 %v3729
        %v3860 = vunpack.c.l.b16 %v3730
        %v3861 = vunpack.c.l.b16 %v3731
        %v3862 = vunpack.c.l.b16 %v3732
        %v3863 = vunpack.c.l.b16 %v3733
        %v3864 = vunpack.c.l.b16 %v3734
        %v3865 = vunpack.c.l.b16 %v3735
        %v3866 = vunpack.c.l.b16 %v3736
        %v3867 = vunpack.c.l.b16 %v3737
        %v3868 = vunpack.c.l.b16 %v3738
        %v3869 = vpack.c.b16 %v3850, %v3849
        %v3870 = vpack.c.b16 %v3852, %v3851
        %v3871 = vpack.c.b16 %v3854, %v3853
        %v3872 = vpack.c.b16 %v3856, %v3855
        %v3873 = vpack.c.b16 %v3858, %v3857
        %v3874 = vpack.c.b16 %v3860, %v3859
        %v3875 = vpack.c.b16 %v3862, %v3861
        %v3876 = vpack.c.b16 %v3864, %v3863
        %v3877 = vpack.c.b16 %v3866, %v3865
        %v3878 = vpack.c.b16 %v3868, %v3867
        %v3890 = vsel %vm508, %v3800, 0
        %v3893 = vsel %vm508, %v3802, 0
        %v3896 = vsel %vm508, %v3804, 0
        %v3899 = vsel %vm508, %v3806, 0
        %v3902 = vsel %vm508, %v3808, 0
        %v3905 = vsel %vm508, %v3810, 0
        %v3908 = vsel %vm508, %v3812, 0
        %v3911 = vsel %vm508, %v3814, 0
        %v3914 = vsel %vm508, %v3816, 0
        %v3917 = vsel %vm508, %v3818, 0
        %3919 = vmatpush.bf16.msra.mxu0 %v3876
        %3920 = vmatpush.bf16.msra.mxu0 %v3875
        %3921 = vmatpush.bf16.msra.mxu0 %v3874
        %3922 = vmatpush.bf16.msra.mxu0 %v3873
        %3923 = vmatpush.bf16.msra.mxu0 %v3872
        %3924 = vmatpush.bf16.msra.mxu0 %v3871
        %3925 = vmatpush.bf16.msra.mxu0 %v3870
        %3926 = vmatpush.bf16.msra.mxu0 %v3869
        %3927 = vmatmul.bf16.gmra.mxu0 %v3799
        %v3928 = vpop.f32.mrf.mxu0
        %v3929 = vadd.f32 0.0, %v3928
        %v3930 = vpop.f32.mrf.mxu0
        %v3931 = vadd.f32 0.0, %v3930
        %3932 = vmatmul.bf16.gmra.mxu0 %v3801
        %v3933 = vpop.f32.mrf.mxu0
        %v3934 = vadd.f32 0.0, %v3933
        %v3935 = vpop.f32.mrf.mxu0
        %v3936 = vadd.f32 0.0, %v3935
        %3937 = vmatmul.bf16.gmra.mxu0 %v3803
        %v3938 = vpop.f32.mrf.mxu0
        %v3939 = vadd.f32 0.0, %v3938
        %v3940 = vpop.f32.mrf.mxu0
        %v3941 = vadd.f32 0.0, %v3940
        %3942 = vmatmul.bf16.gmra.mxu0 %v3805
        %v3943 = vpop.f32.mrf.mxu0
        %v3944 = vadd.f32 0.0, %v3943
        %v3945 = vpop.f32.mrf.mxu0
        %v3946 = vadd.f32 0.0, %v3945
        %3947 = vmatmul.bf16.gmra.mxu0 %v3807
        %v3948 = vpop.f32.mrf.mxu0
        %v3949 = vadd.f32 0.0, %v3948
        %v3950 = vpop.f32.mrf.mxu0
        %v3951 = vadd.f32 0.0, %v3950
        %3952 = vmatmul.bf16.gmra.mxu0 %v3809
        %v3953 = vpop.f32.mrf.mxu0
        %v3954 = vadd.f32 0.0, %v3953
        %v3955 = vpop.f32.mrf.mxu0
        %v3956 = vadd.f32 0.0, %v3955
        %3957 = vmatmul.bf16.gmra.mxu0 %v3811
        %v3958 = vpop.f32.mrf.mxu0
        %v3959 = vadd.f32 0.0, %v3958
        %v3960 = vpop.f32.mrf.mxu0
        %v3961 = vadd.f32 0.0, %v3960
        %3962 = vmatmul.bf16.gmra.mxu0 %v3813
        %v3963 = vpop.f32.mrf.mxu0
        %v3964 = vadd.f32 0.0, %v3963
        %v3965 = vpop.f32.mrf.mxu0
        %v3966 = vadd.f32 0.0, %v3965
        %3967 = vmatmul.bf16.gmra.mxu0 %v3815
        %v3968 = vpop.f32.mrf.mxu0
        %v3969 = vadd.f32 0.0, %v3968
        %v3970 = vpop.f32.mrf.mxu0
        %v3971 = vadd.f32 0.0, %v3970
        %3972 = vmatmul.bf16.gmra.mxu0 %v3817
        %v3973 = vpop.f32.mrf.mxu0
        %v3974 = vadd.f32 0.0, %v3973
        %v3975 = vpop.f32.mrf.mxu0
        %v3976 = vadd.f32 0.0, %v3975
        %3977 = vdwg.mxu0
        %3978 = vmatpush.bf16.msra.mxu0 0
        %3979 = vmatpush.bf16.msra.mxu0 0
        %3980 = vmatpush.bf16.msra.mxu0 0
        %3981 = vmatpush.bf16.msra.mxu0 0
        %3982 = vmatpush.bf16.msra.mxu0 0
        %3983 = vmatpush.bf16.msra.mxu0 0
        %3984 = vmatpush.bf16.msra.mxu0 %v3878
        %3985 = vmatpush.bf16.msra.mxu0 %v3877
        %3986 = vmatmul.bf16.gmra.mxu0 %v3890
        %v3987 = vpop.f32.mrf.mxu0
        %v3988 = vadd.f32 %v3929, %v3987
        %v3989 = vpop.f32.mrf.mxu0
        %v3990 = vadd.f32 %v3931, %v3989
        %3991 = vmatmul.bf16.gmra.mxu0 %v3893
        %v3992 = vpop.f32.mrf.mxu0
        %v3993 = vadd.f32 %v3934, %v3992
        %v3994 = vpop.f32.mrf.mxu0
        %v3995 = vadd.f32 %v3936, %v3994
        %3996 = vmatmul.bf16.gmra.mxu0 %v3896
        %v3997 = vpop.f32.mrf.mxu0
        %v3998 = vadd.f32 %v3939, %v3997
        %v3999 = vpop.f32.mrf.mxu0
        %v4000 = vadd.f32 %v3941, %v3999
        %4001 = vmatmul.bf16.gmra.mxu0 %v3899
        %v4002 = vpop.f32.mrf.mxu0
        %v4003 = vadd.f32 %v3944, %v4002
        %v4004 = vpop.f32.mrf.mxu0
        %v4005 = vadd.f32 %v3946, %v4004
        %4006 = vmatmul.bf16.gmra.mxu0 %v3902
        %v4007 = vpop.f32.mrf.mxu0
        %v4008 = vadd.f32 %v3949, %v4007
        %v4009 = vpop.f32.mrf.mxu0
        %v4010 = vadd.f32 %v3951, %v4009
        %4011 = vmatmul.bf16.gmra.mxu0 %v3905
        %v4012 = vpop.f32.mrf.mxu0
        %v4013 = vadd.f32 %v3954, %v4012
        %v4014 = vpop.f32.mrf.mxu0
        %v4015 = vadd.f32 %v3956, %v4014
        %4016 = vmatmul.bf16.gmra.mxu0 %v3908
        %v4017 = vpop.f32.mrf.mxu0
        %v4018 = vadd.f32 %v3959, %v4017
        %v4019 = vpop.f32.mrf.mxu0
        %v4020 = vadd.f32 %v3961, %v4019
        %4021 = vmatmul.bf16.gmra.mxu0 %v3911
        %v4022 = vpop.f32.mrf.mxu0
        %v4023 = vadd.f32 %v3964, %v4022
        %v4024 = vpop.f32.mrf.mxu0
        %v4025 = vadd.f32 %v3966, %v4024
        %4026 = vmatmul.bf16.gmra.mxu0 %v3914
        %v4027 = vpop.f32.mrf.mxu0
        %v4028 = vadd.f32 %v3969, %v4027
        %v4029 = vpop.f32.mrf.mxu0
        %v4030 = vadd.f32 %v3971, %v4029
        %4031 = vmatmul.bf16.gmra.mxu0 %v3917
        %v4032 = vpop.f32.mrf.mxu0
        %v4033 = vadd.f32 %v3974, %v4032
        %v4034 = vpop.f32.mrf.mxu0
        %v4035 = vadd.f32 %v3976, %v4034
        %4036 = vdwg.mxu0
        %v4037 = vadd.f32 %v3679, %v3988
        %v4038 = vadd.f32 %v3680, %v3990
        %v4039 = vadd.f32 %v3681, %v3993
        %v4040 = vadd.f32 %v3682, %v3995
        %v4041 = vadd.f32 %v3683, %v3998
        %v4042 = vadd.f32 %v3684, %v4000
        %v4043 = vadd.f32 %v3685, %v4003
        %v4044 = vadd.f32 %v3686, %v4005
        %v4045 = vadd.f32 %v3687, %v4008
        %v4046 = vadd.f32 %v3688, %v4010
        %v4047 = vadd.f32 %v3689, %v4013
        %v4048 = vadd.f32 %v3690, %v4015
        %v4049 = vadd.f32 %v3691, %v4018
        %v4050 = vadd.f32 %v3692, %v4020
        %v4051 = vadd.f32 %v3693, %v4023
        %v4052 = vadd.f32 %v3694, %v4025
        %v4053 = vadd.f32 %v3695, %v4028
        %v4054 = vadd.f32 %v3696, %v4030
        %v4055 = vadd.f32 %v3697, %v4033
        %v4056 = vadd.f32 %v3698, %v4035
        %v4057 = vld [vmem:[#allocation3 + $0x30] sm:$0xff]
        %v4058 = vld [vmem:[#allocation3 + $0x38] sm:$0xff]
        %v4059 = vld [vmem:[#allocation3 + $0x40] sm:$0xff]
        %v4060 = vld [vmem:[#allocation3 + $0x48] sm:$0xff]
        %v4061 = vld [vmem:[#allocation3 + $0x50] sm:$0xff]
        %v4062 = vld [vmem:[#allocation3 + $0x58] sm:$0xff]
        %v4063 = vld [vmem:[#allocation3 + $0x60] sm:$0xff]
        %v4064 = vld [vmem:[#allocation3 + $0x68] sm:$0xff]
        %v4065 = vld [vmem:[#allocation3 + $0x70] sm:$0xff]
        %v4066 = vld [vmem:[#allocation3 + $0x78] sm:$0xff]
        %v4067 = vld [vmem:[#allocation3 + $0x80] sm:$0xff]
        %v4068 = vld [vmem:[#allocation3 + $0x88] sm:$0xff]
        %v4069 = vld [vmem:[#allocation3 + $0x90] sm:$0xff]
        %v4070 = vld [vmem:[#allocation3 + $0x98] sm:$0xff]
        %v4071 = vld [vmem:[#allocation3 + $0xa0] sm:$0xff]
        %v4072 = vld [vmem:[#allocation3 + $0xa8] sm:$0xff]
        %v4073 = vld [vmem:[#allocation3 + $0xb0] sm:$0xff]
        %v4074 = vld [vmem:[#allocation3 + $0xb8] sm:$0xff]
        %v4075 = vld [vmem:[#allocation3 + $0xc0] sm:$0xff]
        %v4076 = vld [vmem:[#allocation3 + $0xc8] sm:$0xff]
        %v4077 = vld [vmem:[%s3 + $0xf0] sm:$0xf]
        %v4078 = vld [vmem:[%s3 + $0xf4] sm:$0xf]
        %v4079 = vld [vmem:[%s3 + $0xf8] sm:$0xf]
        %v4080 = vld [vmem:[%s3 + $0xfc] sm:$0xf]
        %v4081 = vld [vmem:[%s3 + $0x100] sm:$0xf]
        %v4082 = vld [vmem:[%s3 + $0x104] sm:$0xf]
        %v4083 = vld [vmem:[%s3 + $0x108] sm:$0xf]
        %v4084 = vld [vmem:[%s3 + $0x10c] sm:$0xf]
        %v4085 = vld [vmem:[%s3 + $0x110] sm:$0xf]
        %v4086 = vld [vmem:[%s3 + $0x114] sm:$0xf]
        %v4087 = vld [vmem:[%s3 + $0x118] sm:$0xf]
        %v4088 = vld [vmem:[%s3 + $0x11c] sm:$0xf]
        %v4089 = vld [vmem:[%s3 + $0x120] sm:$0xf]
        %v4090 = vld [vmem:[%s3 + $0x124] sm:$0xf]
        %v4091 = vld [vmem:[%s3 + $0x128] sm:$0xf]
        %v4092 = vld [vmem:[%s3 + $0x12c] sm:$0xf]
        %v4093 = vld [vmem:[%s3 + $0x130] sm:$0xf]
        %v4094 = vld [vmem:[%s3 + $0x134] sm:$0xf]
        %v4095 = vld [vmem:[%s3 + $0x138] sm:$0xf]
        %v4096 = vld [vmem:[%s3 + $0x13c] sm:$0xf]
        %v4117 = vunpack.c.l.b16 %v4057
        %v4118 = vunpack.c.h.b16 %v4057
        %v4119 = vunpack.c.l.b16 %v4058
        %v4120 = vunpack.c.h.b16 %v4058
        %v4121 = vunpack.c.l.b16 %v4059
        %v4122 = vunpack.c.h.b16 %v4059
        %v4123 = vunpack.c.l.b16 %v4060
        %v4124 = vunpack.c.h.b16 %v4060
        %v4125 = vunpack.c.l.b16 %v4061
        %v4126 = vunpack.c.h.b16 %v4061
        %v4127 = vunpack.c.l.b16 %v4062
        %v4128 = vunpack.c.h.b16 %v4062
        %v4129 = vunpack.c.l.b16 %v4063
        %v4130 = vunpack.c.h.b16 %v4063
        %v4131 = vunpack.c.l.b16 %v4064
        %v4132 = vunpack.c.h.b16 %v4064
        %v4133 = vunpack.c.l.b16 %v4065
        %v4134 = vunpack.c.h.b16 %v4065
        %v4135 = vunpack.c.l.b16 %v4066
        %v4136 = vunpack.c.h.b16 %v4066
        %v4137 = vunpack.c.l.b16 %v4067
        %v4138 = vunpack.c.h.b16 %v4067
        %v4139 = vunpack.c.l.b16 %v4068
        %v4140 = vunpack.c.h.b16 %v4068
        %v4141 = vunpack.c.l.b16 %v4069
        %v4142 = vunpack.c.h.b16 %v4069
        %v4143 = vunpack.c.l.b16 %v4070
        %v4144 = vunpack.c.h.b16 %v4070
        %v4145 = vunpack.c.l.b16 %v4071
        %v4146 = vunpack.c.h.b16 %v4071
        %v4147 = vunpack.c.l.b16 %v4072
        %v4148 = vunpack.c.h.b16 %v4072
        %v4149 = vunpack.c.l.b16 %v4073
        %v4150 = vunpack.c.h.b16 %v4073
        %v4151 = vunpack.c.l.b16 %v4074
        %v4152 = vunpack.c.h.b16 %v4074
        %v4153 = vunpack.c.l.b16 %v4075
        %v4154 = vunpack.c.h.b16 %v4075
        %v4155 = vunpack.c.l.b16 %v4076
        %v4156 = vunpack.c.h.b16 %v4076
        %v4157 = vpack.c.b16 %v4119, %v4117
        %v4158 = vpack.c.b16 %v4120, %v4118
        %v4159 = vpack.c.b16 %v4123, %v4121
        %v4160 = vpack.c.b16 %v4124, %v4122
        %v4161 = vpack.c.b16 %v4127, %v4125
        %v4162 = vpack.c.b16 %v4128, %v4126
        %v4163 = vpack.c.b16 %v4131, %v4129
        %v4164 = vpack.c.b16 %v4132, %v4130
        %v4165 = vpack.c.b16 %v4135, %v4133
        %v4166 = vpack.c.b16 %v4136, %v4134
        %v4167 = vpack.c.b16 %v4139, %v4137
        %v4168 = vpack.c.b16 %v4140, %v4138
        %v4169 = vpack.c.b16 %v4143, %v4141
        %v4170 = vpack.c.b16 %v4144, %v4142
        %v4171 = vpack.c.b16 %v4147, %v4145
        %v4172 = vpack.c.b16 %v4148, %v4146
        %v4173 = vpack.c.b16 %v4151, %v4149
        %v4174 = vpack.c.b16 %v4152, %v4150
        %v4175 = vpack.c.b16 %v4155, %v4153
        %v4176 = vpack.c.b16 %v4156, %v4154
        %v4207 = vunpack.c.l.b16 %v4077
        %v4208 = vunpack.c.l.b16 %v4078
        %v4209 = vunpack.c.l.b16 %v4079
        %v4210 = vunpack.c.l.b16 %v4080
        %v4211 = vunpack.c.l.b16 %v4081
        %v4212 = vunpack.c.l.b16 %v4082
        %v4213 = vunpack.c.l.b16 %v4083
        %v4214 = vunpack.c.l.b16 %v4084
        %v4215 = vunpack.c.l.b16 %v4085
        %v4216 = vunpack.c.l.b16 %v4086
        %v4217 = vunpack.c.l.b16 %v4087
        %v4218 = vunpack.c.l.b16 %v4088
        %v4219 = vunpack.c.l.b16 %v4089
        %v4220 = vunpack.c.l.b16 %v4090
        %v4221 = vunpack.c.l.b16 %v4091
        %v4222 = vunpack.c.l.b16 %v4092
        %v4223 = vunpack.c.l.b16 %v4093
        %v4224 = vunpack.c.l.b16 %v4094
        %v4225 = vunpack.c.l.b16 %v4095
        %v4226 = vunpack.c.l.b16 %v4096
        %v4227 = vpack.c.b16 %v4208, %v4207
        %v4228 = vpack.c.b16 %v4210, %v4209
        %v4229 = vpack.c.b16 %v4212, %v4211
        %v4230 = vpack.c.b16 %v4214, %v4213
        %v4231 = vpack.c.b16 %v4216, %v4215
        %v4232 = vpack.c.b16 %v4218, %v4217
        %v4233 = vpack.c.b16 %v4220, %v4219
        %v4234 = vpack.c.b16 %v4222, %v4221
        %v4235 = vpack.c.b16 %v4224, %v4223
        %v4236 = vpack.c.b16 %v4226, %v4225
        %v4248 = vsel %vm508, %v4158, 0
        %v4251 = vsel %vm508, %v4160, 0
        %v4254 = vsel %vm508, %v4162, 0
        %v4257 = vsel %vm508, %v4164, 0
        %v4260 = vsel %vm508, %v4166, 0
        %v4263 = vsel %vm508, %v4168, 0
        %v4266 = vsel %vm508, %v4170, 0
        %v4269 = vsel %vm508, %v4172, 0
        %v4272 = vsel %vm508, %v4174, 0
        %v4275 = vsel %vm508, %v4176, 0
        %4277 = vmatpush.bf16.msra.mxu0 %v4234
        %4278 = vmatpush.bf16.msra.mxu0 %v4233
        %4279 = vmatpush.bf16.msra.mxu0 %v4232
        %4280 = vmatpush.bf16.msra.mxu0 %v4231
        %4281 = vmatpush.bf16.msra.mxu0 %v4230
        %4282 = vmatpush.bf16.msra.mxu0 %v4229
        %4283 = vmatpush.bf16.msra.mxu0 %v4228
        %4284 = vmatpush.bf16.msra.mxu0 %v4227
        %4285 = vmatmul.bf16.gmra.mxu0 %v4157
        %v4286 = vpop.f32.mrf.mxu0
        %v4287 = vadd.f32 0.0, %v4286
        %v4288 = vpop.f32.mrf.mxu0
        %v4289 = vadd.f32 0.0, %v4288
        %4290 = vmatmul.bf16.gmra.mxu0 %v4159
        %v4291 = vpop.f32.mrf.mxu0
        %v4292 = vadd.f32 0.0, %v4291
        %v4293 = vpop.f32.mrf.mxu0
        %v4294 = vadd.f32 0.0, %v4293
        %4295 = vmatmul.bf16.gmra.mxu0 %v4161
        %v4296 = vpop.f32.mrf.mxu0
        %v4297 = vadd.f32 0.0, %v4296
        %v4298 = vpop.f32.mrf.mxu0
        %v4299 = vadd.f32 0.0, %v4298
        %4300 = vmatmul.bf16.gmra.mxu0 %v4163
        %v4301 = vpop.f32.mrf.mxu0
        %v4302 = vadd.f32 0.0, %v4301
        %v4303 = vpop.f32.mrf.mxu0
        %v4304 = vadd.f32 0.0, %v4303
        %4305 = vmatmul.bf16.gmra.mxu0 %v4165
        %v4306 = vpop.f32.mrf.mxu0
        %v4307 = vadd.f32 0.0, %v4306
        %v4308 = vpop.f32.mrf.mxu0
        %v4309 = vadd.f32 0.0, %v4308
        %4310 = vmatmul.bf16.gmra.mxu0 %v4167
        %v4311 = vpop.f32.mrf.mxu0
        %v4312 = vadd.f32 0.0, %v4311
        %v4313 = vpop.f32.mrf.mxu0
        %v4314 = vadd.f32 0.0, %v4313
        %4315 = vmatmul.bf16.gmra.mxu0 %v4169
        %v4316 = vpop.f32.mrf.mxu0
        %v4317 = vadd.f32 0.0, %v4316
        %v4318 = vpop.f32.mrf.mxu0
        %v4319 = vadd.f32 0.0, %v4318
        %4320 = vmatmul.bf16.gmra.mxu0 %v4171
        %v4321 = vpop.f32.mrf.mxu0
        %v4322 = vadd.f32 0.0, %v4321
        %v4323 = vpop.f32.mrf.mxu0
        %v4324 = vadd.f32 0.0, %v4323
        %4325 = vmatmul.bf16.gmra.mxu0 %v4173
        %v4326 = vpop.f32.mrf.mxu0
        %v4327 = vadd.f32 0.0, %v4326
        %v4328 = vpop.f32.mrf.mxu0
        %v4329 = vadd.f32 0.0, %v4328
        %4330 = vmatmul.bf16.gmra.mxu0 %v4175
        %v4331 = vpop.f32.mrf.mxu0
        %v4332 = vadd.f32 0.0, %v4331
        %v4333 = vpop.f32.mrf.mxu0
        %v4334 = vadd.f32 0.0, %v4333
        %4335 = vdwg.mxu0
        %4336 = vmatpush.bf16.msra.mxu0 0
        %4337 = vmatpush.bf16.msra.mxu0 0
        %4338 = vmatpush.bf16.msra.mxu0 0
        %4339 = vmatpush.bf16.msra.mxu0 0
        %4340 = vmatpush.bf16.msra.mxu0 0
        %4341 = vmatpush.bf16.msra.mxu0 0
        %4342 = vmatpush.bf16.msra.mxu0 %v4236
        %4343 = vmatpush.bf16.msra.mxu0 %v4235
        %4344 = vmatmul.bf16.gmra.mxu0 %v4248
        %v4345 = vpop.f32.mrf.mxu0
        %v4346 = vadd.f32 %v4287, %v4345
        %v4347 = vpop.f32.mrf.mxu0
        %v4348 = vadd.f32 %v4289, %v4347
        %4349 = vmatmul.bf16.gmra.mxu0 %v4251
        %v4350 = vpop.f32.mrf.mxu0
        %v4351 = vadd.f32 %v4292, %v4350
        %v4352 = vpop.f32.mrf.mxu0
        %v4353 = vadd.f32 %v4294, %v4352
        %4354 = vmatmul.bf16.gmra.mxu0 %v4254
        %v4355 = vpop.f32.mrf.mxu0
        %v4356 = vadd.f32 %v4297, %v4355
        %v4357 = vpop.f32.mrf.mxu0
        %v4358 = vadd.f32 %v4299, %v4357
        %4359 = vmatmul.bf16.gmra.mxu0 %v4257
        %v4360 = vpop.f32.mrf.mxu0
        %v4361 = vadd.f32 %v4302, %v4360
        %v4362 = vpop.f32.mrf.mxu0
        %v4363 = vadd.f32 %v4304, %v4362
        %4364 = vmatmul.bf16.gmra.mxu0 %v4260
        %v4365 = vpop.f32.mrf.mxu0
        %v4366 = vadd.f32 %v4307, %v4365
        %v4367 = vpop.f32.mrf.mxu0
        %v4368 = vadd.f32 %v4309, %v4367
        %4369 = vmatmul.bf16.gmra.mxu0 %v4263
        %v4370 = vpop.f32.mrf.mxu0
        %v4371 = vadd.f32 %v4312, %v4370
        %v4372 = vpop.f32.mrf.mxu0
        %v4373 = vadd.f32 %v4314, %v4372
        %4374 = vmatmul.bf16.gmra.mxu0 %v4266
        %v4375 = vpop.f32.mrf.mxu0
        %v4376 = vadd.f32 %v4317, %v4375
        %v4377 = vpop.f32.mrf.mxu0
        %v4378 = vadd.f32 %v4319, %v4377
        %4379 = vmatmul.bf16.gmra.mxu0 %v4269
        %v4380 = vpop.f32.mrf.mxu0
        %v4381 = vadd.f32 %v4322, %v4380
        %v4382 = vpop.f32.mrf.mxu0
        %v4383 = vadd.f32 %v4324, %v4382
        %4384 = vmatmul.bf16.gmra.mxu0 %v4272
        %v4385 = vpop.f32.mrf.mxu0
        %v4386 = vadd.f32 %v4327, %v4385
        %v4387 = vpop.f32.mrf.mxu0
        %v4388 = vadd.f32 %v4329, %v4387
        %4389 = vmatmul.bf16.gmra.mxu0 %v4275
        %v4390 = vpop.f32.mrf.mxu0
        %v4391 = vadd.f32 %v4332, %v4390
        %v4392 = vpop.f32.mrf.mxu0
        %v4393 = vadd.f32 %v4334, %v4392
        %4394 = vdwg.mxu0
        %v4395 = vadd.f32 %v4037, %v4346
        %v4396 = vadd.f32 %v4038, %v4348
        %v4397 = vadd.f32 %v4039, %v4351
        %v4398 = vadd.f32 %v4040, %v4353
        %v4399 = vadd.f32 %v4041, %v4356
        %v4400 = vadd.f32 %v4042, %v4358
        %v4401 = vadd.f32 %v4043, %v4361
        %v4402 = vadd.f32 %v4044, %v4363
        %v4403 = vadd.f32 %v4045, %v4366
        %v4404 = vadd.f32 %v4046, %v4368
        %v4405 = vadd.f32 %v4047, %v4371
        %v4406 = vadd.f32 %v4048, %v4373
        %v4407 = vadd.f32 %v4049, %v4376
        %v4408 = vadd.f32 %v4050, %v4378
        %v4409 = vadd.f32 %v4051, %v4381
        %v4410 = vadd.f32 %v4052, %v4383
        %v4411 = vadd.f32 %v4053, %v4386
        %v4412 = vadd.f32 %v4054, %v4388
        %v4413 = vadd.f32 %v4055, %v4391
        %v4414 = vadd.f32 %v4056, %v4393
        %v4415 = vld [vmem:[#allocation3 + $0x40] sm:$0xff]
        %v4416 = vld [vmem:[#allocation3 + $0x48] sm:$0xff]
        %v4417 = vld [vmem:[#allocation3 + $0x50] sm:$0xff]
        %v4418 = vld [vmem:[#allocation3 + $0x58] sm:$0xff]
        %v4419 = vld [vmem:[#allocation3 + $0x60] sm:$0xff]
        %v4420 = vld [vmem:[#allocation3 + $0x68] sm:$0xff]
        %v4421 = vld [vmem:[#allocation3 + $0x70] sm:$0xff]
        %v4422 = vld [vmem:[#allocation3 + $0x78] sm:$0xff]
        %v4423 = vld [vmem:[#allocation3 + $0x80] sm:$0xff]
        %v4424 = vld [vmem:[#allocation3 + $0x88] sm:$0xff]
        %v4425 = vld [vmem:[#allocation3 + $0x90] sm:$0xff]
        %v4426 = vld [vmem:[#allocation3 + $0x98] sm:$0xff]
        %v4427 = vld [vmem:[#allocation3 + $0xa0] sm:$0xff]
        %v4428 = vld [vmem:[#allocation3 + $0xa8] sm:$0xff]
        %v4429 = vld [vmem:[#allocation3 + $0xb0] sm:$0xff]
        %v4430 = vld [vmem:[#allocation3 + $0xb8] sm:$0xff]
        %v4431 = vld [vmem:[#allocation3 + $0xc0] sm:$0xff]
        %v4432 = vld [vmem:[#allocation3 + $0xc8] sm:$0xff]
        %v4433 = vld [vmem:[#allocation3 + $0xd0] sm:$0xff]
        %v4434 = vld [vmem:[#allocation3 + $0xd8] sm:$0xff]
        %v4435 = vld [vmem:[%s3 + $0x140] sm:$0xf]
        %v4436 = vld [vmem:[%s3 + $0x144] sm:$0xf]
        %v4437 = vld [vmem:[%s3 + $0x148] sm:$0xf]
        %v4438 = vld [vmem:[%s3 + $0x14c] sm:$0xf]
        %v4439 = vld [vmem:[%s3 + $0x150] sm:$0xf]
        %v4440 = vld [vmem:[%s3 + $0x154] sm:$0xf]
        %v4441 = vld [vmem:[%s3 + $0x158] sm:$0xf]
        %v4442 = vld [vmem:[%s3 + $0x15c] sm:$0xf]
        %v4443 = vld [vmem:[%s3 + $0x160] sm:$0xf]
        %v4444 = vld [vmem:[%s3 + $0x164] sm:$0xf]
        %v4445 = vld [vmem:[%s3 + $0x168] sm:$0xf]
        %v4446 = vld [vmem:[%s3 + $0x16c] sm:$0xf]
        %v4447 = vld [vmem:[%s3 + $0x170] sm:$0xf]
        %v4448 = vld [vmem:[%s3 + $0x174] sm:$0xf]
        %v4449 = vld [vmem:[%s3 + $0x178] sm:$0xf]
        %v4450 = vld [vmem:[%s3 + $0x17c] sm:$0xf]
        %v4451 = vld [vmem:[%s3 + $0x180] sm:$0xf]
        %v4452 = vld [vmem:[%s3 + $0x184] sm:$0xf]
        %v4453 = vld [vmem:[%s3 + $0x188] sm:$0xf]
        %v4454 = vld [vmem:[%s3 + $0x18c] sm:$0xf]
        %v4475 = vunpack.c.l.b16 %v4415
        %v4476 = vunpack.c.h.b16 %v4415
        %v4477 = vunpack.c.l.b16 %v4416
        %v4478 = vunpack.c.h.b16 %v4416
        %v4479 = vunpack.c.l.b16 %v4417
        %v4480 = vunpack.c.h.b16 %v4417
        %v4481 = vunpack.c.l.b16 %v4418
        %v4482 = vunpack.c.h.b16 %v4418
        %v4483 = vunpack.c.l.b16 %v4419
        %v4484 = vunpack.c.h.b16 %v4419
        %v4485 = vunpack.c.l.b16 %v4420
        %v4486 = vunpack.c.h.b16 %v4420
        %v4487 = vunpack.c.l.b16 %v4421
        %v4488 = vunpack.c.h.b16 %v4421
        %v4489 = vunpack.c.l.b16 %v4422
        %v4490 = vunpack.c.h.b16 %v4422
        %v4491 = vunpack.c.l.b16 %v4423
        %v4492 = vunpack.c.h.b16 %v4423
        %v4493 = vunpack.c.l.b16 %v4424
        %v4494 = vunpack.c.h.b16 %v4424
        %v4495 = vunpack.c.l.b16 %v4425
        %v4496 = vunpack.c.h.b16 %v4425
        %v4497 = vunpack.c.l.b16 %v4426
        %v4498 = vunpack.c.h.b16 %v4426
        %v4499 = vunpack.c.l.b16 %v4427
        %v4500 = vunpack.c.h.b16 %v4427
        %v4501 = vunpack.c.l.b16 %v4428
        %v4502 = vunpack.c.h.b16 %v4428
        %v4503 = vunpack.c.l.b16 %v4429
        %v4504 = vunpack.c.h.b16 %v4429
        %v4505 = vunpack.c.l.b16 %v4430
        %v4506 = vunpack.c.h.b16 %v4430
        %v4507 = vunpack.c.l.b16 %v4431
        %v4508 = vunpack.c.h.b16 %v4431
        %v4509 = vunpack.c.l.b16 %v4432
        %v4510 = vunpack.c.h.b16 %v4432
        %v4511 = vunpack.c.l.b16 %v4433
        %v4512 = vunpack.c.h.b16 %v4433
        %v4513 = vunpack.c.l.b16 %v4434
        %v4514 = vunpack.c.h.b16 %v4434
        %v4515 = vpack.c.b16 %v4477, %v4475
        %v4516 = vpack.c.b16 %v4478, %v4476
        %v4517 = vpack.c.b16 %v4481, %v4479
        %v4518 = vpack.c.b16 %v4482, %v4480
        %v4519 = vpack.c.b16 %v4485, %v4483
        %v4520 = vpack.c.b16 %v4486, %v4484
        %v4521 = vpack.c.b16 %v4489, %v4487
        %v4522 = vpack.c.b16 %v4490, %v4488
        %v4523 = vpack.c.b16 %v4493, %v4491
        %v4524 = vpack.c.b16 %v4494, %v4492
        %v4525 = vpack.c.b16 %v4497, %v4495
        %v4526 = vpack.c.b16 %v4498, %v4496
        %v4527 = vpack.c.b16 %v4501, %v4499
        %v4528 = vpack.c.b16 %v4502, %v4500
        %v4529 = vpack.c.b16 %v4505, %v4503
        %v4530 = vpack.c.b16 %v4506, %v4504
        %v4531 = vpack.c.b16 %v4509, %v4507
        %v4532 = vpack.c.b16 %v4510, %v4508
        %v4533 = vpack.c.b16 %v4513, %v4511
        %v4534 = vpack.c.b16 %v4514, %v4512
        %v4565 = vunpack.c.l.b16 %v4435
        %v4566 = vunpack.c.l.b16 %v4436
        %v4567 = vunpack.c.l.b16 %v4437
        %v4568 = vunpack.c.l.b16 %v4438
        %v4569 = vunpack.c.l.b16 %v4439
        %v4570 = vunpack.c.l.b16 %v4440
        %v4571 = vunpack.c.l.b16 %v4441
        %v4572 = vunpack.c.l.b16 %v4442
        %v4573 = vunpack.c.l.b16 %v4443
        %v4574 = vunpack.c.l.b16 %v4444
        %v4575 = vunpack.c.l.b16 %v4445
        %v4576 = vunpack.c.l.b16 %v4446
        %v4577 = vunpack.c.l.b16 %v4447
        %v4578 = vunpack.c.l.b16 %v4448
        %v4579 = vunpack.c.l.b16 %v4449
        %v4580 = vunpack.c.l.b16 %v4450
        %v4581 = vunpack.c.l.b16 %v4451
        %v4582 = vunpack.c.l.b16 %v4452
        %v4583 = vunpack.c.l.b16 %v4453
        %v4584 = vunpack.c.l.b16 %v4454
        %v4585 = vpack.c.b16 %v4566, %v4565
        %v4586 = vpack.c.b16 %v4568, %v4567
        %v4587 = vpack.c.b16 %v4570, %v4569
        %v4588 = vpack.c.b16 %v4572, %v4571
        %v4589 = vpack.c.b16 %v4574, %v4573
        %v4590 = vpack.c.b16 %v4576, %v4575
        %v4591 = vpack.c.b16 %v4578, %v4577
        %v4592 = vpack.c.b16 %v4580, %v4579
        %v4593 = vpack.c.b16 %v4582, %v4581
        %v4594 = vpack.c.b16 %v4584, %v4583
        %v4606 = vsel %vm508, %v4516, 0
        %v4609 = vsel %vm508, %v4518, 0
        %v4612 = vsel %vm508, %v4520, 0
        %v4615 = vsel %vm508, %v4522, 0
        %v4618 = vsel %vm508, %v4524, 0
        %v4621 = vsel %vm508, %v4526, 0
        %v4624 = vsel %vm508, %v4528, 0
        %v4627 = vsel %vm508, %v4530, 0
        %v4630 = vsel %vm508, %v4532, 0
        %v4633 = vsel %vm508, %v4534, 0
        %4635 = vmatpush.bf16.msra.mxu0 %v4592
        %4636 = vmatpush.bf16.msra.mxu0 %v4591
        %4637 = vmatpush.bf16.msra.mxu0 %v4590
        %4638 = vmatpush.bf16.msra.mxu0 %v4589
        %4639 = vmatpush.bf16.msra.mxu0 %v4588
        %4640 = vmatpush.bf16.msra.mxu0 %v4587
        %4641 = vmatpush.bf16.msra.mxu0 %v4586
        %4642 = vmatpush.bf16.msra.mxu0 %v4585
        %4643 = vmatmul.bf16.gmra.mxu0 %v4515
        %v4644 = vpop.f32.mrf.mxu0
        %v4645 = vadd.f32 0.0, %v4644
        %v4646 = vpop.f32.mrf.mxu0
        %v4647 = vadd.f32 0.0, %v4646
        %4648 = vmatmul.bf16.gmra.mxu0 %v4517
        %v4649 = vpop.f32.mrf.mxu0
        %v4650 = vadd.f32 0.0, %v4649
        %v4651 = vpop.f32.mrf.mxu0
        %v4652 = vadd.f32 0.0, %v4651
        %4653 = vmatmul.bf16.gmra.mxu0 %v4519
        %v4654 = vpop.f32.mrf.mxu0
        %v4655 = vadd.f32 0.0, %v4654
        %v4656 = vpop.f32.mrf.mxu0
        %v4657 = vadd.f32 0.0, %v4656
        %4658 = vmatmul.bf16.gmra.mxu0 %v4521
        %v4659 = vpop.f32.mrf.mxu0
        %v4660 = vadd.f32 0.0, %v4659
        %v4661 = vpop.f32.mrf.mxu0
        %v4662 = vadd.f32 0.0, %v4661
        %4663 = vmatmul.bf16.gmra.mxu0 %v4523
        %v4664 = vpop.f32.mrf.mxu0
        %v4665 = vadd.f32 0.0, %v4664
        %v4666 = vpop.f32.mrf.mxu0
        %v4667 = vadd.f32 0.0, %v4666
        %4668 = vmatmul.bf16.gmra.mxu0 %v4525
        %v4669 = vpop.f32.mrf.mxu0
        %v4670 = vadd.f32 0.0, %v4669
        %v4671 = vpop.f32.mrf.mxu0
        %v4672 = vadd.f32 0.0, %v4671
        %4673 = vmatmul.bf16.gmra.mxu0 %v4527
        %v4674 = vpop.f32.mrf.mxu0
        %v4675 = vadd.f32 0.0, %v4674
        %v4676 = vpop.f32.mrf.mxu0
        %v4677 = vadd.f32 0.0, %v4676
        %4678 = vmatmul.bf16.gmra.mxu0 %v4529
        %v4679 = vpop.f32.mrf.mxu0
        %v4680 = vadd.f32 0.0, %v4679
        %v4681 = vpop.f32.mrf.mxu0
        %v4682 = vadd.f32 0.0, %v4681
        %4683 = vmatmul.bf16.gmra.mxu0 %v4531
        %v4684 = vpop.f32.mrf.mxu0
        %v4685 = vadd.f32 0.0, %v4684
        %v4686 = vpop.f32.mrf.mxu0
        %v4687 = vadd.f32 0.0, %v4686
        %4688 = vmatmul.bf16.gmra.mxu0 %v4533
        %v4689 = vpop.f32.mrf.mxu0
        %v4690 = vadd.f32 0.0, %v4689
        %v4691 = vpop.f32.mrf.mxu0
        %v4692 = vadd.f32 0.0, %v4691
        %4693 = vdwg.mxu0
        %4694 = vmatpush.bf16.msra.mxu0 0
        %4695 = vmatpush.bf16.msra.mxu0 0
        %4696 = vmatpush.bf16.msra.mxu0 0
        %4697 = vmatpush.bf16.msra.mxu0 0
        %4698 = vmatpush.bf16.msra.mxu0 0
        %4699 = vmatpush.bf16.msra.mxu0 0
        %4700 = vmatpush.bf16.msra.mxu0 %v4594
        %4701 = vmatpush.bf16.msra.mxu0 %v4593
        %4702 = vmatmul.bf16.gmra.mxu0 %v4606
        %v4703 = vpop.f32.mrf.mxu0
        %v4704 = vadd.f32 %v4645, %v4703
        %v4705 = vpop.f32.mrf.mxu0
        %v4706 = vadd.f32 %v4647, %v4705
        %4707 = vmatmul.bf16.gmra.mxu0 %v4609
        %v4708 = vpop.f32.mrf.mxu0
        %v4709 = vadd.f32 %v4650, %v4708
        %v4710 = vpop.f32.mrf.mxu0
        %v4711 = vadd.f32 %v4652, %v4710
        %4712 = vmatmul.bf16.gmra.mxu0 %v4612
        %v4713 = vpop.f32.mrf.mxu0
        %v4714 = vadd.f32 %v4655, %v4713
        %v4715 = vpop.f32.mrf.mxu0
        %v4716 = vadd.f32 %v4657, %v4715
        %4717 = vmatmul.bf16.gmra.mxu0 %v4615
        %v4718 = vpop.f32.mrf.mxu0
        %v4719 = vadd.f32 %v4660, %v4718
        %v4720 = vpop.f32.mrf.mxu0
        %v4721 = vadd.f32 %v4662, %v4720
        %4722 = vmatmul.bf16.gmra.mxu0 %v4618
        %v4723 = vpop.f32.mrf.mxu0
        %v4724 = vadd.f32 %v4665, %v4723
        %v4725 = vpop.f32.mrf.mxu0
        %v4726 = vadd.f32 %v4667, %v4725
        %4727 = vmatmul.bf16.gmra.mxu0 %v4621
        %v4728 = vpop.f32.mrf.mxu0
        %v4729 = vadd.f32 %v4670, %v4728
        %v4730 = vpop.f32.mrf.mxu0
        %v4731 = vadd.f32 %v4672, %v4730
        %4732 = vmatmul.bf16.gmra.mxu0 %v4624
        %v4733 = vpop.f32.mrf.mxu0
        %v4734 = vadd.f32 %v4675, %v4733
        %v4735 = vpop.f32.mrf.mxu0
        %v4736 = vadd.f32 %v4677, %v4735
        %4737 = vmatmul.bf16.gmra.mxu0 %v4627
        %v4738 = vpop.f32.mrf.mxu0
        %v4739 = vadd.f32 %v4680, %v4738
        %v4740 = vpop.f32.mrf.mxu0
        %v4741 = vadd.f32 %v4682, %v4740
        %4742 = vmatmul.bf16.gmra.mxu0 %v4630
        %v4743 = vpop.f32.mrf.mxu0
        %v4744 = vadd.f32 %v4685, %v4743
        %v4745 = vpop.f32.mrf.mxu0
        %v4746 = vadd.f32 %v4687, %v4745
        %4747 = vmatmul.bf16.gmra.mxu0 %v4633
        %v4748 = vpop.f32.mrf.mxu0
        %v4749 = vadd.f32 %v4690, %v4748
        %v4750 = vpop.f32.mrf.mxu0
        %v4751 = vadd.f32 %v4692, %v4750
        %4752 = vdwg.mxu0
        %v4753 = vadd.f32 %v4395, %v4704
        %v4754 = vadd.f32 %v4396, %v4706
        %v4755 = vadd.f32 %v4397, %v4709
        %v4756 = vadd.f32 %v4398, %v4711
        %v4757 = vadd.f32 %v4399, %v4714
        %v4758 = vadd.f32 %v4400, %v4716
        %v4759 = vadd.f32 %v4401, %v4719
        %v4760 = vadd.f32 %v4402, %v4721
        %v4761 = vadd.f32 %v4403, %v4724
        %v4762 = vadd.f32 %v4404, %v4726
        %v4763 = vadd.f32 %v4405, %v4729
        %v4764 = vadd.f32 %v4406, %v4731
        %v4765 = vadd.f32 %v4407, %v4734
        %v4766 = vadd.f32 %v4408, %v4736
        %v4767 = vadd.f32 %v4409, %v4739
        %v4768 = vadd.f32 %v4410, %v4741
        %v4769 = vadd.f32 %v4411, %v4744
        %v4770 = vadd.f32 %v4412, %v4746
        %v4771 = vadd.f32 %v4413, %v4749
        %v4772 = vadd.f32 %v4414, %v4751
        %4773 = vst.msk [vmem:[#allocation4] sm:$0xff] %vm359, %v4753
        %4774 = vst.msk [vmem:[#allocation4 + $0x8] sm:$0xff] %vm359, %v4754
        %4775 = vst.msk [vmem:[#allocation4 + $0x10] sm:$0xff] %vm359, %v4755
        %4776 = vst.msk [vmem:[#allocation4 + $0x18] sm:$0xff] %vm359, %v4756
        %4777 = vst.msk [vmem:[#allocation4 + $0x20] sm:$0xff] %vm359, %v4757
        %4778 = vst.msk [vmem:[#allocation4 + $0x28] sm:$0xff] %vm359, %v4758
        %4779 = vst.msk [vmem:[#allocation4 + $0x30] sm:$0xff] %vm359, %v4759
        %4780 = vst.msk [vmem:[#allocation4 + $0x38] sm:$0xff] %vm359, %v4760
        %4781 = vst.msk [vmem:[#allocation4 + $0x40] sm:$0xff] %vm359, %v4761
        %4782 = vst.msk [vmem:[#allocation4 + $0x48] sm:$0xff] %vm359, %v4762
        %4783 = vst.msk [vmem:[#allocation4 + $0x50] sm:$0xff] %vm359, %v4763
        %4784 = vst.msk [vmem:[#allocation4 + $0x58] sm:$0xff] %vm359, %v4764
        %4785 = vst.msk [vmem:[#allocation4 + $0x60] sm:$0xff] %vm359, %v4765
        %4786 = vst.msk [vmem:[#allocation4 + $0x68] sm:$0xff] %vm359, %v4766
        %4787 = vst.msk [vmem:[#allocation4 + $0x70] sm:$0xff] %vm359, %v4767
        %4788 = vst.msk [vmem:[#allocation4 + $0x78] sm:$0xff] %vm359, %v4768
        %4789 = vst.msk [vmem:[#allocation4 + $0x80] sm:$0xff] %vm359, %v4769
        %4790 = vst.msk [vmem:[#allocation4 + $0x88] sm:$0xff] %vm359, %v4770
        %4791 = vst.msk [vmem:[#allocation4 + $0x90] sm:$0xff] %vm359, %v4771
        %4792 = vst.msk [vmem:[#allocation4 + $0x98] sm:$0xff] %vm359, %v4772
        %v4793 = vld [vmem:[#allocation4 + $0x1] sm:$0xff]
        %v4794 = vld [vmem:[#allocation4 + $0x9] sm:$0xff]
        %v4795 = vld [vmem:[#allocation4 + $0x11] sm:$0xff]
        %v4796 = vld [vmem:[#allocation4 + $0x19] sm:$0xff]
        %v4797 = vld [vmem:[#allocation4 + $0x21] sm:$0xff]
        %v4798 = vld [vmem:[#allocation4 + $0x29] sm:$0xff]
        %v4799 = vld [vmem:[#allocation4 + $0x31] sm:$0xff]
        %v4800 = vld [vmem:[#allocation4 + $0x39] sm:$0xff]
        %v4801 = vld [vmem:[#allocation4 + $0x41] sm:$0xff]
        %v4802 = vld [vmem:[#allocation4 + $0x49] sm:$0xff]
        %v4803 = vld [vmem:[#allocation4 + $0x51] sm:$0xff]
        %v4804 = vld [vmem:[#allocation4 + $0x59] sm:$0xff]
        %v4805 = vld [vmem:[#allocation4 + $0x61] sm:$0xff]
        %v4806 = vld [vmem:[#allocation4 + $0x69] sm:$0xff]
        %v4807 = vld [vmem:[#allocation4 + $0x71] sm:$0xff]
        %v4808 = vld [vmem:[#allocation4 + $0x79] sm:$0xff]
        %v4809 = vld [vmem:[#allocation4 + $0x81] sm:$0xff]
        %v4810 = vld [vmem:[#allocation4 + $0x89] sm:$0xff]
        %v4811 = vld [vmem:[#allocation4 + $0x91] sm:$0xff]
        %v4812 = vld [vmem:[#allocation4 + $0x99] sm:$0xff]
        %v4813 = vld [vmem:[#allocation4 + $0x10] sm:$0xff]
        %v4814 = vld [vmem:[#allocation4 + $0x18] sm:$0xff]
        %v4815 = vld [vmem:[#allocation4 + $0x20] sm:$0xff]
        %v4816 = vld [vmem:[#allocation4 + $0x28] sm:$0xff]
        %v4817 = vld [vmem:[#allocation4 + $0x30] sm:$0xff]
        %v4818 = vld [vmem:[#allocation4 + $0x38] sm:$0xff]
        %v4819 = vld [vmem:[#allocation4 + $0x40] sm:$0xff]
        %v4820 = vld [vmem:[#allocation4 + $0x48] sm:$0xff]
        %v4821 = vld [vmem:[#allocation4 + $0x50] sm:$0xff]
        %v4822 = vld [vmem:[#allocation4 + $0x58] sm:$0xff]
        %v4823 = vld [vmem:[#allocation4 + $0x60] sm:$0xff]
        %v4824 = vld [vmem:[#allocation4 + $0x68] sm:$0xff]
        %v4825 = vld [vmem:[#allocation4 + $0x70] sm:$0xff]
        %v4826 = vld [vmem:[#allocation4 + $0x78] sm:$0xff]
        %v4827 = vld [vmem:[#allocation4 + $0x80] sm:$0xff]
        %v4828 = vld [vmem:[#allocation4 + $0x88] sm:$0xff]
        %v4829 = vld [vmem:[#allocation4 + $0x90] sm:$0xff]
        %v4830 = vld [vmem:[#allocation4 + $0x98] sm:$0xff]
        %v4831 = vld [vmem:[#allocation4 + $0xa0] sm:$0xff]
        %v4832 = vld [vmem:[#allocation4 + $0xa8] sm:$0xff]
        %v4833 = vld [vmem:[#allocation4 + $0xa1] sm:$0xff]
        %v4834 = vld [vmem:[#allocation4 + $0xa9] sm:$0xff]
        %v4835 = vmax.f32 %v4753, %v4793
        %v4836 = vmax.f32 %v4754, %v4794
        %v4837 = vmax.f32 %v4755, %v4795
        %v4838 = vmax.f32 %v4756, %v4796
        %v4839 = vmax.f32 %v4757, %v4797
        %v4840 = vmax.f32 %v4758, %v4798
        %v4841 = vmax.f32 %v4759, %v4799
        %v4842 = vmax.f32 %v4760, %v4800
        %v4843 = vmax.f32 %v4761, %v4801
        %v4844 = vmax.f32 %v4762, %v4802
        %v4845 = vmax.f32 %v4763, %v4803
        %v4846 = vmax.f32 %v4764, %v4804
        %v4847 = vmax.f32 %v4765, %v4805
        %v4848 = vmax.f32 %v4766, %v4806
        %v4849 = vmax.f32 %v4767, %v4807
        %v4850 = vmax.f32 %v4768, %v4808
        %v4851 = vmax.f32 %v4769, %v4809
        %v4852 = vmax.f32 %v4770, %v4810
        %v4853 = vmax.f32 %v4771, %v4811
        %v4854 = vmax.f32 %v4772, %v4812
        %v4855 = vmax.f32 %v4813, %v4795
        %v4856 = vmax.f32 %v4814, %v4796
        %v4857 = vmax.f32 %v4815, %v4797
        %v4858 = vmax.f32 %v4816, %v4798
        %v4859 = vmax.f32 %v4817, %v4799
        %v4860 = vmax.f32 %v4818, %v4800
        %v4861 = vmax.f32 %v4819, %v4801
        %v4862 = vmax.f32 %v4820, %v4802
        %v4863 = vmax.f32 %v4821, %v4803
        %v4864 = vmax.f32 %v4822, %v4804
        %v4865 = vmax.f32 %v4823, %v4805
        %v4866 = vmax.f32 %v4824, %v4806
        %v4867 = vmax.f32 %v4825, %v4807
        %v4868 = vmax.f32 %v4826, %v4808
        %v4869 = vmax.f32 %v4827, %v4809
        %v4870 = vmax.f32 %v4828, %v4810
        %v4871 = vmax.f32 %v4829, %v4811
        %v4872 = vmax.f32 %v4830, %v4812
        %v4873 = vmax.f32 %v4831, %v4833
        %v4874 = vmax.f32 %v4832, %v4834
        %v4875 = vmax.f32 %v4835, %v4855
        %v4876 = vmax.f32 %v4836, %v4856
        %v4877 = vmax.f32 %v4837, %v4857
        %v4878 = vmax.f32 %v4838, %v4858
        %v4879 = vmax.f32 %v4839, %v4859
        %v4880 = vmax.f32 %v4840, %v4860
        %v4881 = vmax.f32 %v4841, %v4861
        %v4882 = vmax.f32 %v4842, %v4862
        %v4883 = vmax.f32 %v4843, %v4863
        %v4884 = vmax.f32 %v4844, %v4864
        %v4885 = vmax.f32 %v4845, %v4865
        %v4886 = vmax.f32 %v4846, %v4866
        %v4887 = vmax.f32 %v4847, %v4867
        %v4888 = vmax.f32 %v4848, %v4868
        %v4889 = vmax.f32 %v4849, %v4869
        %v4890 = vmax.f32 %v4850, %v4870
        %v4891 = vmax.f32 %v4851, %v4871
        %v4892 = vmax.f32 %v4852, %v4872
        %v4893 = vmax.f32 %v4853, %v4873
        %v4894 = vmax.f32 %v4854, %v4874
        %v4896 = vperm.slane %v368, 0
        %v4897 = vperm.slane %v368, 1
        %v4899 = vsel %vm508, %v4897, 0
        %4901 = vmatpush.msra.mxu0 %v4890
        %4902 = vmatpush.msra.mxu0 %v4889
        %4903 = vmatpush.msra.mxu0 %v4888
        %4904 = vmatpush.msra.mxu0 %v4887
        %4905 = vmatpush.msra.mxu0 %v4886
        %4906 = vmatpush.msra.mxu0 %v4885
        %4907 = vmatpush.msra.mxu0 %v4884
        %4908 = vmatpush.msra.mxu0 %v4883
        %4909 = vmatpush.msra.mxu0 %v4882
        %4910 = vmatpush.msra.mxu0 %v4881
        %4911 = vmatpush.msra.mxu0 %v4880
        %4912 = vmatpush.msra.mxu0 %v4879
        %4913 = vmatpush.msra.mxu0 %v4878
        %4914 = vmatpush.msra.mxu0 %v4877
        %4915 = vmatpush.msra.mxu0 %v4876
        %4916 = vmatpush.msra.mxu0 %v4875
        %4917 = vmatmul.f32.gmra.mxu0 %v4896
        %v4918 = vpop.f32.mrf.mxu0
        %v4919 = vadd.f32 0.0, %v4918
        %4920 = vdwg.mxu0
        %4921 = vmatpush.msra.mxu0 0.0
        %4922 = vmatpush.msra.mxu0 0.0
        %4923 = vmatpush.msra.mxu0 0.0
        %4924 = vmatpush.msra.mxu0 0.0
        %4925 = vmatpush.msra.mxu0 0.0
        %4926 = vmatpush.msra.mxu0 0.0
        %4927 = vmatpush.msra.mxu0 0.0
        %4928 = vmatpush.msra.mxu0 0.0
        %4929 = vmatpush.msra.mxu0 0.0
        %4930 = vmatpush.msra.mxu0 0.0
        %4931 = vmatpush.msra.mxu0 0.0
        %4932 = vmatpush.msra.mxu0 0.0
        %4933 = vmatpush.msra.mxu0 %v4894
        %4934 = vmatpush.msra.mxu0 %v4893
        %4935 = vmatpush.msra.mxu0 %v4892
        %4936 = vmatpush.msra.mxu0 %v4891
        %4937 = vmatmul.f32.gmra.mxu0 %v4899
        %v4938 = vpop.f32.mrf.mxu0
        %v4939 = vadd.f32 %v4919, %v4938
        %4940 = vdwg.mxu0
        %s4941 = scalar_lea.vmem [#allocation5], %s374
        %vm4942 = vcmask 516096
        %4943 = vst.msk [vmem:[%s4941] sm:$0x1] %vm4942, %v4939
      $region65: #{net_forward.1} parent=59 // loop_footer
        %s378 = sadd.s32 1, %s374
      $region66: #{net_forward.1} parent=59 // loop_footer_branch
        %373 = sbr.rel target = $region62
      $region67: #{net_forward.1} parent=59 // loop_exit
        _
      %v4944 = vld [vmem:[#allocation5] sm:$0xff]
      %v4945 = vld [vmem:[%s5] sm:$0xff]
      %v4946 = vld [vmem:[%s5 + $0x8] sm:$0xff]
      %v4947 = vld [vmem:[%s5 + $0x10] sm:$0xff]
      %v4948 = vld [vmem:[%s5 + $0x18] sm:$0xff]
      %v4949 = vld [vmem:[%s5 + $0x20] sm:$0xff]
      %v4950 = vld [vmem:[%s5 + $0x28] sm:$0xff]
      %v4951 = vld [vmem:[%s5 + $0x30] sm:$0xff]
      %v4952 = vld [vmem:[%s5 + $0x38] sm:$0xff]
      %v4953 = vld [vmem:[%s6] sm:$0x1]
      %v4955 = vperm.slane %v4953, 0
      %v4958 = vsel %vm359, %v4944, 0
      %4960 = vmatpush.msra.mxu0 0.0
      %4961 = vmatpush.msra.mxu0 0.0
      %4962 = vmatpush.msra.mxu0 0.0
      %4963 = vmatpush.msra.mxu0 0.0
      %4964 = vmatpush.msra.mxu0 0.0
      %4965 = vmatpush.msra.mxu0 0.0
      %4966 = vmatpush.msra.mxu0 0.0
      %4967 = vmatpush.msra.mxu0 0.0
      %4968 = vmatpush.msra.mxu0 %v4952
      %4969 = vmatpush.msra.mxu0 %v4951
      %4970 = vmatpush.msra.mxu0 %v4950
      %4971 = vmatpush.msra.mxu0 %v4949
      %4972 = vmatpush.msra.mxu0 %v4948
      %4973 = vmatpush.msra.mxu0 %v4947
      %4974 = vmatpush.msra.mxu0 %v4946
      %4975 = vmatpush.msra.mxu0 %v4945
      %4976 = vmatmul.f32.gmra.mxu0 %v4958
      %v4977 = vpop.f32.mrf.mxu0
      %v4978 = vadd.f32 %v4955, %v4977
      %4979 = vdwg.mxu0
      %v4980 = vmax.f32 %v4978, 0.0
      %v4981 = vld [vmem:[%s7] sm:$0x1]
      %v4982 = vld [vmem:[#allocation6] sm:$0x1]
      %4984 = vset.pattern.permute.xlu0 0
      %4985 = vperm.xlu0 %4984, %v4982
      %v4986 = vpop.permute.xlu0 %4985
      %v4988 = vperm.slane %v4986, 0
      %vm4989 = vcmask 261120
      %v4991 = vsel %vm4989, %v4981, 0
      %v4994 = vsel %vm4989, %v4980, 0
      %4996 = vmatpush.xpose.msra.mxu0 0.0
      %4997 = vmatpush.xpose.msra.mxu0 0.0
      %4998 = vmatpush.xpose.msra.mxu0 0.0
      %4999 = vmatpush.xpose.msra.mxu0 0.0
      %5000 = vmatpush.xpose.msra.mxu0 0.0
      %5001 = vmatpush.xpose.msra.mxu0 0.0
      %5002 = vmatpush.xpose.msra.mxu0 0.0
      %5003 = vmatpush.xpose.msra.mxu0 0.0
      %5004 = vmatpush.xpose.msra.mxu0 0.0
      %5005 = vmatpush.xpose.msra.mxu0 0.0
      %5006 = vmatpush.xpose.msra.mxu0 0.0
      %5007 = vmatpush.xpose.msra.mxu0 0.0
      %5008 = vmatpush.xpose.msra.mxu0 0.0
      %5009 = vmatpush.xpose.msra.mxu0 0.0
      %5010 = vmatpush.xpose.msra.mxu0 0.0
      %5011 = vmatpush.xpose.msra.mxu0 %v4994
      %5012 = vmatmul.f32.gmra.mxu0 %v4991
      %v5013 = vpop.f32.mrf.mxu0
      %v5014 = vadd.f32 %v4988, %v5013
      %5015 = vdwg.mxu0
      %v5016 = vsub.f32 0.0, %v5014
      %v5017 = vmul.f32 %v5016, 1.442695
      %v5018 = vpow.pop %v5017
      %v5019 = vadd.f32 %v5018, 1.0
      %v5020 = vrcp.pop %v5019
      %v5021 = vmul.f32 %v5019, %v5020
      %v5022 = vsub.f32 1.0, %v5021
      %v5023 = vmul.f32 %v5020, %v5022
      %v5024 = vadd.f32 %v5020, %v5023
      %vm5025 = vweird.f32 %v5019
      %vm5026 = vweird.f32 %v5020
      %vm5027 = vmor %vm5025, %vm5026
      %v5028 = vsel %vm5027, %v5020, %v5024
      %v5029 = vand.u32 2147483647, %v5019
      %vm5030 = vcmp.eq.f32.partialorder %v5029, 8.507059e+37
      %v5031 = vand.u32 %v5019, 2147483648
      %v5032 = vor.u32 1.1754944e-38, %v5031
      %v5033 = vsel %vm5030, %v5032, %v5028
      %v5034 = vmul.f32 1.0, %v5033
      %vm5035 = vcmask 57344
      %5036 = vst.msk [vmem:[%s357] sm:$0x1] %vm5035, %v5034
      %p5037 = scmp.lt.s32.totalorder %s23, 1
      %s5038 = scalar_select %p5037, %s23, 1
      %s5039 = scalar_lea.vmem %s10, %s5038
      // Predicated region
      $region68: #{net_forward.1} parent=59 // pred_check
        %p5040 = pneg %p256
      $region69: #{net_forward.1} parent=59 // pred_check_branch
        %5042 = sbr.rel (%p5040) target = $region71
      $region70: #{net_forward.1} parent=59 // pred_region
        _
      $region71: #{net_forward.1} parent=59 // pred_fallthru
        _
    $region60: #{net_forward.1} parent=5 // pred_fallthru
      _
    %p5043 = scmp.le.s32.totalorder 2, %s18
    // Predicated region
    $region72: #{net_forward.1} parent=5 // pred_check
      %p5044 = pneg %p5043
    $region73: #{net_forward.1} parent=5 // pred_check_branch
      %5046 = sbr.rel (%p5044) target = $region75
    $region74: #{net_forward.1} parent=5 // pred_region
      %s5047 = ssub.s32 %s18, 2
      // Predicated region
      $region76: #{net_forward.1} parent=74 // pred_check
        %p5048 = pneg %p262
      $region77: #{net_forward.1} parent=74 // pred_check_branch
        %5050 = sbr.rel (%p5048) target = $region79
      $region78: #{net_forward.1} parent=74 // pred_region
        %p5051 = scmp.lt.s32.totalorder %s24, 1
        %s5052 = scalar_select %p5051, %s24, 1
        %s5053 = scalar_lea.vmem %s10, %s5052
      $region79: #{net_forward.1} parent=74 // pred_fallthru
        _
    $region75: #{net_forward.1} parent=5 // pred_fallthru
      _
  $region6: #{net_forward.1} parent=0 // loop_footer
    %s22 = sadd.s32 1, %s18
  $region7: #{net_forward.1} parent=0 // loop_footer_branch
    %17 = sbr.rel target = $region3
  $region8: #{net_forward.1} parent=0 // loop_exit
    _

</llo_original>
